<compile_context>
chip_gen: v5e
topology: v5e:2x2
jax: 0.10.0
libtpu: 0.0.40
codegen_flags: <defaults>
</compile_context>

<pallas_src>
import jax
import jax.numpy as jnp
from jax import lax
from jax.experimental import pallas as pl
from jax.experimental.pallas import tpu as pltpu


# ----------------------------------------------------------------------------
# Pallas kernel: conv1x1+bn+relu, conv3x3+bn+relu (im2col), conv1x1+bn,
# optional downsample 1x1+bn on the shortcut, add, relu.
# One batch element per grid step (grid axis marked "parallel").
# ----------------------------------------------------------------------------
def _make_kernel(Ho, Wo, Cin, Cmid, Cout, need_downsample):
    HW = Ho * Wo
    TOP = Wo + 8                 # zero halo above the image (8-aligned if 8|Wo)
    R = HW + 2 * Wo + 16         # staging rows: TOP + HW + bottom halo

    def body(x_ref, w1_ref, b1_ref, w2_ref, b2_ref, w3_ref, b3_ref,
             wd_ref, bd_ref, o_ref, pad_ref, col_ref):
        x = x_ref[0]                                   # (Cin, HW) f32, NCHW-flat
        x_bf = x.astype(jnp.bfloat16)

        # ---- conv1 (1x1) + folded bn1 + relu --------------------------------
        # Transposed orientation (Cmid, HW) via a standard MXU dot on the NCHW
        # operand, then one small f32 XLU transpose to (HW, Cmid).
        y1t = jnp.dot(w1_ref[...], x_bf, preferred_element_type=jnp.float32)
        y1t = jnp.maximum(y1t + b1_ref[...], 0.0)      # bias is (Cmid, 1)
        y1 = y1t.T                                     # (HW, Cmid) f32

        # ---- stage y1 into the flattened, H-padded scratch ------------------
        # Only the halo rows are zeroed (interior fully overwritten); halos are
        # re-zeroed every step so the kernel is safe under megacore sharding.
        pad_ref[0:TOP, :] = jnp.zeros((TOP, Cmid), jnp.float32)
        pad_ref[TOP + HW:R, :] = jnp.zeros((R - TOP - HW, Cmid), jnp.float32)
        pad_ref[TOP:TOP + HW, :] = y1

        # ---- build the bf16 im2col operand (HW, 9*Cmid) ---------------------
        # A +-1 shift on the flattened (h*Wo + w) axis wraps across image rows;
        # those rows must contribute zero ('same' padding) -> W-border masks,
        # applied after the bf16 cast.
        w_pos = lax.broadcasted_iota(jnp.int32, (HW, 1), 0) % Wo
        not_left = w_pos != 0
        not_right = w_pos != (Wo - 1)
        for kh in range(3):
            for kw in range(3):
                start = TOP + (kh - 1) * Wo + (kw - 1)            # static
                tap = pad_ref[start:start + HW, :].astype(jnp.bfloat16)
                if kw == 0:
                    tap = jnp.where(not_left, tap, 0.0)
                elif kw == 2:
                    tap = jnp.where(not_right, tap, 0.0)
                c0 = (kh * 3 + kw) * Cmid
                col_ref[:, c0:c0 + Cmid] = tap

        # ---- conv2 (3x3,'same') as ONE K=9*Cmid MXU dot + bn2 + relu --------
        y2 = jnp.dot(col_ref[...], w2_ref[...],
                     preferred_element_type=jnp.float32)          # (HW, Cmid)
        y2 = jnp.maximum(y2 + b2_ref[...], 0.0).astype(jnp.bfloat16)

        # ---- conv3 (1x1) + folded bn3, produced in (Cout, HW) orientation ---
        # y3^T = w3^T @ y2^T via an rhs-transposed contraction (w3 is passed
        # pre-transposed), so the output is NCHW-flat with no extra transpose.
        y3t = lax.dot_general(w3_ref[...], y2,
                              (((1,), (1,)), ((), ())),
                              preferred_element_type=jnp.float32)  # (Cout, HW)
        y3t = y3t + b3_ref[...]                                    # (Cout, 1)

        # ---- shortcut (also (Cout, HW)) -------------------------------------
        if need_downsample:
            sct = jnp.dot(wd_ref[...], x_bf,
                          preferred_element_type=jnp.float32) + bd_ref[...]
        else:
            sct = x                                 # identity: Cin == Cout

        out = jnp.maximum(y3t + sct, 0.0)           # (Cout, HW)
        # Lane width is HW (>=128 for real shapes) -> lane-dense store.
        o_ref[...] = out.reshape(1, Cout, HW).astype(o_ref.dtype)

    if need_downsample:
        def kernel(x_ref, w1_ref, b1_ref, w2_ref, b2_ref, w3_ref, b3_ref,
                   wd_ref, bd_ref, o_ref, pad_ref, col_ref):
            body(x_ref, w1_ref, b1_ref, w2_ref, b2_ref, w3_ref, b3_ref,
                 wd_ref, bd_ref, o_ref, pad_ref, col_ref)
    else:
        def kernel(x_ref, w1_ref, b1_ref, w2_ref, b2_ref, w3_ref, b3_ref,
                   o_ref, pad_ref, col_ref):
            body(x_ref, w1_ref, b1_ref, w2_ref, b2_ref, w3_ref, b3_ref,
                 None, None, o_ref, pad_ref, col_ref)

    return kernel


def _fold_bn(gamma, beta, mean, var, eps=1e-5):
    scale = gamma / jnp.sqrt(var + eps)                # (C,)
    bias = beta - mean * scale                         # (C,)
    return scale.astype(jnp.float32), bias.astype(jnp.float32)


def bottleneck_pallas(x_nchw, params, *, stride=1, downsample=False):
    N, Cin, H, W = x_nchw.shape
    if stride > 1:
        # Stride of the 1x1 convs == spatial subsampling (exact for k=1).
        # TODO(synk): apply the stride in-kernel to drop this small copy too.
        x_nchw = x_nchw[:, :, ::stride, ::stride]
    N, Cin, Ho, Wo = x_nchw.shape
    Cmid = params["w1"].shape[1]
    Cout = params["w3"].shape[1]
    if not downsample:
        assert Cin == Cout and stride == 1, \
            "identity shortcut requires Cin == Cout and stride == 1"

    # Fold BN scale into the conv output channels; keep biases (f32) separate.
    s1, b1 = _fold_bn(*params["bn1"])
    s2, b2 = _fold_bn(*params["bn2"])
    s3, b3 = _fold_bn(*params["bn3"])
    w1t = (params["w1"] * s1).T.astype(jnp.bfloat16)               # (Cmid, Cin)
    w2f = (params["w2"] * s2).reshape(9 * Cmid, Cmid).astype(jnp.bfloat16)
    w3t = (params["w3"] * s3).T.astype(jnp.bfloat16)               # (Cout, Cmid)
    b1c = b1.reshape(Cmid, 1)
    b2r = b2.reshape(1, Cmid)
    b3c = b3.reshape(Cout, 1)

    HW = Ho * Wo
    x2d = x_nchw.reshape(N, Cin, HW)            # free reshape (no HBM pass)

    kernel = _make_kernel(Ho, Wo, Cin, Cmid, Cout, downsample)

    def full(shape):
        return pl.BlockSpec(shape, lambda n: (0,) * len(shape))

    in_specs = [
        pl.BlockSpec((1, Cin, HW), lambda n: (n, 0, 0)),
        full((Cmid, Cin)), full((Cmid, 1)),
        full((9 * Cmid, Cmid)), full((1, Cmid)),
        full((Cout, Cmid)), full((Cout, 1)),
    ]
    args = [x2d, w1t, b1c, w2f, b2r, w3t, b3c]
    if downsample:
        sd, bd = _fold_bn(*params["bnd"])
        wdt = (params["wd"] * sd).T.astype(jnp.bfloat16)           # (Cout, Cin)
        in_specs += [full((Cout, Cin)), full((Cout, 1))]
        args += [wdt, bd.reshape(Cout, 1)]

    pad_rows = HW + 2 * Wo + 16

    out2d = pl.pallas_call(
        kernel,
        out_shape=jax.ShapeDtypeStruct((N, Cout, HW), x_nchw.dtype),
        grid_spec=pltpu.PrefetchScalarGridSpec(
            num_scalar_prefetch=0,
            grid=(N,),
            in_specs=in_specs,
            out_specs=pl.BlockSpec((1, Cout, HW), lambda n: (n, 0, 0)),
            scratch_shapes=[
                pltpu.VMEM((pad_rows, Cmid), jnp.float32),       # row-shift stage
                pltpu.VMEM((HW, 9 * Cmid), jnp.bfloat16),        # im2col operand
            ],
        ),
        compiler_params=pltpu.CompilerParams(
            dimension_semantics=("parallel",),
            # 48 MiB is safe on v5e/v6e (128 MiB VMEM) and v7x (64 MiB).
            vmem_limit_bytes=48 * 1024 * 1024,
        ),
    )(*args)

    return out2d.reshape(N, Cout, Ho, Wo)        # free reshape; output is NCHW


# ----------------------------------------------------------------------------
# Pure-JAX reference (lax.conv, HIGHEST precision) for correctness checking
# ----------------------------------------------------------------------------
def bottleneck_ref(x_nchw, params, *, stride=1, downsample=False):
    x = jnp.transpose(x_nchw, (0, 2, 3, 1))
    HIGH = lax.Precision.HIGHEST
    dn = ("NHWC", "HWIO", "NHWC")

    def conv(v, w, s, pad):
        return lax.conv_general_dilated(v, w, (s, s), pad,
                                        dimension_numbers=dn, precision=HIGH)

    def bn(v, p):
        scale, bias = _fold_bn(*p)
        return v * scale.reshape(1, 1, 1, -1) + bias.reshape(1, 1, 1, -1)

    Cin = x.shape[-1]
    Cmid = params["w1"].shape[1]
    Cout = params["w3"].shape[1]

    y = conv(x, params["w1"].reshape(1, 1, Cin, Cmid), stride, "VALID")
    y = jax.nn.relu(bn(y, params["bn1"]))
    y = conv(y, params["w2"], 1, "SAME")
    y = jax.nn.relu(bn(y, params["bn2"]))
    y = conv(y, params["w3"].reshape(1, 1, Cmid, Cout), 1, "SAME")
    y = bn(y, params["bn3"])
    if downsample:
        sc = conv(x, params["wd"].reshape(1, 1, Cin, Cout), stride, "VALID")
        sc = bn(sc, params["bnd"])
    else:
        sc = x
    out = jax.nn.relu(y + sc)
    return jnp.transpose(out, (0, 3, 1, 2))


# ----------------------------------------------------------------------------
# Deterministic parameter init (shapes per Bottleneck.__init__)
# ----------------------------------------------------------------------------
def init_params(key, inc, midc, outc):
    ks = jax.random.split(key, 8)

    def bn_params(k, c):
        k1, k2, k3, k4 = jax.random.split(k, 4)
        gamma = jax.random.uniform(k1, (c,), jnp.float32, 0.5, 1.5)
        beta = jax.random.normal(k2, (c,), jnp.float32) * 0.1
        mean = jax.random.normal(k3, (c,), jnp.float32) * 0.1
        var = jax.random.uniform(k4, (c,), jnp.float32, 0.5, 1.5)
        return (gamma, beta, mean, var)

    return {
        "w1": jax.random.normal(ks[0], (inc, midc), jnp.float32) * 0.2,
        "bn1": bn_params(ks[1], midc),
        "w2": jax.random.normal(ks[2], (3, 3, midc, midc), jnp.float32) * 0.2,
        "bn2": bn_params(ks[3], midc),
        "w3": jax.random.normal(ks[4], (midc, outc), jnp.float32) * 0.2,
        "bn3": bn_params(ks[5], outc),
        "wd": jax.random.normal(ks[6], (inc, outc), jnp.float32) * 0.2,
        "bnd": bn_params(ks[7], outc),
    }


if __name__ == "__main__":
    key = jax.random.PRNGKey(0)
    kx1, kx2, kp1, kp2 = jax.random.split(key, 4)

    # bf16 MXU operands vs the HIGHEST-precision f32 reference -> loose tol.
    TOL = dict(atol=1e-1, rtol=1e-1)

    # Case 1: downsample shortcut, stride 2 (channel + spatial change)
    x1 = jax.random.normal(kx1, (2, 8, 32, 32), jnp.float32)       # NCHW
    p1 = init_params(kp1, inc=8, midc=8, outc=16)
    out1 = bottleneck_pallas(x1, p1, stride=2, downsample=True)
    jax.block_until_ready(out1)
    ref1 = bottleneck_ref(x1, p1, stride=2, downsample=True)
    assert out1.shape == (2, 16, 16, 16), out1.shape
    assert jnp.allclose(out1, ref1, **TOL), \
        float(jnp.max(jnp.abs(out1 - ref1)))

    # Case 2: identity shortcut (inc == outc, stride 1)
    x2 = jax.random.normal(kx2, (2, 16, 16, 16), jnp.float32)      # NCHW
    p2 = init_params(kp2, inc=16, midc=8, outc=16)
    out2 = bottleneck_pallas(x2, p2, stride=1, downsample=False)
    jax.block_until_ready(out2)
    ref2 = bottleneck_ref(x2, p2, stride=1, downsample=False)
    assert out2.shape == (2, 16, 16, 16), out2.shape
    assert jnp.allclose(out2, ref2, **TOL), \
        float(jnp.max(jnp.abs(out2 - ref2)))

    print("KERNEL_OK")
</pallas_src>

<mosaic_0001>
module attributes {stable_mosaic.version = 11 : i64} {
  func.func @kernel(%arg0: i32, %arg1: memref<1x8x256xf32, #tpu.memory_space<vmem>>, %arg2: memref<8x8xbf16, #tpu.memory_space<vmem>>, %arg3: memref<8x1xf32, #tpu.memory_space<vmem>>, %arg4: memref<72x8xbf16, #tpu.memory_space<vmem>>, %arg5: memref<1x8xf32, #tpu.memory_space<vmem>>, %arg6: memref<16x8xbf16, #tpu.memory_space<vmem>>, %arg7: memref<16x1xf32, #tpu.memory_space<vmem>>, %arg8: memref<16x8xbf16, #tpu.memory_space<vmem>>, %arg9: memref<16x1xf32, #tpu.memory_space<vmem>>, %arg10: memref<1x16x256xf32, #tpu.memory_space<vmem>>, %arg11: memref<304x8xf32, #tpu.memory_space<vmem>>, %arg12: memref<256x72xbf16, #tpu.memory_space<vmem>>) attributes {dimension_semantics = [#tpu.dimension_semantics<parallel>], iteration_bounds = array<i64: 2>, scalar_prefetch = 0 : i64, scratch_operands = 2 : i64, tpu.core_type = #tpu.core_type<tc>, window_params = [{transform_indices = @transform_0, window_bounds = array<i64: 1, 8, 256>}, {pipeline_mode = #tpu.pipeline_mode<synchronous>, transform_indices = @transform_1, window_bounds = array<i64: 8, 8>}, {pipeline_mode = #tpu.pipeline_mode<synchronous>, transform_indices = @transform_2, window_bounds = array<i64: 8, 1>}, {pipeline_mode = #tpu.pipeline_mode<synchronous>, transform_indices = @transform_3, window_bounds = array<i64: 72, 8>}, {pipeline_mode = #tpu.pipeline_mode<synchronous>, transform_indices = @transform_4, window_bounds = array<i64: 1, 8>}, {pipeline_mode = #tpu.pipeline_mode<synchronous>, transform_indices = @transform_5, window_bounds = array<i64: 16, 8>}, {pipeline_mode = #tpu.pipeline_mode<synchronous>, transform_indices = @transform_6, window_bounds = array<i64: 16, 1>}, {pipeline_mode = #tpu.pipeline_mode<synchronous>, transform_indices = @transform_7, window_bounds = array<i64: 16, 8>}, {pipeline_mode = #tpu.pipeline_mode<synchronous>, transform_indices = @transform_8, window_bounds = array<i64: 16, 1>}, {transform_indices = @transform_9, window_bounds = array<i64: 1, 16, 256>}]} {
    %c0 = arith.constant 0 : index
    %c0_0 = arith.constant 0 : index
    %c0_1 = arith.constant 0 : index
    %0 = vector.load %arg1[%c0, %c0_0, %c0_1] : memref<1x8x256xf32, #tpu.memory_space<vmem>>, vector<1x8x256xf32>
    %1 = vector.shape_cast %0 : vector<1x8x256xf32> to vector<8x256xf32>
    %2 = arith.truncf %1 : vector<8x256xf32> to vector<8x256xbf16>
    %c0_2 = arith.constant 0 : index
    %c0_3 = arith.constant 0 : index
    %3 = vector.load %arg2[%c0_2, %c0_3] : memref<8x8xbf16, #tpu.memory_space<vmem>>, vector<8x8xbf16>
    %cst = arith.constant dense<0.000000e+00> : vector<8x256xf32>
    %4 = tpu.matmul %3, %2, %cst {dimension_numbers = #tpu.dot_dimension_numbers<[1], [0], [0], [1], [0, 0, 1, 1], [], []>} : vector<8x8xbf16>, vector<8x256xbf16>, vector<8x256xf32> -> vector<8x256xf32>
    %c0_4 = arith.constant 0 : index
    %c0_5 = arith.constant 0 : index
    %5 = vector.load %arg3[%c0_4, %c0_5] : memref<8x1xf32, #tpu.memory_space<vmem>>, vector<8x1xf32>
    %6 = vector.broadcast %5 : vector<8x1xf32> to vector<8x256xf32>
    %7 = arith.addf %4, %6 : vector<8x256xf32>
    %cst_6 = arith.constant 0.000000e+00 : f32
    %8 = vector.broadcast %cst_6 : f32 to vector<8x256xf32>
    %9 = arith.maximumf %7, %8 : vector<8x256xf32>
    %10 = tpu.transpose %9, [1, 0] : vector<8x256xf32> -> vector<256x8xf32>
    %cst_7 = arith.constant 0.000000e+00 : f32
    %11 = vector.broadcast %cst_7 : f32 to vector<24x8xf32>
    %c0_8 = arith.constant 0 : index
    %c0_9 = arith.constant 0 : index
    %12 = vector.load %arg11[%c0_8, %c0_9] : memref<304x8xf32, #tpu.memory_space<vmem>>, vector<24x8xf32>
    tpu.vector_store %arg11[%c0_8, %c0_9], %11 {strides = array<i32>} : memref<304x8xf32, #tpu.memory_space<vmem>>, vector<24x8xf32>,
    %cst_10 = arith.constant 0.000000e+00 : f32
    %13 = vector.broadcast %cst_10 : f32 to vector<24x8xf32>
    %c280 = arith.constant 280 : index
    %c0_11 = arith.constant 0 : index
    %14 = vector.load %arg11[%c280, %c0_11] : memref<304x8xf32, #tpu.memory_space<vmem>>, vector<24x8xf32>
    tpu.vector_store %arg11[%c280, %c0_11], %13 {strides = array<i32>} : memref<304x8xf32, #tpu.memory_space<vmem>>, vector<24x8xf32>,
    %c24 = arith.constant 24 : index
    %c0_12 = arith.constant 0 : index
    %15 = vector.load %arg11[%c24, %c0_12] : memref<304x8xf32, #tpu.memory_space<vmem>>, vector<256x8xf32>
    tpu.vector_store %arg11[%c24, %c0_12], %10 {strides = array<i32>} : memref<304x8xf32, #tpu.memory_space<vmem>>, vector<256x8xf32>,
    %16 = tpu.iota {dimensions = array<i32: 0>} : vector<256x1xi32>
    %c16_i32 = arith.constant 16 : i32
    %c0_i32 = arith.constant 0 : i32
    %17 = arith.cmpi eq, %c16_i32, %c0_i32 : i32
    %c1_i32 = arith.constant 1 : i32
    %18 = arith.select %17, %c1_i32, %c16_i32 : i32
    %19 = vector.broadcast %18 : i32 to vector<256x1xi32>
    %20 = arith.remsi %16, %19 : vector<256x1xi32>
    %c0_i32_13 = arith.constant 0 : i32
    %21 = vector.broadcast %c0_i32_13 : i32 to vector<256x1xi32>
    %22 = arith.cmpi ne, %20, %21 : vector<256x1xi32>
    %c0_i32_14 = arith.constant 0 : i32
    %23 = vector.broadcast %c0_i32_14 : i32 to vector<256x1xi32>
    %24 = arith.cmpi slt, %20, %23 : vector<256x1xi32>
    %c0_i32_15 = arith.constant 0 : i32
    %25 = arith.cmpi slt, %18, %c0_i32_15 : i32
    %26 = vector.broadcast %25 : i1 to vector<256x1xi1>
    %27 = vector.broadcast %26 : vector<256x1xi1> to vector<256x1xi1>
    %28 = arith.xori %24, %27 : vector<256x1xi1>
    %29 = arith.andi %28, %22 : vector<256x1xi1>
    %30 = vector.broadcast %18 : i32 to vector<256x1xi32>
    %31 = arith.addi %20, %30 : vector<256x1xi32>
    %32 = arith.select %29, %31, %20 : vector<256x1xi1>, vector<256x1xi32>
    %c0_i32_16 = arith.constant 0 : i32
    %33 = vector.broadcast %c0_i32_16 : i32 to vector<256x1xi32>
    %34 = arith.cmpi ne, %32, %33 : vector<256x1xi32>
    %c15_i32 = arith.constant 15 : i32
    %35 = vector.broadcast %c15_i32 : i32 to vector<256x1xi32>
    %36 = arith.cmpi ne, %32, %35 : vector<256x1xi32>
    %c7 = arith.constant 7 : index
    %c0_17 = arith.constant 0 : index
    %37 = vector.load %arg11[%c7, %c0_17] : memref<304x8xf32, #tpu.memory_space<vmem>>, vector<256x8xf32>
    %38 = arith.truncf %37 : vector<256x8xf32> to vector<256x8xbf16>
    %cst_18 = arith.constant 0.000000e+00 : f32
    %39 = arith.truncf %cst_18 : f32 to bf16
    %40 = vector.shape_cast %34 : vector<256x1xi1> to vector<256x1xi1>
    %41 = vector.broadcast %40 : vector<256x1xi1> to vector<256x8xi1>
    %42 = vector.broadcast %39 : bf16 to vector<256x8xbf16>
    %43 = arith.select %41, %38, %42 : vector<256x8xi1>, vector<256x8xbf16>
    %c0_19 = arith.constant 0 : index
    %c0_20 = arith.constant 0 : index
    %44 = vector.load %arg12[%c0_19, %c0_20] : memref<256x72xbf16, #tpu.memory_space<vmem>>, vector<256x8xbf16>
    tpu.vector_store %arg12[%c0_19, %c0_20], %43 {strides = array<i32>} : memref<256x72xbf16, #tpu.memory_space<vmem>>, vector<256x8xbf16>,
    %c8 = arith.constant 8 : index
    %c0_21 = arith.constant 0 : index
    %45 = vector.load %arg11[%c8, %c0_21] : memref<304x8xf32, #tpu.memory_space<vmem>>, vector<256x8xf32>
    %46 = arith.truncf %45 : vector<256x8xf32> to vector<256x8xbf16>
    %c0_22 = arith.constant 0 : index
    %c8_23 = arith.constant 8 : index
    %47 = vector.load %arg12[%c0_22, %c8_23] : memref<256x72xbf16, #tpu.memory_space<vmem>>, vector<256x8xbf16>
    tpu.vector_store %arg12[%c0_22, %c8_23], %46 {strides = array<i32>} : memref<256x72xbf16, #tpu.memory_space<vmem>>, vector<256x8xbf16>,
    %c9 = arith.constant 9 : index
    %c0_24 = arith.constant 0 : index
    %48 = vector.load %arg11[%c9, %c0_24] : memref<304x8xf32, #tpu.memory_space<vmem>>, vector<256x8xf32>
    %49 = arith.truncf %48 : vector<256x8xf32> to vector<256x8xbf16>
    %cst_25 = arith.constant 0.000000e+00 : f32
    %50 = arith.truncf %cst_25 : f32 to bf16
    %51 = vector.shape_cast %36 : vector<256x1xi1> to vector<256x1xi1>
    %52 = vector.broadcast %51 : vector<256x1xi1> to vector<256x8xi1>
    %53 = vector.broadcast %50 : bf16 to vector<256x8xbf16>
    %54 = arith.select %52, %49, %53 : vector<256x8xi1>, vector<256x8xbf16>
    %c0_26 = arith.constant 0 : index
    %c16 = arith.constant 16 : index
    %55 = vector.load %arg12[%c0_26, %c16] : memref<256x72xbf16, #tpu.memory_space<vmem>>, vector<256x8xbf16>
    tpu.vector_store %arg12[%c0_26, %c16], %54 {strides = array<i32>} : memref<256x72xbf16, #tpu.memory_space<vmem>>, vector<256x8xbf16>,
    %c23 = arith.constant 23 : index
    %c0_27 = arith.constant 0 : index
    %56 = vector.load %arg11[%c23, %c0_27] : memref<304x8xf32, #tpu.memory_space<vmem>>, vector<256x8xf32>
    %57 = arith.truncf %56 : vector<256x8xf32> to vector<256x8xbf16>
    %cst_28 = arith.constant 0.000000e+00 : f32
    %58 = arith.truncf %cst_28 : f32 to bf16
    %59 = vector.shape_cast %34 : vector<256x1xi1> to vector<256x1xi1>
    %60 = vector.broadcast %59 : vector<256x1xi1> to vector<256x8xi1>
    %61 = vector.broadcast %58 : bf16 to vector<256x8xbf16>
    %62 = arith.select %60, %57, %61 : vector<256x8xi1>, vector<256x8xbf16>
    %c0_29 = arith.constant 0 : index
    %c24_30 = arith.constant 24 : index
    %63 = vector.load %arg12[%c0_29, %c24_30] : memref<256x72xbf16, #tpu.memory_space<vmem>>, vector<256x8xbf16>
    tpu.vector_store %arg12[%c0_29, %c24_30], %62 {strides = array<i32>} : memref<256x72xbf16, #tpu.memory_space<vmem>>, vector<256x8xbf16>,
    %c24_31 = arith.constant 24 : index
    %c0_32 = arith.constant 0 : index
    %64 = vector.load %arg11[%c24_31, %c0_32] : memref<304x8xf32, #tpu.memory_space<vmem>>, vector<256x8xf32>
    %65 = arith.truncf %64 : vector<256x8xf32> to vector<256x8xbf16>
    %c0_33 = arith.constant 0 : index
    %c32 = arith.constant 32 : index
    %66 = vector.load %arg12[%c0_33, %c32] : memref<256x72xbf16, #tpu.memory_space<vmem>>, vector<256x8xbf16>
    tpu.vector_store %arg12[%c0_33, %c32], %65 {strides = array<i32>} : memref<256x72xbf16, #tpu.memory_space<vmem>>, vector<256x8xbf16>,
    %c25 = arith.constant 25 : index
    %c0_34 = arith.constant 0 : index
    %67 = vector.load %arg11[%c25, %c0_34] : memref<304x8xf32, #tpu.memory_space<vmem>>, vector<256x8xf32>
    %68 = arith.truncf %67 : vector<256x8xf32> to vector<256x8xbf16>
    %cst_35 = arith.constant 0.000000e+00 : f32
    %69 = arith.truncf %cst_35 : f32 to bf16
    %70 = vector.shape_cast %36 : vector<256x1xi1> to vector<256x1xi1>
    %71 = vector.broadcast %70 : vector<256x1xi1> to vector<256x8xi1>
    %72 = vector.broadcast %69 : bf16 to vector<256x8xbf16>
    %73 = arith.select %71, %68, %72 : vector<256x8xi1>, vector<256x8xbf16>
    %c0_36 = arith.constant 0 : index
    %c40 = arith.constant 40 : index
    %74 = vector.load %arg12[%c0_36, %c40] : memref<256x72xbf16, #tpu.memory_space<vmem>>, vector<256x8xbf16>
    tpu.vector_store %arg12[%c0_36, %c40], %73 {strides = array<i32>} : memref<256x72xbf16, #tpu.memory_space<vmem>>, vector<256x8xbf16>,
    %c39 = arith.constant 39 : index
    %c0_37 = arith.constant 0 : index
    %75 = vector.load %arg11[%c39, %c0_37] : memref<304x8xf32, #tpu.memory_space<vmem>>, vector<256x8xf32>
    %76 = arith.truncf %75 : vector<256x8xf32> to vector<256x8xbf16>
    %cst_38 = arith.constant 0.000000e+00 : f32
    %77 = arith.truncf %cst_38 : f32 to bf16
    %78 = vector.shape_cast %34 : vector<256x1xi1> to vector<256x1xi1>
    %79 = vector.broadcast %78 : vector<256x1xi1> to vector<256x8xi1>
    %80 = vector.broadcast %77 : bf16 to vector<256x8xbf16>
    %81 = arith.select %79, %76, %80 : vector<256x8xi1>, vector<256x8xbf16>
    %c0_39 = arith.constant 0 : index
    %c48 = arith.constant 48 : index
    %82 = vector.load %arg12[%c0_39, %c48] : memref<256x72xbf16, #tpu.memory_space<vmem>>, vector<256x8xbf16>
    tpu.vector_store %arg12[%c0_39, %c48], %81 {strides = array<i32>} : memref<256x72xbf16, #tpu.memory_space<vmem>>, vector<256x8xbf16>,
    %c40_40 = arith.constant 40 : index
    %c0_41 = arith.constant 0 : index
    %83 = vector.load %arg11[%c40_40, %c0_41] : memref<304x8xf32, #tpu.memory_space<vmem>>, vector<256x8xf32>
    %84 = arith.truncf %83 : vector<256x8xf32> to vector<256x8xbf16>
    %c0_42 = arith.constant 0 : index
    %c56 = arith.constant 56 : index
    %85 = vector.load %arg12[%c0_42, %c56] : memref<256x72xbf16, #tpu.memory_space<vmem>>, vector<256x8xbf16>
    tpu.vector_store %arg12[%c0_42, %c56], %84 {strides = array<i32>} : memref<256x72xbf16, #tpu.memory_space<vmem>>, vector<256x8xbf16>,
    %c41 = arith.constant 41 : index
    %c0_43 = arith.constant 0 : index
    %86 = vector.load %arg11[%c41, %c0_43] : memref<304x8xf32, #tpu.memory_space<vmem>>, vector<256x8xf32>
    %87 = arith.truncf %86 : vector<256x8xf32> to vector<256x8xbf16>
    %cst_44 = arith.constant 0.000000e+00 : f32
    %88 = arith.truncf %cst_44 : f32 to bf16
    %89 = vector.shape_cast %36 : vector<256x1xi1> to vector<256x1xi1>
    %90 = vector.broadcast %89 : vector<256x1xi1> to vector<256x8xi1>
    %91 = vector.broadcast %88 : bf16 to vector<256x8xbf16>
    %92 = arith.select %90, %87, %91 : vector<256x8xi1>, vector<256x8xbf16>
    %c0_45 = arith.constant 0 : index
    %c64 = arith.constant 64 : index
    %93 = vector.load %arg12[%c0_45, %c64] : memref<256x72xbf16, #tpu.memory_space<vmem>>, vector<256x8xbf16>
    tpu.vector_store %arg12[%c0_45, %c64], %92 {strides = array<i32>} : memref<256x72xbf16, #tpu.memory_space<vmem>>, vector<256x8xbf16>,
    %c0_46 = arith.constant 0 : index
    %c0_47 = arith.constant 0 : index
    %94 = vector.load %arg12[%c0_46, %c0_47] : memref<256x72xbf16, #tpu.memory_space<vmem>>, vector<256x72xbf16>
    %c0_48 = arith.constant 0 : index
    %c0_49 = arith.constant 0 : index
    %95 = vector.load %arg4[%c0_48, %c0_49] : memref<72x8xbf16, #tpu.memory_space<vmem>>, vector<72x8xbf16>
    %cst_50 = arith.constant dense<0.000000e+00> : vector<256x8xf32>
    %96 = tpu.matmul %94, %95, %cst_50 {dimension_numbers = #tpu.dot_dimension_numbers<[1], [0], [0], [1], [0, 0, 1, 1], [], []>} : vector<256x72xbf16>, vector<72x8xbf16>, vector<256x8xf32> -> vector<256x8xf32>
    %c0_51 = arith.constant 0 : index
    %c0_52 = arith.constant 0 : index
    %97 = vector.load %arg5[%c0_51, %c0_52] : memref<1x8xf32, #tpu.memory_space<vmem>>, vector<1x8xf32>
    %98 = vector.broadcast %97 : vector<1x8xf32> to vector<256x8xf32>
    %99 = arith.addf %96, %98 : vector<256x8xf32>
    %cst_53 = arith.constant 0.000000e+00 : f32
    %100 = vector.broadcast %cst_53 : f32 to vector<256x8xf32>
    %101 = arith.maximumf %99, %100 : vector<256x8xf32>
    %102 = arith.truncf %101 : vector<256x8xf32> to vector<256x8xbf16>
    %c0_54 = arith.constant 0 : index
    %c0_55 = arith.constant 0 : index
    %103 = vector.load %arg6[%c0_54, %c0_55] : memref<16x8xbf16, #tpu.memory_space<vmem>>, vector<16x8xbf16>
    %cst_56 = arith.constant dense<0.000000e+00> : vector<16x256xf32>
    %104 = tpu.matmul %103, %102, %cst_56 {dimension_numbers = #tpu.dot_dimension_numbers<[1], [1], [0], [0], [0, 0, 1, 0], [], []>} : vector<16x8xbf16>, vector<256x8xbf16>, vector<16x256xf32> -> vector<16x256xf32>
    %c0_57 = arith.constant 0 : index
    %c0_58 = arith.constant 0 : index
    %105 = vector.load %arg7[%c0_57, %c0_58] : memref<16x1xf32, #tpu.memory_space<vmem>>, vector<16x1xf32>
    %106 = vector.broadcast %105 : vector<16x1xf32> to vector<16x256xf32>
    %107 = arith.addf %104, %106 : vector<16x256xf32>
    %c0_59 = arith.constant 0 : index
    %c0_60 = arith.constant 0 : index
    %108 = vector.load %arg8[%c0_59, %c0_60] : memref<16x8xbf16, #tpu.memory_space<vmem>>, vector<16x8xbf16>
    %cst_61 = arith.constant dense<0.000000e+00> : vector<16x256xf32>
    %109 = tpu.matmul %108, %2, %cst_61 {dimension_numbers = #tpu.dot_dimension_numbers<[1], [0], [0], [1], [0, 0, 1, 1], [], []>} : vector<16x8xbf16>, vector<8x256xbf16>, vector<16x256xf32> -> vector<16x256xf32>
    %c0_62 = arith.constant 0 : index
    %c0_63 = arith.constant 0 : index
    %110 = vector.load %arg9[%c0_62, %c0_63] : memref<16x1xf32, #tpu.memory_space<vmem>>, vector<16x1xf32>
    %111 = vector.broadcast %110 : vector<16x1xf32> to vector<16x256xf32>
    %112 = arith.addf %109, %111 : vector<16x256xf32>
    %113 = arith.addf %107, %112 : vector<16x256xf32>
    %cst_64 = arith.constant 0.000000e+00 : f32
    %114 = vector.broadcast %cst_64 : f32 to vector<16x256xf32>
    %115 = arith.maximumf %113, %114 : vector<16x256xf32>
    %116 = vector.shape_cast %115 : vector<16x256xf32> to vector<1x16x256xf32>
    %c0_65 = arith.constant 0 : index
    %c0_66 = arith.constant 0 : index
    %c0_67 = arith.constant 0 : index
    %117 = vector.load %arg10[%c0_65, %c0_66, %c0_67] : memref<1x16x256xf32, #tpu.memory_space<vmem>>, vector<1x16x256xf32>
    tpu.vector_store %arg10[%c0_65, %c0_66, %c0_67], %116 {strides = array<i32>} : memref<1x16x256xf32, #tpu.memory_space<vmem>>, vector<1x16x256xf32>,
    return
  }
  func.func @transform_0(%arg0: i32) -> (i32, i32, i32) {
    %c0_i32 = arith.constant 0 : i32
    %c0_i32_0 = arith.constant 0 : i32
    %c0_i32_1 = arith.constant 0 : i32
    return %arg0, %c0_i32, %c0_i32_0 : i32, i32, i32
  }
  func.func @transform_1(%arg0: i32) -> (i32, i32) {
    %c0_i32 = arith.constant 0 : i32
    %c0_i32_0 = arith.constant 0 : i32
    %c0_i32_1 = arith.constant 0 : i32
    return %c0_i32, %c0_i32_0 : i32, i32
  }
  func.func @transform_2(%arg0: i32) -> (i32, i32) {
    %c0_i32 = arith.constant 0 : i32
    %c0_i32_0 = arith.constant 0 : i32
    %c0_i32_1 = arith.constant 0 : i32
    return %c0_i32, %c0_i32_0 : i32, i32
  }
  func.func @transform_3(%arg0: i32) -> (i32, i32) {
    %c0_i32 = arith.constant 0 : i32
    %c0_i32_0 = arith.constant 0 : i32
    %c0_i32_1 = arith.constant 0 : i32
    return %c0_i32, %c0_i32_0 : i32, i32
  }
  func.func @transform_4(%arg0: i32) -> (i32, i32) {
    %c0_i32 = arith.constant 0 : i32
    %c0_i32_0 = arith.constant 0 : i32
    %c0_i32_1 = arith.constant 0 : i32
    return %c0_i32, %c0_i32_0 : i32, i32
  }
  func.func @transform_5(%arg0: i32) -> (i32, i32) {
    %c0_i32 = arith.constant 0 : i32
    %c0_i32_0 = arith.constant 0 : i32
    %c0_i32_1 = arith.constant 0 : i32
    return %c0_i32, %c0_i32_0 : i32, i32
  }
  func.func @transform_6(%arg0: i32) -> (i32, i32) {
    %c0_i32 = arith.constant 0 : i32
    %c0_i32_0 = arith.constant 0 : i32
    %c0_i32_1 = arith.constant 0 : i32
    return %c0_i32, %c0_i32_0 : i32, i32
  }
  func.func @transform_7(%arg0: i32) -> (i32, i32) {
    %c0_i32 = arith.constant 0 : i32
    %c0_i32_0 = arith.constant 0 : i32
    %c0_i32_1 = arith.constant 0 : i32
    return %c0_i32, %c0_i32_0 : i32, i32
  }
  func.func @transform_8(%arg0: i32) -> (i32, i32) {
    %c0_i32 = arith.constant 0 : i32
    %c0_i32_0 = arith.constant 0 : i32
    %c0_i32_1 = arith.constant 0 : i32
    return %c0_i32, %c0_i32_0 : i32, i32
  }
  func.func @transform_9(%arg0: i32) -> (i32, i32, i32) {
    %c0_i32 = arith.constant 0 : i32
    %c0_i32_0 = arith.constant 0 : i32
    %c0_i32_1 = arith.constant 0 : i32
    return %arg0, %c0_i32, %c0_i32_0 : i32, i32, i32
  }
}

</mosaic_0001>

<llo_original>
// kernel: tpu_custom_call.1
$region0: #{tpu_custom_call.1}
  #allocation0 [shape = 'u32[]', space=smem, size = 0x4, offset = 0x4, fixed_abs, tag = 'smem constant byte address 0x4 - core index']
  #allocation1 [shape = 'u32[72,128]{1,0:T(1,128)}', space=vmem, size = 0x9000, scoped, tag = 'internal scratch']
  #allocation2 [shape = 'f32[304,8]{1,0:T(8,128)}', space=vmem, size = 0x26000, scoped, tag = 'scratch operand']
  #allocation3 [shape = 'bf16[256,72]{1,0:T(8,128)(2,1)}', space=vmem, size = 0x10000, scoped, tag = 'scratch operand']
  %s0 = inlined_call_operand.vmem [shape: f32[2,8,256], index: 0, kind: input, shape index: {}]
  %s1 = inlined_call_operand.vmem [shape: bf16[8,8], index: 1, kind: input, shape index: {}]
  %s2 = inlined_call_operand.vmem [shape: f32[8,1], index: 2, kind: input, shape index: {}]
  %s3 = inlined_call_operand.vmem [shape: bf16[72,8], index: 3, kind: input, shape index: {}]
  %s4 = inlined_call_operand.vmem [shape: f32[1,8], index: 4, kind: input, shape index: {}]
  %s5 = inlined_call_operand.vmem [shape: bf16[16,8], index: 5, kind: input, shape index: {}]
  %s6 = inlined_call_operand.vmem [shape: f32[16,1], index: 6, kind: input, shape index: {}]
  %s7 = inlined_call_operand.vmem [shape: bf16[16,8], index: 7, kind: input, shape index: {}]
  %s8 = inlined_call_operand.vmem [shape: f32[16,1], index: 8, kind: input, shape index: {}]
  %s9 = inlined_call_operand.hbm [shape: f32[2,16,256], index: 9, kind: output, shape index: {}]
  %s10 = sld [smem:[#allocation0]]
  $region69: #{tpu_custom_call.1} parent=0
    _
  %s12 = ssub.s32 1, %s10
  %s13 = scalar_select 0, %s12, %s10
  $region1: #{tpu_custom_call.1} parent=0
    #allocation4 [shape = 'u8[32768]{0}', space=vmem, size = 0x8000, scoped, tag = 'output window, operand 0']
    #allocation5 [shape = 's32[2]{0}', space=sflag, size = 0x8, scoped, tag = 'scoped memory for tpu_custom_call.1']
    %14 = vsyncpa [#allocation5], 0
    %s15 = scalar_lea.sflag [#allocation5], 1
    %16 = vsyncpa %s15, 0
    loop: start=0, step=1, limit=4
    $region2: #{tpu_custom_call.1} parent=1 // loop_pre_header
      _
    $region3: #{tpu_custom_call.1} parent=1 // loop_header
      %s18 = sphi 0, %s22
      %p19 = scmp.ge.s32.totalorder %s18, 4
      %s28 = sphi 0, %s30
      %s31 = sphi 0, %s28
      %s32 = sphi 0, %s31
      %s48 = sphi 0, %s32
      %s52 = sphi 0, %s52
      %s54 = sphi 0, %s52
      %s55 = sphi 0, %s54
      %s69 = sphi 0, %s55
      %s73 = sphi 0, %s73
      %s75 = sphi 0, %s73
      %s76 = sphi 0, %s75
      %s90 = sphi 0, %s76
      %s94 = sphi 0, %s94
      %s96 = sphi 0, %s94
      %s97 = sphi 0, %s96
      %s111 = sphi 0, %s97
      %s115 = sphi 0, %s115
      %s117 = sphi 0, %s115
      %s118 = sphi 0, %s117
      %s132 = sphi 0, %s118
      %s136 = sphi 0, %s136
      %s138 = sphi 0, %s136
      %s139 = sphi 0, %s138
      %s153 = sphi 0, %s139
      %s157 = sphi 0, %s157
      %s159 = sphi 0, %s157
      %s160 = sphi 0, %s159
      %s174 = sphi 0, %s160
      %s178 = sphi 0, %s178
      %s180 = sphi 0, %s178
      %s181 = sphi 0, %s180
      %s195 = sphi 0, %s181
      %s199 = sphi 0, %s199
      %s201 = sphi 0, %s199
      %s202 = sphi 0, %s201
      %s216 = sphi 0, %s202
      %s222 = sphi 0, %s224
      %s225 = sphi 0, %s222
      %s226 = sphi 0, %s225
      %s242 = sphi 0, %s226
    $region4: #{tpu_custom_call.1} parent=1 // loop_header_branch
      %21 = sbr.rel (%p19) target = $region8
    $region5: #{tpu_custom_call.1} parent=1 // loop_body
      %s23 = ssub.s32 %s18, 1
      %s24 = ssub.s32 %s18, 2
      %s25 = sadd.s32 %s18, 1
      %s26 = ssub.s32 %s18, %s25
      %p27 = scmp.eq.s32.totalorder %s26, 0
      %s29 = sadd.s32 %s28, 1
      %s30 = scalar_select %p27, %s28, %s29
      %p33 = pneg %p27
      %p34 = scmp.eq.s32.totalorder %s18, 1
      %p35 = por %p33, %p34
      %p36 = scmp.ne.s32.totalorder %s28, %s31
      %p37 = scmp.eq.s32.totalorder %s18, 0
      %p38 = por %p36, %p37
      %p39 = scmp.ne.s32.totalorder %s28, %s31
      %p40 = scmp.eq.s32.totalorder %s23, 1
      %p41 = por %p39, %p40
      %p42 = scmp.ne.s32.totalorder %s31, %s32
      %p43 = scmp.eq.s32.totalorder %s23, 0
      %p44 = por %p42, %p43
      %p45 = scmp.ne.s32.totalorder %s31, %s32
      %p46 = scmp.eq.s32.totalorder %s24, 1
      %p47 = por %p45, %p46
      %p49 = scmp.ne.s32.totalorder %s32, %s48
      %p50 = scmp.eq.s32.totalorder %s24, 0
      %p51 = por %p49, %p50
      %s53 = sadd.s32 %s52, 1
      %p56 = scmp.eq.s32.totalorder %s18, 1
      %p57 = scmp.ne.s32.totalorder %s52, %s54
      %p58 = scmp.eq.s32.totalorder %s18, 0
      %p59 = por %p57, %p58
      %p60 = scmp.ne.s32.totalorder %s52, %s54
      %p61 = scmp.eq.s32.totalorder %s23, 1
      %p62 = por %p60, %p61
      %p63 = scmp.ne.s32.totalorder %s54, %s55
      %p64 = scmp.eq.s32.totalorder %s23, 0
      %p65 = por %p63, %p64
      %p66 = scmp.ne.s32.totalorder %s54, %s55
      %p67 = scmp.eq.s32.totalorder %s24, 1
      %p68 = por %p66, %p67
      %p70 = scmp.ne.s32.totalorder %s55, %s69
      %p71 = scmp.eq.s32.totalorder %s24, 0
      %p72 = por %p70, %p71
      %s74 = sadd.s32 %s73, 1
      %p77 = scmp.eq.s32.totalorder %s18, 1
      %p78 = scmp.ne.s32.totalorder %s73, %s75
      %p79 = scmp.eq.s32.totalorder %s18, 0
      %p80 = por %p78, %p79
      %p81 = scmp.ne.s32.totalorder %s73, %s75
      %p82 = scmp.eq.s32.totalorder %s23, 1
      %p83 = por %p81, %p82
      %p84 = scmp.ne.s32.totalorder %s75, %s76
      %p85 = scmp.eq.s32.totalorder %s23, 0
      %p86 = por %p84, %p85
      %p87 = scmp.ne.s32.totalorder %s75, %s76
      %p88 = scmp.eq.s32.totalorder %s24, 1
      %p89 = por %p87, %p88
      %p91 = scmp.ne.s32.totalorder %s76, %s90
      %p92 = scmp.eq.s32.totalorder %s24, 0
      %p93 = por %p91, %p92
      %s95 = sadd.s32 %s94, 1
      %p98 = scmp.eq.s32.totalorder %s18, 1
      %p99 = scmp.ne.s32.totalorder %s94, %s96
      %p100 = scmp.eq.s32.totalorder %s18, 0
      %p101 = por %p99, %p100
      %p102 = scmp.ne.s32.totalorder %s94, %s96
      %p103 = scmp.eq.s32.totalorder %s23, 1
      %p104 = por %p102, %p103
      %p105 = scmp.ne.s32.totalorder %s96, %s97
      %p106 = scmp.eq.s32.totalorder %s23, 0
      %p107 = por %p105, %p106
      %p108 = scmp.ne.s32.totalorder %s96, %s97
      %p109 = scmp.eq.s32.totalorder %s24, 1
      %p110 = por %p108, %p109
      %p112 = scmp.ne.s32.totalorder %s97, %s111
      %p113 = scmp.eq.s32.totalorder %s24, 0
      %p114 = por %p112, %p113
      %s116 = sadd.s32 %s115, 1
      %p119 = scmp.eq.s32.totalorder %s18, 1
      %p120 = scmp.ne.s32.totalorder %s115, %s117
      %p121 = scmp.eq.s32.totalorder %s18, 0
      %p122 = por %p120, %p121
      %p123 = scmp.ne.s32.totalorder %s115, %s117
      %p124 = scmp.eq.s32.totalorder %s23, 1
      %p125 = por %p123, %p124
      %p126 = scmp.ne.s32.totalorder %s117, %s118
      %p127 = scmp.eq.s32.totalorder %s23, 0
      %p128 = por %p126, %p127
      %p129 = scmp.ne.s32.totalorder %s117, %s118
      %p130 = scmp.eq.s32.totalorder %s24, 1
      %p131 = por %p129, %p130
      %p133 = scmp.ne.s32.totalorder %s118, %s132
      %p134 = scmp.eq.s32.totalorder %s24, 0
      %p135 = por %p133, %p134
      %s137 = sadd.s32 %s136, 1
      %p140 = scmp.eq.s32.totalorder %s18, 1
      %p141 = scmp.ne.s32.totalorder %s136, %s138
      %p142 = scmp.eq.s32.totalorder %s18, 0
      %p143 = por %p141, %p142
      %p144 = scmp.ne.s32.totalorder %s136, %s138
      %p145 = scmp.eq.s32.totalorder %s23, 1
      %p146 = por %p144, %p145
      %p147 = scmp.ne.s32.totalorder %s138, %s139
      %p148 = scmp.eq.s32.totalorder %s23, 0
      %p149 = por %p147, %p148
      %p150 = scmp.ne.s32.totalorder %s138, %s139
      %p151 = scmp.eq.s32.totalorder %s24, 1
      %p152 = por %p150, %p151
      %p154 = scmp.ne.s32.totalorder %s139, %s153
      %p155 = scmp.eq.s32.totalorder %s24, 0
      %p156 = por %p154, %p155
      %s158 = sadd.s32 %s157, 1
      %p161 = scmp.eq.s32.totalorder %s18, 1
      %p162 = scmp.ne.s32.totalorder %s157, %s159
      %p163 = scmp.eq.s32.totalorder %s18, 0
      %p164 = por %p162, %p163
      %p165 = scmp.ne.s32.totalorder %s157, %s159
      %p166 = scmp.eq.s32.totalorder %s23, 1
      %p167 = por %p165, %p166
      %p168 = scmp.ne.s32.totalorder %s159, %s160
      %p169 = scmp.eq.s32.totalorder %s23, 0
      %p170 = por %p168, %p169
      %p171 = scmp.ne.s32.totalorder %s159, %s160
      %p172 = scmp.eq.s32.totalorder %s24, 1
      %p173 = por %p171, %p172
      %p175 = scmp.ne.s32.totalorder %s160, %s174
      %p176 = scmp.eq.s32.totalorder %s24, 0
      %p177 = por %p175, %p176
      %s179 = sadd.s32 %s178, 1
      %p182 = scmp.eq.s32.totalorder %s18, 1
      %p183 = scmp.ne.s32.totalorder %s178, %s180
      %p184 = scmp.eq.s32.totalorder %s18, 0
      %p185 = por %p183, %p184
      %p186 = scmp.ne.s32.totalorder %s178, %s180
      %p187 = scmp.eq.s32.totalorder %s23, 1
      %p188 = por %p186, %p187
      %p189 = scmp.ne.s32.totalorder %s180, %s181
      %p190 = scmp.eq.s32.totalorder %s23, 0
      %p191 = por %p189, %p190
      %p192 = scmp.ne.s32.totalorder %s180, %s181
      %p193 = scmp.eq.s32.totalorder %s24, 1
      %p194 = por %p192, %p193
      %p196 = scmp.ne.s32.totalorder %s181, %s195
      %p197 = scmp.eq.s32.totalorder %s24, 0
      %p198 = por %p196, %p197
      %s200 = sadd.s32 %s199, 1
      %p203 = scmp.eq.s32.totalorder %s18, 1
      %p204 = scmp.ne.s32.totalorder %s199, %s201
      %p205 = scmp.eq.s32.totalorder %s18, 0
      %p206 = por %p204, %p205
      %p207 = scmp.ne.s32.totalorder %s199, %s201
      %p208 = scmp.eq.s32.totalorder %s23, 1
      %p209 = por %p207, %p208
      %p210 = scmp.ne.s32.totalorder %s201, %s202
      %p211 = scmp.eq.s32.totalorder %s23, 0
      %p212 = por %p210, %p211
      %p213 = scmp.ne.s32.totalorder %s201, %s202
      %p214 = scmp.eq.s32.totalorder %s24, 1
      %p215 = por %p213, %p214
      %p217 = scmp.ne.s32.totalorder %s202, %s216
      %p218 = scmp.eq.s32.totalorder %s24, 0
      %p219 = por %p217, %p218
      %s220 = ssub.s32 %s18, %s25
      %p221 = scmp.eq.s32.totalorder %s220, 0
      %s223 = sadd.s32 %s222, 1
      %s224 = scalar_select %p221, %s222, %s223
      %p227 = pneg %p221
      %p228 = scmp.eq.s32.totalorder %s18, 1
      %p229 = por %p227, %p228
      %p230 = scmp.ne.s32.totalorder %s222, %s225
      %p231 = scmp.eq.s32.totalorder %s18, 0
      %p232 = por %p230, %p231
      %p233 = scmp.ne.s32.totalorder %s222, %s225
      %p234 = scmp.eq.s32.totalorder %s23, 1
      %p235 = por %p233, %p234
      %p236 = scmp.ne.s32.totalorder %s225, %s226
      %p237 = scmp.eq.s32.totalorder %s23, 0
      %p238 = por %p236, %p237
      %p239 = scmp.ne.s32.totalorder %s225, %s226
      %p240 = scmp.eq.s32.totalorder %s24, 1
      %p241 = por %p239, %p240
      %p243 = scmp.ne.s32.totalorder %s226, %s242
      %p244 = scmp.eq.s32.totalorder %s24, 0
      %p245 = por %p243, %p244
      %p246 = scmp.le.s32.totalorder 1, %s18
      %p247 = scmp.lt.s32.totalorder %s18, 3
      %p248 = pnand %p246, %p247
      %p249 = pneg %p248
      // Predicated region
      $region9: #{tpu_custom_call.1} parent=5 // pred_check
        _
      $region10: #{tpu_custom_call.1} parent=5 // pred_check_branch
        %251 = sbr.rel (%p248) target = $region12
      $region11: #{tpu_custom_call.1} parent=5 // pred_region
        %s252 = ssub.s32 %s18, 1
        // Predicated region
        $region13: #{tpu_custom_call.1} parent=11 // pred_check
          %p253 = pneg %p65
        $region14: #{tpu_custom_call.1} parent=11 // pred_check_branch
          %255 = sbr.rel (%p253) target = $region16
        $region15: #{tpu_custom_call.1} parent=11 // pred_region
          _
        $region16: #{tpu_custom_call.1} parent=11 // pred_fallthru
          _
        // Predicated region
        $region17: #{tpu_custom_call.1} parent=11 // pred_check
          %p256 = pneg %p86
        $region18: #{tpu_custom_call.1} parent=11 // pred_check_branch
          %258 = sbr.rel (%p256) target = $region20
        $region19: #{tpu_custom_call.1} parent=11 // pred_region
          _
        $region20: #{tpu_custom_call.1} parent=11 // pred_fallthru
          _
        // Predicated region
        $region21: #{tpu_custom_call.1} parent=11 // pred_check
          %p259 = pneg %p107
        $region22: #{tpu_custom_call.1} parent=11 // pred_check_branch
          %261 = sbr.rel (%p259) target = $region24
        $region23: #{tpu_custom_call.1} parent=11 // pred_region
          _
        $region24: #{tpu_custom_call.1} parent=11 // pred_fallthru
          _
        // Predicated region
        $region25: #{tpu_custom_call.1} parent=11 // pred_check
          %p262 = pneg %p128
        $region26: #{tpu_custom_call.1} parent=11 // pred_check_branch
          %264 = sbr.rel (%p262) target = $region28
        $region27: #{tpu_custom_call.1} parent=11 // pred_region
          _
        $region28: #{tpu_custom_call.1} parent=11 // pred_fallthru
          _
        // Predicated region
        $region29: #{tpu_custom_call.1} parent=11 // pred_check
          %p265 = pneg %p149
        $region30: #{tpu_custom_call.1} parent=11 // pred_check_branch
          %267 = sbr.rel (%p265) target = $region32
        $region31: #{tpu_custom_call.1} parent=11 // pred_region
          _
        $region32: #{tpu_custom_call.1} parent=11 // pred_fallthru
          _
        // Predicated region
        $region33: #{tpu_custom_call.1} parent=11 // pred_check
          %p268 = pneg %p170
        $region34: #{tpu_custom_call.1} parent=11 // pred_check_branch
          %270 = sbr.rel (%p268) target = $region36
        $region35: #{tpu_custom_call.1} parent=11 // pred_region
          _
        $region36: #{tpu_custom_call.1} parent=11 // pred_fallthru
          _
        // Predicated region
        $region37: #{tpu_custom_call.1} parent=11 // pred_check
          %p271 = pneg %p191
        $region38: #{tpu_custom_call.1} parent=11 // pred_check_branch
          %273 = sbr.rel (%p271) target = $region40
        $region39: #{tpu_custom_call.1} parent=11 // pred_region
          _
        $region40: #{tpu_custom_call.1} parent=11 // pred_fallthru
          _
        // Predicated region
        $region41: #{tpu_custom_call.1} parent=11 // pred_check
          %p274 = pneg %p212
        $region42: #{tpu_custom_call.1} parent=11 // pred_check_branch
          %276 = sbr.rel (%p274) target = $region44
        $region43: #{tpu_custom_call.1} parent=11 // pred_region
          _
        $region44: #{tpu_custom_call.1} parent=11 // pred_fallthru
          _
      $region12: #{tpu_custom_call.1} parent=5 // pred_fallthru
        _
      %p277 = scmp.lt.s32.totalorder %s18, 2
      // Predicated region
      $region45: #{tpu_custom_call.1} parent=5 // pred_check
        %p278 = pneg %p277
      $region46: #{tpu_custom_call.1} parent=5 // pred_check_branch
        %280 = sbr.rel (%p278) target = $region48
      $region47: #{tpu_custom_call.1} parent=5 // pred_region
        // Predicated region
        $region49: #{tpu_custom_call.1} parent=47 // pred_check
          %p281 = pneg %p38
        $region50: #{tpu_custom_call.1} parent=47 // pred_check_branch
          %283 = sbr.rel (%p281) target = $region52
        $region51: #{tpu_custom_call.1} parent=47 // pred_region
          %p284 = scmp.lt.s32.totalorder %s18, 1
          %s285 = scalar_select %p284, %s18, 1
          %s286 = smul.addr %s285, 2
          %s287 = smul.addr %s286, 8
          %s288 = scalar_lea.vmem %s0, %s287
        $region52: #{tpu_custom_call.1} parent=47 // pred_fallthru
          _
      $region48: #{tpu_custom_call.1} parent=5 // pred_fallthru
        _
      %p289 = scmp.le.s32.totalorder 1, %s18
      %p290 = scmp.lt.s32.totalorder %s18, 3
      %p291 = pnand %p289, %p290
      %p292 = pneg %p291
      // Predicated region
      $region53: #{tpu_custom_call.1} parent=5 // pred_check
        _
      $region54: #{tpu_custom_call.1} parent=5 // pred_check_branch
        %294 = sbr.rel (%p291) target = $region56
      $region55: #{tpu_custom_call.1} parent=5 // pred_region
        %s295 = ssub.s32 %s18, 1
        %p296 = scmp.lt.s32.totalorder %s23, 1
        %s297 = scalar_select %p296, %s23, 1
        %s298 = smul.addr %s297, 2
        %s299 = smul.addr %s298, 8
        %s300 = scalar_lea.vmem %s0, %s299
        %p301 = pneg %p44
        %p302 = pneg %p41
        %p303 = pneg %p65
        %p304 = pneg %p62
        %p305 = pneg %p86
        %p306 = pneg %p83
        %p307 = pneg %p107
        %p308 = pneg %p104
        %p309 = pneg %p128
        %p310 = pneg %p125
        %p311 = pneg %p149
        %p312 = pneg %p146
        %p313 = pneg %p170
        %p314 = pneg %p167
        %p315 = pneg %p191
        %p316 = pneg %p188
        %p317 = pneg %p212
        %p318 = pneg %p209
        %p319 = pneg %p238
        %p320 = pneg %p235
        %s321 = sand.u32 %s225, 1
        %s322 = scalar_lea.sflag [#allocation5], %s321
        %s323 = sand.u32 %s225, 1
        %s324 = smul.addr %s323, 32
        %s325 = scalar_lea.vmem [#allocation4], %s324
        %p326 = scmp.lt.s32.totalorder %s23, 1
        %s327 = scalar_select %p326, %s23, 1
        %s328 = smul.addr %s327, 2
        %s329 = smul.addr %s328, 8
        %s330 = scalar_lea.vmem %s0, %s329
        %v332 = vld [vmem:[%s330] sm:$0xff]
        %v333 = vld [vmem:[%s330 + $0x8] sm:$0xff]
        %v334 = vpack.c.bf16 %v332, %v332
        %v335 = vpack.c.bf16 %v333, %v333
        %v336 = vld [vmem:[%s1] sm:$0xf]
        %v337 = vld [vmem:[%s2] sm:$0xff]
        %339 = vset.pattern.permute.xlu0 0
        %340 = vperm.xlu0 %339, %v337
        %v341 = vpop.permute.xlu0 %340
        %vm343 = vcmask 64512
        %v345 = vsel %vm343, %v336, 0
        %vm347 = vcmask 1043456
        %v349 = vsel %vm347, %v334, 0
        %v352 = vsel %vm347, %v335, 0
        %354 = vmatpush.bf16.msra.mxu0 0
        %355 = vmatpush.bf16.msra.mxu0 0
        %356 = vmatpush.bf16.msra.mxu0 0
        %357 = vmatpush.bf16.msra.mxu0 0
        %358 = vmatpush.bf16.msra.mxu0 0
        %359 = vmatpush.bf16.msra.mxu0 0
        %360 = vmatpush.bf16.msra.mxu0 0
        %361 = vmatpush.bf16.msra.mxu0 %v349
        %362 = vmatmul.bf16.gmra.mxu0 %v345
        %v363 = vpop.f32.mrf.mxu0
        %v364 = vadd.f32 %v341, %v363
        %v365 = vpop.f32.mrf.mxu0
        %366 = vdwg.mxu0
        %367 = vmatpush.bf16.msra.mxu0 0
        %368 = vmatpush.bf16.msra.mxu0 0
        %369 = vmatpush.bf16.msra.mxu0 0
        %370 = vmatpush.bf16.msra.mxu0 0
        %371 = vmatpush.bf16.msra.mxu0 0
        %372 = vmatpush.bf16.msra.mxu0 0
        %373 = vmatpush.bf16.msra.mxu0 0
        %374 = vmatpush.bf16.msra.mxu0 %v352
        %375 = vmatmul.bf16.gmra.mxu0 %v345
        %v376 = vpop.f32.mrf.mxu0
        %v377 = vadd.f32 %v341, %v376
        %v378 = vpop.f32.mrf.mxu0
        %379 = vdwg.mxu0
        %v380 = vmax.f32 %v364, 0.0
        %v381 = vmax.f32 %v377, 0.0
        %382 = vxpose.xlu0.b32.start [1/16] %v380, 128
        %383 = vxpose.xlu0.b32.cont [2/16] 0.0, 128
        %384 = vxpose.xlu0.b32.cont [3/16] 0.0, 128
        %385 = vxpose.xlu0.b32.cont [4/16] 0.0, 128
        %386 = vxpose.xlu0.b32.cont [5/16] 0.0, 128
        %387 = vxpose.xlu0.b32.cont [6/16] 0.0, 128
        %388 = vxpose.xlu0.b32.cont [7/16] 0.0, 128
        %389 = vxpose.xlu0.b32.cont [8/16] 0.0, 128
        %390 = vxpose.xlu0.b32.cont [9/16] 0.0, 128
        %391 = vxpose.xlu0.b32.cont [10/16] 0.0, 128
        %392 = vxpose.xlu0.b32.cont [11/16] 0.0, 128
        %393 = vxpose.xlu0.b32.cont [12/16] 0.0, 128
        %394 = vxpose.xlu0.b32.cont [13/16] 0.0, 128
        %395 = vxpose.xlu0.b32.cont [14/16] 0.0, 128
        %396 = vxpose.xlu0.b32.cont [15/16] 0.0, 128
        %397 = vxpose.xlu0.b32.end [16/16] 0.0, 128
        %v398 = vpop.trf.xlu0
        %v399 = vpop.trf.xlu0
        %v400 = vpop.trf.xlu0
        %v401 = vpop.trf.xlu0
        %v402 = vpop.trf.xlu0
        %v403 = vpop.trf.xlu0
        %v404 = vpop.trf.xlu0
        %v405 = vpop.trf.xlu0
        %v406 = vpop.trf.xlu0
        %v407 = vpop.trf.xlu0
        %v408 = vpop.trf.xlu0
        %v409 = vpop.trf.xlu0
        %v410 = vpop.trf.xlu0
        %v411 = vpop.trf.xlu0
        %v412 = vpop.trf.xlu0
        %v413 = vpop.trf.xlu0
        %414 = vxpose.xlu0.b32.start [1/16] %v381, 128
        %415 = vxpose.xlu0.b32.cont [2/16] 0.0, 128
        %416 = vxpose.xlu0.b32.cont [3/16] 0.0, 128
        %417 = vxpose.xlu0.b32.cont [4/16] 0.0, 128
        %418 = vxpose.xlu0.b32.cont [5/16] 0.0, 128
        %419 = vxpose.xlu0.b32.cont [6/16] 0.0, 128
        %420 = vxpose.xlu0.b32.cont [7/16] 0.0, 128
        %421 = vxpose.xlu0.b32.cont [8/16] 0.0, 128
        %422 = vxpose.xlu0.b32.cont [9/16] 0.0, 128
        %423 = vxpose.xlu0.b32.cont [10/16] 0.0, 128
        %424 = vxpose.xlu0.b32.cont [11/16] 0.0, 128
        %425 = vxpose.xlu0.b32.cont [12/16] 0.0, 128
        %426 = vxpose.xlu0.b32.cont [13/16] 0.0, 128
        %427 = vxpose.xlu0.b32.cont [14/16] 0.0, 128
        %428 = vxpose.xlu0.b32.cont [15/16] 0.0, 128
        %429 = vxpose.xlu0.b32.end [16/16] 0.0, 128
        %v430 = vpop.trf.xlu0
        %v431 = vpop.trf.xlu0
        %v432 = vpop.trf.xlu0
        %v433 = vpop.trf.xlu0
        %v434 = vpop.trf.xlu0
        %v435 = vpop.trf.xlu0
        %v436 = vpop.trf.xlu0
        %v437 = vpop.trf.xlu0
        %v438 = vpop.trf.xlu0
        %v439 = vpop.trf.xlu0
        %v440 = vpop.trf.xlu0
        %v441 = vpop.trf.xlu0
        %v442 = vpop.trf.xlu0
        %v443 = vpop.trf.xlu0
        %v444 = vpop.trf.xlu0
        %v445 = vpop.trf.xlu0
        %446 = vst.msk [vmem:[#allocation2] sm:$0xff] %vm343, 0.0
        %447 = vst.msk [vmem:[#allocation2 + $0x8] sm:$0xff] %vm343, 0.0
        %448 = vst.msk [vmem:[#allocation2 + $0x10] sm:$0xff] %vm343, 0.0
        %449 = vst.msk [vmem:[#allocation2 + $0x118] sm:$0xff] %vm343, 0.0
        %450 = vst.msk [vmem:[#allocation2 + $0x120] sm:$0xff] %vm343, 0.0
        %451 = vst.msk [vmem:[#allocation2 + $0x128] sm:$0xff] %vm343, 0.0
        %452 = vst.msk [vmem:[#allocation2 + $0x18] sm:$0xff] %vm343, %v398
        %453 = vst.msk [vmem:[#allocation2 + $0x20] sm:$0xff] %vm343, %v399
        %454 = vst.msk [vmem:[#allocation2 + $0x28] sm:$0xff] %vm343, %v400
        %455 = vst.msk [vmem:[#allocation2 + $0x30] sm:$0xff] %vm343, %v401
        %456 = vst.msk [vmem:[#allocation2 + $0x38] sm:$0xff] %vm343, %v402
        %457 = vst.msk [vmem:[#allocation2 + $0x40] sm:$0xff] %vm343, %v403
        %458 = vst.msk [vmem:[#allocation2 + $0x48] sm:$0xff] %vm343, %v404
        %459 = vst.msk [vmem:[#allocation2 + $0x50] sm:$0xff] %vm343, %v405
        %460 = vst.msk [vmem:[#allocation2 + $0x58] sm:$0xff] %vm343, %v406
        %461 = vst.msk [vmem:[#allocation2 + $0x60] sm:$0xff] %vm343, %v407
        %462 = vst.msk [vmem:[#allocation2 + $0x68] sm:$0xff] %vm343, %v408
        %463 = vst.msk [vmem:[#allocation2 + $0x70] sm:$0xff] %vm343, %v409
        %464 = vst.msk [vmem:[#allocation2 + $0x78] sm:$0xff] %vm343, %v410
        %465 = vst.msk [vmem:[#allocation2 + $0x80] sm:$0xff] %vm343, %v411
        %466 = vst.msk [vmem:[#allocation2 + $0x88] sm:$0xff] %vm343, %v412
        %467 = vst.msk [vmem:[#allocation2 + $0x90] sm:$0xff] %vm343, %v413
        %468 = vst.msk [vmem:[#allocation2 + $0x98] sm:$0xff] %vm343, %v430
        %469 = vst.msk [vmem:[#allocation2 + $0xa0] sm:$0xff] %vm343, %v431
        %470 = vst.msk [vmem:[#allocation2 + $0xa8] sm:$0xff] %vm343, %v432
        %471 = vst.msk [vmem:[#allocation2 + $0xb0] sm:$0xff] %vm343, %v433
        %472 = vst.msk [vmem:[#allocation2 + $0xb8] sm:$0xff] %vm343, %v434
        %473 = vst.msk [vmem:[#allocation2 + $0xc0] sm:$0xff] %vm343, %v435
        %474 = vst.msk [vmem:[#allocation2 + $0xc8] sm:$0xff] %vm343, %v436
        %475 = vst.msk [vmem:[#allocation2 + $0xd0] sm:$0xff] %vm343, %v437
        %476 = vst.msk [vmem:[#allocation2 + $0xd8] sm:$0xff] %vm343, %v438
        %477 = vst.msk [vmem:[#allocation2 + $0xe0] sm:$0xff] %vm343, %v439
        %478 = vst.msk [vmem:[#allocation2 + $0xe8] sm:$0xff] %vm343, %v440
        %479 = vst.msk [vmem:[#allocation2 + $0xf0] sm:$0xff] %vm343, %v441
        %480 = vst.msk [vmem:[#allocation2 + $0xf8] sm:$0xff] %vm343, %v442
        %481 = vst.msk [vmem:[#allocation2 + $0x100] sm:$0xff] %vm343, %v443
        %482 = vst.msk [vmem:[#allocation2 + $0x108] sm:$0xff] %vm343, %v444
        %483 = vst.msk [vmem:[#allocation2 + $0x110] sm:$0xff] %vm343, %v445
        %v484 = vlaneseq
        %v485 = vshrl.u32 %v484, 7
        %v486 = vadd.s32 %v485, 8
        %v487 = vadd.s32 %v485, 16
        %v488 = vadd.s32 %v485, 24
        %v489 = vadd.s32 %v485, 32
        %v490 = vadd.s32 %v485, 40
        %v491 = vadd.s32 %v485, 48
        %v492 = vadd.s32 %v485, 56
        %v493 = vadd.s32 %v485, 64
        %v494 = vadd.s32 %v485, 72
        %v495 = vadd.s32 %v485, 80
        %v496 = vadd.s32 %v485, 88
        %v497 = vadd.s32 %v485, 96
        %v498 = vadd.s32 %v485, 104
        %v499 = vadd.s32 %v485, 112
        %v500 = vadd.s32 %v485, 120
        %v501 = vadd.s32 %v485, 128
        %v502 = vadd.s32 %v485, 136
        %v503 = vadd.s32 %v485, 144
        %v504 = vadd.s32 %v485, 152
        %v505 = vadd.s32 %v485, 160
        %v506 = vadd.s32 %v485, 168
        %v507 = vadd.s32 %v485, 176
        %v508 = vadd.s32 %v485, 184
        %v509 = vadd.s32 %v485, 192
        %v510 = vadd.s32 %v485, 200
        %v511 = vadd.s32 %v485, 208
        %v512 = vadd.s32 %v485, 216
        %v513 = vadd.s32 %v485, 224
        %v514 = vadd.s32 %v485, 232
        %v515 = vadd.s32 %v485, 240
        %v516 = vadd.s32 %v485, 248
        %vm517 = vcmp.lt.s32.totalorder %v485, 0
        %v518 = vsub.s32 0, %v485
        %v519 = vsel %vm517, %v518, %v485
        %v520 = vshrl.u32 %v519, 4
        %v521 = vand.u32 %v519, 15
        %v522 = vsub.s32 0, %v521
        %v523 = vsel %vm517, %v522, %v521
        %vm524 = vcmp.lt.s32.totalorder %v486, 0
        %v525 = vsub.s32 0, %v486
        %v526 = vsel %vm524, %v525, %v486
        %v527 = vshrl.u32 %v526, 4
        %v528 = vand.u32 %v526, 15
        %v529 = vsub.s32 0, %v528
        %v530 = vsel %vm524, %v529, %v528
        %vm531 = vcmp.lt.s32.totalorder %v487, 0
        %v532 = vsub.s32 0, %v487
        %v533 = vsel %vm531, %v532, %v487
        %v534 = vshrl.u32 %v533, 4
        %v535 = vand.u32 %v533, 15
        %v536 = vsub.s32 0, %v535
        %v537 = vsel %vm531, %v536, %v535
        %vm538 = vcmp.lt.s32.totalorder %v488, 0
        %v539 = vsub.s32 0, %v488
        %v540 = vsel %vm538, %v539, %v488
        %v541 = vshrl.u32 %v540, 4
        %v542 = vand.u32 %v540, 15
        %v543 = vsub.s32 0, %v542
        %v544 = vsel %vm538, %v543, %v542
        %vm545 = vcmp.lt.s32.totalorder %v489, 0
        %v546 = vsub.s32 0, %v489
        %v547 = vsel %vm545, %v546, %v489
        %v548 = vshrl.u32 %v547, 4
        %v549 = vand.u32 %v547, 15
        %v550 = vsub.s32 0, %v549
        %v551 = vsel %vm545, %v550, %v549
        %vm552 = vcmp.lt.s32.totalorder %v490, 0
        %v553 = vsub.s32 0, %v490
        %v554 = vsel %vm552, %v553, %v490
        %v555 = vshrl.u32 %v554, 4
        %v556 = vand.u32 %v554, 15
        %v557 = vsub.s32 0, %v556
        %v558 = vsel %vm552, %v557, %v556
        %vm559 = vcmp.lt.s32.totalorder %v491, 0
        %v560 = vsub.s32 0, %v491
        %v561 = vsel %vm559, %v560, %v491
        %v562 = vshrl.u32 %v561, 4
        %v563 = vand.u32 %v561, 15
        %v564 = vsub.s32 0, %v563
        %v565 = vsel %vm559, %v564, %v563
        %vm566 = vcmp.lt.s32.totalorder %v492, 0
        %v567 = vsub.s32 0, %v492
        %v568 = vsel %vm566, %v567, %v492
        %v569 = vshrl.u32 %v568, 4
        %v570 = vand.u32 %v568, 15
        %v571 = vsub.s32 0, %v570
        %v572 = vsel %vm566, %v571, %v570
        %vm573 = vcmp.lt.s32.totalorder %v493, 0
        %v574 = vsub.s32 0, %v493
        %v575 = vsel %vm573, %v574, %v493
        %v576 = vshrl.u32 %v575, 4
        %v577 = vand.u32 %v575, 15
        %v578 = vsub.s32 0, %v577
        %v579 = vsel %vm573, %v578, %v577
        %vm580 = vcmp.lt.s32.totalorder %v494, 0
        %v581 = vsub.s32 0, %v494
        %v582 = vsel %vm580, %v581, %v494
        %v583 = vshrl.u32 %v582, 4
        %v584 = vand.u32 %v582, 15
        %v585 = vsub.s32 0, %v584
        %v586 = vsel %vm580, %v585, %v584
        %vm587 = vcmp.lt.s32.totalorder %v495, 0
        %v588 = vsub.s32 0, %v495
        %v589 = vsel %vm587, %v588, %v495
        %v590 = vshrl.u32 %v589, 4
        %v591 = vand.u32 %v589, 15
        %v592 = vsub.s32 0, %v591
        %v593 = vsel %vm587, %v592, %v591
        %vm594 = vcmp.lt.s32.totalorder %v496, 0
        %v595 = vsub.s32 0, %v496
        %v596 = vsel %vm594, %v595, %v496
        %v597 = vshrl.u32 %v596, 4
        %v598 = vand.u32 %v596, 15
        %v599 = vsub.s32 0, %v598
        %v600 = vsel %vm594, %v599, %v598
        %vm601 = vcmp.lt.s32.totalorder %v497, 0
        %v602 = vsub.s32 0, %v497
        %v603 = vsel %vm601, %v602, %v497
        %v604 = vshrl.u32 %v603, 4
        %v605 = vand.u32 %v603, 15
        %v606 = vsub.s32 0, %v605
        %v607 = vsel %vm601, %v606, %v605
        %vm608 = vcmp.lt.s32.totalorder %v498, 0
        %v609 = vsub.s32 0, %v498
        %v610 = vsel %vm608, %v609, %v498
        %v611 = vshrl.u32 %v610, 4
        %v612 = vand.u32 %v610, 15
        %v613 = vsub.s32 0, %v612
        %v614 = vsel %vm608, %v613, %v612
        %vm615 = vcmp.lt.s32.totalorder %v499, 0
        %v616 = vsub.s32 0, %v499
        %v617 = vsel %vm615, %v616, %v499
        %v618 = vshrl.u32 %v617, 4
        %v619 = vand.u32 %v617, 15
        %v620 = vsub.s32 0, %v619
        %v621 = vsel %vm615, %v620, %v619
        %vm622 = vcmp.lt.s32.totalorder %v500, 0
        %v623 = vsub.s32 0, %v500
        %v624 = vsel %vm622, %v623, %v500
        %v625 = vshrl.u32 %v624, 4
        %v626 = vand.u32 %v624, 15
        %v627 = vsub.s32 0, %v626
        %v628 = vsel %vm622, %v627, %v626
        %vm629 = vcmp.lt.s32.totalorder %v501, 0
        %v630 = vsub.s32 0, %v501
        %v631 = vsel %vm629, %v630, %v501
        %v632 = vshrl.u32 %v631, 4
        %v633 = vand.u32 %v631, 15
        %v634 = vsub.s32 0, %v633
        %v635 = vsel %vm629, %v634, %v633
        %vm636 = vcmp.lt.s32.totalorder %v502, 0
        %v637 = vsub.s32 0, %v502
        %v638 = vsel %vm636, %v637, %v502
        %v639 = vshrl.u32 %v638, 4
        %v640 = vand.u32 %v638, 15
        %v641 = vsub.s32 0, %v640
        %v642 = vsel %vm636, %v641, %v640
        %vm643 = vcmp.lt.s32.totalorder %v503, 0
        %v644 = vsub.s32 0, %v503
        %v645 = vsel %vm643, %v644, %v503
        %v646 = vshrl.u32 %v645, 4
        %v647 = vand.u32 %v645, 15
        %v648 = vsub.s32 0, %v647
        %v649 = vsel %vm643, %v648, %v647
        %vm650 = vcmp.lt.s32.totalorder %v504, 0
        %v651 = vsub.s32 0, %v504
        %v652 = vsel %vm650, %v651, %v504
        %v653 = vshrl.u32 %v652, 4
        %v654 = vand.u32 %v652, 15
        %v655 = vsub.s32 0, %v654
        %v656 = vsel %vm650, %v655, %v654
        %vm657 = vcmp.lt.s32.totalorder %v505, 0
        %v658 = vsub.s32 0, %v505
        %v659 = vsel %vm657, %v658, %v505
        %v660 = vshrl.u32 %v659, 4
        %v661 = vand.u32 %v659, 15
        %v662 = vsub.s32 0, %v661
        %v663 = vsel %vm657, %v662, %v661
        %vm664 = vcmp.lt.s32.totalorder %v506, 0
        %v665 = vsub.s32 0, %v506
        %v666 = vsel %vm664, %v665, %v506
        %v667 = vshrl.u32 %v666, 4
        %v668 = vand.u32 %v666, 15
        %v669 = vsub.s32 0, %v668
        %v670 = vsel %vm664, %v669, %v668
        %vm671 = vcmp.lt.s32.totalorder %v507, 0
        %v672 = vsub.s32 0, %v507
        %v673 = vsel %vm671, %v672, %v507
        %v674 = vshrl.u32 %v673, 4
        %v675 = vand.u32 %v673, 15
        %v676 = vsub.s32 0, %v675
        %v677 = vsel %vm671, %v676, %v675
        %vm678 = vcmp.lt.s32.totalorder %v508, 0
        %v679 = vsub.s32 0, %v508
        %v680 = vsel %vm678, %v679, %v508
        %v681 = vshrl.u32 %v680, 4
        %v682 = vand.u32 %v680, 15
        %v683 = vsub.s32 0, %v682
        %v684 = vsel %vm678, %v683, %v682
        %vm685 = vcmp.lt.s32.totalorder %v509, 0
        %v686 = vsub.s32 0, %v509
        %v687 = vsel %vm685, %v686, %v509
        %v688 = vshrl.u32 %v687, 4
        %v689 = vand.u32 %v687, 15
        %v690 = vsub.s32 0, %v689
        %v691 = vsel %vm685, %v690, %v689
        %vm692 = vcmp.lt.s32.totalorder %v510, 0
        %v693 = vsub.s32 0, %v510
        %v694 = vsel %vm692, %v693, %v510
        %v695 = vshrl.u32 %v694, 4
        %v696 = vand.u32 %v694, 15
        %v697 = vsub.s32 0, %v696
        %v698 = vsel %vm692, %v697, %v696
        %vm699 = vcmp.lt.s32.totalorder %v511, 0
        %v700 = vsub.s32 0, %v511
        %v701 = vsel %vm699, %v700, %v511
        %v702 = vshrl.u32 %v701, 4
        %v703 = vand.u32 %v701, 15
        %v704 = vsub.s32 0, %v703
        %v705 = vsel %vm699, %v704, %v703
        %vm706 = vcmp.lt.s32.totalorder %v512, 0
        %v707 = vsub.s32 0, %v512
        %v708 = vsel %vm706, %v707, %v512
        %v709 = vshrl.u32 %v708, 4
        %v710 = vand.u32 %v708, 15
        %v711 = vsub.s32 0, %v710
        %v712 = vsel %vm706, %v711, %v710
        %vm713 = vcmp.lt.s32.totalorder %v513, 0
        %v714 = vsub.s32 0, %v513
        %v715 = vsel %vm713, %v714, %v513
        %v716 = vshrl.u32 %v715, 4
        %v717 = vand.u32 %v715, 15
        %v718 = vsub.s32 0, %v717
        %v719 = vsel %vm713, %v718, %v717
        %vm720 = vcmp.lt.s32.totalorder %v514, 0
        %v721 = vsub.s32 0, %v514
        %v722 = vsel %vm720, %v721, %v514
        %v723 = vshrl.u32 %v722, 4
        %v724 = vand.u32 %v722, 15
        %v725 = vsub.s32 0, %v724
        %v726 = vsel %vm720, %v725, %v724
        %vm727 = vcmp.lt.s32.totalorder %v515, 0
        %v728 = vsub.s32 0, %v515
        %v729 = vsel %vm727, %v728, %v515
        %v730 = vshrl.u32 %v729, 4
        %v731 = vand.u32 %v729, 15
        %v732 = vsub.s32 0, %v731
        %v733 = vsel %vm727, %v732, %v731
        %vm734 = vcmp.lt.s32.totalorder %v516, 0
        %v735 = vsub.s32 0, %v516
        %v736 = vsel %vm734, %v735, %v516
        %v737 = vshrl.u32 %v736, 4
        %v738 = vand.u32 %v736, 15
        %v739 = vsub.s32 0, %v738
        %v740 = vsel %vm734, %v739, %v738
        %vm741 = vcmp.ne.s32.totalorder %v523, 0
        %vm742 = vcmp.ne.s32.totalorder %v530, 0
        %vm743 = vcmp.ne.s32.totalorder %v537, 0
        %vm744 = vcmp.ne.s32.totalorder %v544, 0
        %vm745 = vcmp.ne.s32.totalorder %v551, 0
        %vm746 = vcmp.ne.s32.totalorder %v558, 0
        %vm747 = vcmp.ne.s32.totalorder %v565, 0
        %vm748 = vcmp.ne.s32.totalorder %v572, 0
        %vm749 = vcmp.ne.s32.totalorder %v579, 0
        %vm750 = vcmp.ne.s32.totalorder %v586, 0
        %vm751 = vcmp.ne.s32.totalorder %v593, 0
        %vm752 = vcmp.ne.s32.totalorder %v600, 0
        %vm753 = vcmp.ne.s32.totalorder %v607, 0
        %vm754 = vcmp.ne.s32.totalorder %v614, 0
        %vm755 = vcmp.ne.s32.totalorder %v621, 0
        %vm756 = vcmp.ne.s32.totalorder %v628, 0
        %vm757 = vcmp.ne.s32.totalorder %v635, 0
        %vm758 = vcmp.ne.s32.totalorder %v642, 0
        %vm759 = vcmp.ne.s32.totalorder %v649, 0
        %vm760 = vcmp.ne.s32.totalorder %v656, 0
        %vm761 = vcmp.ne.s32.totalorder %v663, 0
        %vm762 = vcmp.ne.s32.totalorder %v670, 0
        %vm763 = vcmp.ne.s32.totalorder %v677, 0
        %vm764 = vcmp.ne.s32.totalorder %v684, 0
        %vm765 = vcmp.ne.s32.totalorder %v691, 0
        %vm766 = vcmp.ne.s32.totalorder %v698, 0
        %vm767 = vcmp.ne.s32.totalorder %v705, 0
        %vm768 = vcmp.ne.s32.totalorder %v712, 0
        %vm769 = vcmp.ne.s32.totalorder %v719, 0
        %vm770 = vcmp.ne.s32.totalorder %v726, 0
        %vm771 = vcmp.ne.s32.totalorder %v733, 0
        %vm772 = vcmp.ne.s32.totalorder %v740, 0
        %vm773 = vcmp.lt.s32.totalorder %v523, 0
        %vm774 = vcmp.lt.s32.totalorder %v530, 0
        %vm775 = vcmp.lt.s32.totalorder %v537, 0
        %vm776 = vcmp.lt.s32.totalorder %v544, 0
        %vm777 = vcmp.lt.s32.totalorder %v551, 0
        %vm778 = vcmp.lt.s32.totalorder %v558, 0
        %vm779 = vcmp.lt.s32.totalorder %v565, 0
        %vm780 = vcmp.lt.s32.totalorder %v572, 0
        %vm781 = vcmp.lt.s32.totalorder %v579, 0
        %vm782 = vcmp.lt.s32.totalorder %v586, 0
        %vm783 = vcmp.lt.s32.totalorder %v593, 0
        %vm784 = vcmp.lt.s32.totalorder %v600, 0
        %vm785 = vcmp.lt.s32.totalorder %v607, 0
        %vm786 = vcmp.lt.s32.totalorder %v614, 0
        %vm787 = vcmp.lt.s32.totalorder %v621, 0
        %vm788 = vcmp.lt.s32.totalorder %v628, 0
        %vm789 = vcmp.lt.s32.totalorder %v635, 0
        %vm790 = vcmp.lt.s32.totalorder %v642, 0
        %vm791 = vcmp.lt.s32.totalorder %v649, 0
        %vm792 = vcmp.lt.s32.totalorder %v656, 0
        %vm793 = vcmp.lt.s32.totalorder %v663, 0
        %vm794 = vcmp.lt.s32.totalorder %v670, 0
        %vm795 = vcmp.lt.s32.totalorder %v677, 0
        %vm796 = vcmp.lt.s32.totalorder %v684, 0
        %vm797 = vcmp.lt.s32.totalorder %v691, 0
        %vm798 = vcmp.lt.s32.totalorder %v698, 0
        %vm799 = vcmp.lt.s32.totalorder %v705, 0
        %vm800 = vcmp.lt.s32.totalorder %v712, 0
        %vm801 = vcmp.lt.s32.totalorder %v719, 0
        %vm802 = vcmp.lt.s32.totalorder %v726, 0
        %vm803 = vcmp.lt.s32.totalorder %v733, 0
        %vm804 = vcmp.lt.s32.totalorder %v740, 0
        %vm805 = vmand %vm773, %vm741
        %vm806 = vmand %vm774, %vm742
        %vm807 = vmand %vm775, %vm743
        %vm808 = vmand %vm776, %vm744
        %vm809 = vmand %vm777, %vm745
        %vm810 = vmand %vm778, %vm746
        %vm811 = vmand %vm779, %vm747
        %vm812 = vmand %vm780, %vm748
        %vm813 = vmand %vm781, %vm749
        %vm814 = vmand %vm782, %vm750
        %vm815 = vmand %vm783, %vm751
        %vm816 = vmand %vm784, %vm752
        %vm817 = vmand %vm785, %vm753
        %vm818 = vmand %vm786, %vm754
        %vm819 = vmand %vm787, %vm755
        %vm820 = vmand %vm788, %vm756
        %vm821 = vmand %vm789, %vm757
        %vm822 = vmand %vm790, %vm758
        %vm823 = vmand %vm791, %vm759
        %vm824 = vmand %vm792, %vm760
        %vm825 = vmand %vm793, %vm761
        %vm826 = vmand %vm794, %vm762
        %vm827 = vmand %vm795, %vm763
        %vm828 = vmand %vm796, %vm764
        %vm829 = vmand %vm797, %vm765
        %vm830 = vmand %vm798, %vm766
        %vm831 = vmand %vm799, %vm767
        %vm832 = vmand %vm800, %vm768
        %vm833 = vmand %vm801, %vm769
        %vm834 = vmand %vm802, %vm770
        %vm835 = vmand %vm803, %vm771
        %vm836 = vmand %vm804, %vm772
        %v837 = vadd.s32 %v523, 16
        %v838 = vadd.s32 %v530, 16
        %v839 = vadd.s32 %v537, 16
        %v840 = vadd.s32 %v544, 16
        %v841 = vadd.s32 %v551, 16
        %v842 = vadd.s32 %v558, 16
        %v843 = vadd.s32 %v565, 16
        %v844 = vadd.s32 %v572, 16
        %v845 = vadd.s32 %v579, 16
        %v846 = vadd.s32 %v586, 16
        %v847 = vadd.s32 %v593, 16
        %v848 = vadd.s32 %v600, 16
        %v849 = vadd.s32 %v607, 16
        %v850 = vadd.s32 %v614, 16
        %v851 = vadd.s32 %v621, 16
        %v852 = vadd.s32 %v628, 16
        %v853 = vadd.s32 %v635, 16
        %v854 = vadd.s32 %v642, 16
        %v855 = vadd.s32 %v649, 16
        %v856 = vadd.s32 %v656, 16
        %v857 = vadd.s32 %v663, 16
        %v858 = vadd.s32 %v670, 16
        %v859 = vadd.s32 %v677, 16
        %v860 = vadd.s32 %v684, 16
        %v861 = vadd.s32 %v691, 16
        %v862 = vadd.s32 %v698, 16
        %v863 = vadd.s32 %v705, 16
        %v864 = vadd.s32 %v712, 16
        %v865 = vadd.s32 %v719, 16
        %v866 = vadd.s32 %v726, 16
        %v867 = vadd.s32 %v733, 16
        %v868 = vadd.s32 %v740, 16
        %v869 = vsel %vm805, %v837, %v523
        %v870 = vsel %vm806, %v838, %v530
        %v871 = vsel %vm807, %v839, %v537
        %v872 = vsel %vm808, %v840, %v544
        %v873 = vsel %vm809, %v841, %v551
        %v874 = vsel %vm810, %v842, %v558
        %v875 = vsel %vm811, %v843, %v565
        %v876 = vsel %vm812, %v844, %v572
        %v877 = vsel %vm813, %v845, %v579
        %v878 = vsel %vm814, %v846, %v586
        %v879 = vsel %vm815, %v847, %v593
        %v880 = vsel %vm816, %v848, %v600
        %v881 = vsel %vm817, %v849, %v607
        %v882 = vsel %vm818, %v850, %v614
        %v883 = vsel %vm819, %v851, %v621
        %v884 = vsel %vm820, %v852, %v628
        %v885 = vsel %vm821, %v853, %v635
        %v886 = vsel %vm822, %v854, %v642
        %v887 = vsel %vm823, %v855, %v649
        %v888 = vsel %vm824, %v856, %v656
        %v889 = vsel %vm825, %v857, %v663
        %v890 = vsel %vm826, %v858, %v670
        %v891 = vsel %vm827, %v859, %v677
        %v892 = vsel %vm828, %v860, %v684
        %v893 = vsel %vm829, %v861, %v691
        %v894 = vsel %vm830, %v862, %v698
        %v895 = vsel %vm831, %v863, %v705
        %v896 = vsel %vm832, %v864, %v712
        %v897 = vsel %vm833, %v865, %v719
        %v898 = vsel %vm834, %v866, %v726
        %v899 = vsel %vm835, %v867, %v733
        %v900 = vsel %vm836, %v868, %v740
        %vm901 = vcmp.ne.s32.totalorder %v869, 0
        %vm902 = vcmp.ne.s32.totalorder %v870, 0
        %vm903 = vcmp.ne.s32.totalorder %v871, 0
        %vm904 = vcmp.ne.s32.totalorder %v872, 0
        %vm905 = vcmp.ne.s32.totalorder %v873, 0
        %vm906 = vcmp.ne.s32.totalorder %v874, 0
        %vm907 = vcmp.ne.s32.totalorder %v875, 0
        %vm908 = vcmp.ne.s32.totalorder %v876, 0
        %vm909 = vcmp.ne.s32.totalorder %v877, 0
        %vm910 = vcmp.ne.s32.totalorder %v878, 0
        %vm911 = vcmp.ne.s32.totalorder %v879, 0
        %vm912 = vcmp.ne.s32.totalorder %v880, 0
        %vm913 = vcmp.ne.s32.totalorder %v881, 0
        %vm914 = vcmp.ne.s32.totalorder %v882, 0
        %vm915 = vcmp.ne.s32.totalorder %v883, 0
        %vm916 = vcmp.ne.s32.totalorder %v884, 0
        %vm917 = vcmp.ne.s32.totalorder %v885, 0
        %vm918 = vcmp.ne.s32.totalorder %v886, 0
        %vm919 = vcmp.ne.s32.totalorder %v887, 0
        %vm920 = vcmp.ne.s32.totalorder %v888, 0
        %vm921 = vcmp.ne.s32.totalorder %v889, 0
        %vm922 = vcmp.ne.s32.totalorder %v890, 0
        %vm923 = vcmp.ne.s32.totalorder %v891, 0
        %vm924 = vcmp.ne.s32.totalorder %v892, 0
        %vm925 = vcmp.ne.s32.totalorder %v893, 0
        %vm926 = vcmp.ne.s32.totalorder %v894, 0
        %vm927 = vcmp.ne.s32.totalorder %v895, 0
        %vm928 = vcmp.ne.s32.totalorder %v896, 0
        %vm929 = vcmp.ne.s32.totalorder %v897, 0
        %vm930 = vcmp.ne.s32.totalorder %v898, 0
        %vm931 = vcmp.ne.s32.totalorder %v899, 0
        %vm932 = vcmp.ne.s32.totalorder %v900, 0
        %vm933 = vcmp.ne.s32.totalorder %v869, 15
        %vm934 = vcmp.ne.s32.totalorder %v870, 15
        %vm935 = vcmp.ne.s32.totalorder %v871, 15
        %vm936 = vcmp.ne.s32.totalorder %v872, 15
        %vm937 = vcmp.ne.s32.totalorder %v873, 15
        %vm938 = vcmp.ne.s32.totalorder %v874, 15
        %vm939 = vcmp.ne.s32.totalorder %v875, 15
        %vm940 = vcmp.ne.s32.totalorder %v876, 15
        %vm941 = vcmp.ne.s32.totalorder %v877, 15
        %vm942 = vcmp.ne.s32.totalorder %v878, 15
        %vm943 = vcmp.ne.s32.totalorder %v879, 15
        %vm944 = vcmp.ne.s32.totalorder %v880, 15
        %vm945 = vcmp.ne.s32.totalorder %v881, 15
        %vm946 = vcmp.ne.s32.totalorder %v882, 15
        %vm947 = vcmp.ne.s32.totalorder %v883, 15
        %vm948 = vcmp.ne.s32.totalorder %v884, 15
        %vm949 = vcmp.ne.s32.totalorder %v885, 15
        %vm950 = vcmp.ne.s32.totalorder %v886, 15
        %vm951 = vcmp.ne.s32.totalorder %v887, 15
        %vm952 = vcmp.ne.s32.totalorder %v888, 15
        %vm953 = vcmp.ne.s32.totalorder %v889, 15
        %vm954 = vcmp.ne.s32.totalorder %v890, 15
        %vm955 = vcmp.ne.s32.totalorder %v891, 15
        %vm956 = vcmp.ne.s32.totalorder %v892, 15
        %vm957 = vcmp.ne.s32.totalorder %v893, 15
        %vm958 = vcmp.ne.s32.totalorder %v894, 15
        %vm959 = vcmp.ne.s32.totalorder %v895, 15
        %vm960 = vcmp.ne.s32.totalorder %v896, 15
        %vm961 = vcmp.ne.s32.totalorder %v897, 15
        %vm962 = vcmp.ne.s32.totalorder %v898, 15
        %vm963 = vcmp.ne.s32.totalorder %v899, 15
        %vm964 = vcmp.ne.s32.totalorder %v900, 15
        %v965 = vld [vmem:[#allocation2 + $0x7] sm:$0xff]
        %v966 = vld [vmem:[#allocation2 + $0xf] sm:$0xff]
        %v967 = vld [vmem:[#allocation2 + $0x17] sm:$0xff]
        %v968 = vld [vmem:[#allocation2 + $0x1f] sm:$0xff]
        %v969 = vld [vmem:[#allocation2 + $0x27] sm:$0xff]
        %v970 = vld [vmem:[#allocation2 + $0x2f] sm:$0xff]
        %v971 = vld [vmem:[#allocation2 + $0x37] sm:$0xff]
        %v972 = vld [vmem:[#allocation2 + $0x3f] sm:$0xff]
        %v973 = vld [vmem:[#allocation2 + $0x47] sm:$0xff]
        %v974 = vld [vmem:[#allocation2 + $0x4f] sm:$0xff]
        %v975 = vld [vmem:[#allocation2 + $0x57] sm:$0xff]
        %v976 = vld [vmem:[#allocation2 + $0x5f] sm:$0xff]
        %v977 = vld [vmem:[#allocation2 + $0x67] sm:$0xff]
        %v978 = vld [vmem:[#allocation2 + $0x6f] sm:$0xff]
        %v979 = vld [vmem:[#allocation2 + $0x77] sm:$0xff]
        %v980 = vld [vmem:[#allocation2 + $0x7f] sm:$0xff]
        %v981 = vld [vmem:[#allocation2 + $0x87] sm:$0xff]
        %v982 = vld [vmem:[#allocation2 + $0x8f] sm:$0xff]
        %v983 = vld [vmem:[#allocation2 + $0x97] sm:$0xff]
        %v984 = vld [vmem:[#allocation2 + $0x9f] sm:$0xff]
        %v985 = vld [vmem:[#allocation2 + $0xa7] sm:$0xff]
        %v986 = vld [vmem:[#allocation2 + $0xaf] sm:$0xff]
        %v987 = vld [vmem:[#allocation2 + $0xb7] sm:$0xff]
        %v988 = vld [vmem:[#allocation2 + $0xbf] sm:$0xff]
        %v989 = vld [vmem:[#allocation2 + $0xc7] sm:$0xff]
        %v990 = vld [vmem:[#allocation2 + $0xcf] sm:$0xff]
        %v991 = vld [vmem:[#allocation2 + $0xd7] sm:$0xff]
        %v992 = vld [vmem:[#allocation2 + $0xdf] sm:$0xff]
        %v993 = vld [vmem:[#allocation2 + $0xe7] sm:$0xff]
        %v994 = vld [vmem:[#allocation2 + $0xef] sm:$0xff]
        %v995 = vld [vmem:[#allocation2 + $0xf7] sm:$0xff]
        %v996 = vld [vmem:[#allocation2 + $0xff] sm:$0xff]
        %v997 = vpack.c.bf16 %v965, %v965
        %v998 = vpack.c.bf16 %v966, %v966
        %v999 = vpack.c.bf16 %v967, %v967
        %v1000 = vpack.c.bf16 %v968, %v968
        %v1001 = vpack.c.bf16 %v969, %v969
        %v1002 = vpack.c.bf16 %v970, %v970
        %v1003 = vpack.c.bf16 %v971, %v971
        %v1004 = vpack.c.bf16 %v972, %v972
        %v1005 = vpack.c.bf16 %v973, %v973
        %v1006 = vpack.c.bf16 %v974, %v974
        %v1007 = vpack.c.bf16 %v975, %v975
        %v1008 = vpack.c.bf16 %v976, %v976
        %v1009 = vpack.c.bf16 %v977, %v977
        %v1010 = vpack.c.bf16 %v978, %v978
        %v1011 = vpack.c.bf16 %v979, %v979
        %v1012 = vpack.c.bf16 %v980, %v980
        %v1013 = vpack.c.bf16 %v981, %v981
        %v1014 = vpack.c.bf16 %v982, %v982
        %v1015 = vpack.c.bf16 %v983, %v983
        %v1016 = vpack.c.bf16 %v984, %v984
        %v1017 = vpack.c.bf16 %v985, %v985
        %v1018 = vpack.c.bf16 %v986, %v986
        %v1019 = vpack.c.bf16 %v987, %v987
        %v1020 = vpack.c.bf16 %v988, %v988
        %v1021 = vpack.c.bf16 %v989, %v989
        %v1022 = vpack.c.bf16 %v990, %v990
        %v1023 = vpack.c.bf16 %v991, %v991
        %v1024 = vpack.c.bf16 %v992, %v992
        %v1025 = vpack.c.bf16 %v993, %v993
        %v1026 = vpack.c.bf16 %v994, %v994
        %v1027 = vpack.c.bf16 %v995, %v995
        %v1028 = vpack.c.bf16 %v996, %v996
        %v1029 = vsel %vm901, 1, 0
        %v1030 = vsel %vm902, 1, 0
        %v1031 = vsel %vm903, 1, 0
        %v1032 = vsel %vm904, 1, 0
        %v1033 = vsel %vm905, 1, 0
        %v1034 = vsel %vm906, 1, 0
        %v1035 = vsel %vm907, 1, 0
        %v1036 = vsel %vm908, 1, 0
        %v1037 = vsel %vm909, 1, 0
        %v1038 = vsel %vm910, 1, 0
        %v1039 = vsel %vm911, 1, 0
        %v1040 = vsel %vm912, 1, 0
        %v1041 = vsel %vm913, 1, 0
        %v1042 = vsel %vm914, 1, 0
        %v1043 = vsel %vm915, 1, 0
        %v1044 = vsel %vm916, 1, 0
        %v1045 = vsel %vm917, 1, 0
        %v1046 = vsel %vm918, 1, 0
        %v1047 = vsel %vm919, 1, 0
        %v1048 = vsel %vm920, 1, 0
        %v1049 = vsel %vm921, 1, 0
        %v1050 = vsel %vm922, 1, 0
        %v1051 = vsel %vm923, 1, 0
        %v1052 = vsel %vm924, 1, 0
        %v1053 = vsel %vm925, 1, 0
        %v1054 = vsel %vm926, 1, 0
        %v1055 = vsel %vm927, 1, 0
        %v1056 = vsel %vm928, 1, 0
        %v1057 = vsel %vm929, 1, 0
        %v1058 = vsel %vm930, 1, 0
        %v1059 = vsel %vm931, 1, 0
        %v1060 = vsel %vm932, 1, 0
        %vm1061 = vcmp.eq.s32.totalorder %v1029, 1
        %vm1062 = vcmp.eq.s32.totalorder %v1030, 1
        %vm1063 = vcmp.eq.s32.totalorder %v1031, 1
        %vm1064 = vcmp.eq.s32.totalorder %v1032, 1
        %vm1065 = vcmp.eq.s32.totalorder %v1033, 1
        %vm1066 = vcmp.eq.s32.totalorder %v1034, 1
        %vm1067 = vcmp.eq.s32.totalorder %v1035, 1
        %vm1068 = vcmp.eq.s32.totalorder %v1036, 1
        %vm1069 = vcmp.eq.s32.totalorder %v1037, 1
        %vm1070 = vcmp.eq.s32.totalorder %v1038, 1
        %vm1071 = vcmp.eq.s32.totalorder %v1039, 1
        %vm1072 = vcmp.eq.s32.totalorder %v1040, 1
        %vm1073 = vcmp.eq.s32.totalorder %v1041, 1
        %vm1074 = vcmp.eq.s32.totalorder %v1042, 1
        %vm1075 = vcmp.eq.s32.totalorder %v1043, 1
        %vm1076 = vcmp.eq.s32.totalorder %v1044, 1
        %vm1077 = vcmp.eq.s32.totalorder %v1045, 1
        %vm1078 = vcmp.eq.s32.totalorder %v1046, 1
        %vm1079 = vcmp.eq.s32.totalorder %v1047, 1
        %vm1080 = vcmp.eq.s32.totalorder %v1048, 1
        %vm1081 = vcmp.eq.s32.totalorder %v1049, 1
        %vm1082 = vcmp.eq.s32.totalorder %v1050, 1
        %vm1083 = vcmp.eq.s32.totalorder %v1051, 1
        %vm1084 = vcmp.eq.s32.totalorder %v1052, 1
        %vm1085 = vcmp.eq.s32.totalorder %v1053, 1
        %vm1086 = vcmp.eq.s32.totalorder %v1054, 1
        %vm1087 = vcmp.eq.s32.totalorder %v1055, 1
        %vm1088 = vcmp.eq.s32.totalorder %v1056, 1
        %vm1089 = vcmp.eq.s32.totalorder %v1057, 1
        %vm1090 = vcmp.eq.s32.totalorder %v1058, 1
        %vm1091 = vcmp.eq.s32.totalorder %v1059, 1
        %vm1092 = vcmp.eq.s32.totalorder %v1060, 1
        %vm1093 = vmpackc.low %vm1061, %vm1061
        %vm1094 = vmpackc.low %vm1062, %vm1062
        %vm1095 = vmpackc.low %vm1063, %vm1063
        %vm1096 = vmpackc.low %vm1064, %vm1064
        %vm1097 = vmpackc.low %vm1065, %vm1065
        %vm1098 = vmpackc.low %vm1066, %vm1066
        %vm1099 = vmpackc.low %vm1067, %vm1067
        %vm1100 = vmpackc.low %vm1068, %vm1068
        %vm1101 = vmpackc.low %vm1069, %vm1069
        %vm1102 = vmpackc.low %vm1070, %vm1070
        %vm1103 = vmpackc.low %vm1071, %vm1071
        %vm1104 = vmpackc.low %vm1072, %vm1072
        %vm1105 = vmpackc.low %vm1073, %vm1073
        %vm1106 = vmpackc.low %vm1074, %vm1074
        %vm1107 = vmpackc.low %vm1075, %vm1075
        %vm1108 = vmpackc.low %vm1076, %vm1076
        %vm1109 = vmpackc.low %vm1077, %vm1077
        %vm1110 = vmpackc.low %vm1078, %vm1078
        %vm1111 = vmpackc.low %vm1079, %vm1079
        %vm1112 = vmpackc.low %vm1080, %vm1080
        %vm1113 = vmpackc.low %vm1081, %vm1081
        %vm1114 = vmpackc.low %vm1082, %vm1082
        %vm1115 = vmpackc.low %vm1083, %vm1083
        %vm1116 = vmpackc.low %vm1084, %vm1084
        %vm1117 = vmpackc.low %vm1085, %vm1085
        %vm1118 = vmpackc.low %vm1086, %vm1086
        %vm1119 = vmpackc.low %vm1087, %vm1087
        %vm1120 = vmpackc.low %vm1088, %vm1088
        %vm1121 = vmpackc.low %vm1089, %vm1089
        %vm1122 = vmpackc.low %vm1090, %vm1090
        %vm1123 = vmpackc.low %vm1091, %vm1091
        %vm1124 = vmpackc.low %vm1092, %vm1092
        %v1125 = vsel %vm1093, %v997, 0
        %v1126 = vsel %vm1094, %v998, 0
        %v1127 = vsel %vm1095, %v999, 0
        %v1128 = vsel %vm1096, %v1000, 0
        %v1129 = vsel %vm1097, %v1001, 0
        %v1130 = vsel %vm1098, %v1002, 0
        %v1131 = vsel %vm1099, %v1003, 0
        %v1132 = vsel %vm1100, %v1004, 0
        %v1133 = vsel %vm1101, %v1005, 0
        %v1134 = vsel %vm1102, %v1006, 0
        %v1135 = vsel %vm1103, %v1007, 0
        %v1136 = vsel %vm1104, %v1008, 0
        %v1137 = vsel %vm1105, %v1009, 0
        %v1138 = vsel %vm1106, %v1010, 0
        %v1139 = vsel %vm1107, %v1011, 0
        %v1140 = vsel %vm1108, %v1012, 0
        %v1141 = vsel %vm1109, %v1013, 0
        %v1142 = vsel %vm1110, %v1014, 0
        %v1143 = vsel %vm1111, %v1015, 0
        %v1144 = vsel %vm1112, %v1016, 0
        %v1145 = vsel %vm1113, %v1017, 0
        %v1146 = vsel %vm1114, %v1018, 0
        %v1147 = vsel %vm1115, %v1019, 0
        %v1148 = vsel %vm1116, %v1020, 0
        %v1149 = vsel %vm1117, %v1021, 0
        %v1150 = vsel %vm1118, %v1022, 0
        %v1151 = vsel %vm1119, %v1023, 0
        %v1152 = vsel %vm1120, %v1024, 0
        %v1153 = vsel %vm1121, %v1025, 0
        %v1154 = vsel %vm1122, %v1026, 0
        %v1155 = vsel %vm1123, %v1027, 0
        %v1156 = vsel %vm1124, %v1028, 0
        %vm1157 = vcmask 60416
        %1158 = vst.msk [vmem:[#allocation3] sm:$0xf] %vm1157, %v1125
        %1159 = vst.msk [vmem:[#allocation3 + $0x4] sm:$0xf] %vm1157, %v1126
        %1160 = vst.msk [vmem:[#allocation3 + $0x8] sm:$0xf] %vm1157, %v1127
        %1161 = vst.msk [vmem:[#allocation3 + $0xc] sm:$0xf] %vm1157, %v1128
        %1162 = vst.msk [vmem:[#allocation3 + $0x10] sm:$0xf] %vm1157, %v1129
        %1163 = vst.msk [vmem:[#allocation3 + $0x14] sm:$0xf] %vm1157, %v1130
        %1164 = vst.msk [vmem:[#allocation3 + $0x18] sm:$0xf] %vm1157, %v1131
        %1165 = vst.msk [vmem:[#allocation3 + $0x1c] sm:$0xf] %vm1157, %v1132
        %1166 = vst.msk [vmem:[#allocation3 + $0x20] sm:$0xf] %vm1157, %v1133
        %1167 = vst.msk [vmem:[#allocation3 + $0x24] sm:$0xf] %vm1157, %v1134
        %1168 = vst.msk [vmem:[#allocation3 + $0x28] sm:$0xf] %vm1157, %v1135
        %1169 = vst.msk [vmem:[#allocation3 + $0x2c] sm:$0xf] %vm1157, %v1136
        %1170 = vst.msk [vmem:[#allocation3 + $0x30] sm:$0xf] %vm1157, %v1137
        %1171 = vst.msk [vmem:[#allocation3 + $0x34] sm:$0xf] %vm1157, %v1138
        %1172 = vst.msk [vmem:[#allocation3 + $0x38] sm:$0xf] %vm1157, %v1139
        %1173 = vst.msk [vmem:[#allocation3 + $0x3c] sm:$0xf] %vm1157, %v1140
        %1174 = vst.msk [vmem:[#allocation3 + $0x40] sm:$0xf] %vm1157, %v1141
        %1175 = vst.msk [vmem:[#allocation3 + $0x44] sm:$0xf] %vm1157, %v1142
        %1176 = vst.msk [vmem:[#allocation3 + $0x48] sm:$0xf] %vm1157, %v1143
        %1177 = vst.msk [vmem:[#allocation3 + $0x4c] sm:$0xf] %vm1157, %v1144
        %1178 = vst.msk [vmem:[#allocation3 + $0x50] sm:$0xf] %vm1157, %v1145
        %1179 = vst.msk [vmem:[#allocation3 + $0x54] sm:$0xf] %vm1157, %v1146
        %1180 = vst.msk [vmem:[#allocation3 + $0x58] sm:$0xf] %vm1157, %v1147
        %1181 = vst.msk [vmem:[#allocation3 + $0x5c] sm:$0xf] %vm1157, %v1148
        %1182 = vst.msk [vmem:[#allocation3 + $0x60] sm:$0xf] %vm1157, %v1149
        %1183 = vst.msk [vmem:[#allocation3 + $0x64] sm:$0xf] %vm1157, %v1150
        %1184 = vst.msk [vmem:[#allocation3 + $0x68] sm:$0xf] %vm1157, %v1151
        %1185 = vst.msk [vmem:[#allocation3 + $0x6c] sm:$0xf] %vm1157, %v1152
        %1186 = vst.msk [vmem:[#allocation3 + $0x70] sm:$0xf] %vm1157, %v1153
        %1187 = vst.msk [vmem:[#allocation3 + $0x74] sm:$0xf] %vm1157, %v1154
        %1188 = vst.msk [vmem:[#allocation3 + $0x78] sm:$0xf] %vm1157, %v1155
        %1189 = vst.msk [vmem:[#allocation3 + $0x7c] sm:$0xf] %vm1157, %v1156
        %v1190 = vld [vmem:[#allocation2 + $0x8] sm:$0xff]
        %v1191 = vld [vmem:[#allocation2 + $0x10] sm:$0xff]
        %v1192 = vld [vmem:[#allocation2 + $0x18] sm:$0xff]
        %v1193 = vld [vmem:[#allocation2 + $0x20] sm:$0xff]
        %v1194 = vld [vmem:[#allocation2 + $0x28] sm:$0xff]
        %v1195 = vld [vmem:[#allocation2 + $0x30] sm:$0xff]
        %v1196 = vld [vmem:[#allocation2 + $0x38] sm:$0xff]
        %v1197 = vld [vmem:[#allocation2 + $0x40] sm:$0xff]
        %v1198 = vld [vmem:[#allocation2 + $0x48] sm:$0xff]
        %v1199 = vld [vmem:[#allocation2 + $0x50] sm:$0xff]
        %v1200 = vld [vmem:[#allocation2 + $0x58] sm:$0xff]
        %v1201 = vld [vmem:[#allocation2 + $0x60] sm:$0xff]
        %v1202 = vld [vmem:[#allocation2 + $0x68] sm:$0xff]
        %v1203 = vld [vmem:[#allocation2 + $0x70] sm:$0xff]
        %v1204 = vld [vmem:[#allocation2 + $0x78] sm:$0xff]
        %v1205 = vld [vmem:[#allocation2 + $0x80] sm:$0xff]
        %v1206 = vld [vmem:[#allocation2 + $0x88] sm:$0xff]
        %v1207 = vld [vmem:[#allocation2 + $0x90] sm:$0xff]
        %v1208 = vld [vmem:[#allocation2 + $0x98] sm:$0xff]
        %v1209 = vld [vmem:[#allocation2 + $0xa0] sm:$0xff]
        %v1210 = vld [vmem:[#allocation2 + $0xa8] sm:$0xff]
        %v1211 = vld [vmem:[#allocation2 + $0xb0] sm:$0xff]
        %v1212 = vld [vmem:[#allocation2 + $0xb8] sm:$0xff]
        %v1213 = vld [vmem:[#allocation2 + $0xc0] sm:$0xff]
        %v1214 = vld [vmem:[#allocation2 + $0xc8] sm:$0xff]
        %v1215 = vld [vmem:[#allocation2 + $0xd0] sm:$0xff]
        %v1216 = vld [vmem:[#allocation2 + $0xd8] sm:$0xff]
        %v1217 = vld [vmem:[#allocation2 + $0xe0] sm:$0xff]
        %v1218 = vld [vmem:[#allocation2 + $0xe8] sm:$0xff]
        %v1219 = vld [vmem:[#allocation2 + $0xf0] sm:$0xff]
        %v1220 = vld [vmem:[#allocation2 + $0xf8] sm:$0xff]
        %v1221 = vld [vmem:[#allocation2 + $0x100] sm:$0xff]
        %v1222 = vpack.c.bf16 %v1190, %v1190
        %v1223 = vpack.c.bf16 %v1191, %v1191
        %v1224 = vpack.c.bf16 %v1192, %v1192
        %v1225 = vpack.c.bf16 %v1193, %v1193
        %v1226 = vpack.c.bf16 %v1194, %v1194
        %v1227 = vpack.c.bf16 %v1195, %v1195
        %v1228 = vpack.c.bf16 %v1196, %v1196
        %v1229 = vpack.c.bf16 %v1197, %v1197
        %v1230 = vpack.c.bf16 %v1198, %v1198
        %v1231 = vpack.c.bf16 %v1199, %v1199
        %v1232 = vpack.c.bf16 %v1200, %v1200
        %v1233 = vpack.c.bf16 %v1201, %v1201
        %v1234 = vpack.c.bf16 %v1202, %v1202
        %v1235 = vpack.c.bf16 %v1203, %v1203
        %v1236 = vpack.c.bf16 %v1204, %v1204
        %v1237 = vpack.c.bf16 %v1205, %v1205
        %v1238 = vpack.c.bf16 %v1206, %v1206
        %v1239 = vpack.c.bf16 %v1207, %v1207
        %v1240 = vpack.c.bf16 %v1208, %v1208
        %v1241 = vpack.c.bf16 %v1209, %v1209
        %v1242 = vpack.c.bf16 %v1210, %v1210
        %v1243 = vpack.c.bf16 %v1211, %v1211
        %v1244 = vpack.c.bf16 %v1212, %v1212
        %v1245 = vpack.c.bf16 %v1213, %v1213
        %v1246 = vpack.c.bf16 %v1214, %v1214
        %v1247 = vpack.c.bf16 %v1215, %v1215
        %v1248 = vpack.c.bf16 %v1216, %v1216
        %v1249 = vpack.c.bf16 %v1217, %v1217
        %v1250 = vpack.c.bf16 %v1218, %v1218
        %v1251 = vpack.c.bf16 %v1219, %v1219
        %v1252 = vpack.c.bf16 %v1220, %v1220
        %v1253 = vpack.c.bf16 %v1221, %v1221
        %1286 = vrot.lane.b32.xlu0 %v1222, 8
        %v1287 = vpop.permute.xlu0 %1286
        %1288 = vrot.lane.b32.xlu0 %v1223, 8
        %v1289 = vpop.permute.xlu0 %1288
        %1290 = vrot.lane.b32.xlu0 %v1224, 8
        %v1291 = vpop.permute.xlu0 %1290
        %1292 = vrot.lane.b32.xlu0 %v1225, 8
        %v1293 = vpop.permute.xlu0 %1292
        %1294 = vrot.lane.b32.xlu0 %v1226, 8
        %v1295 = vpop.permute.xlu0 %1294
        %1296 = vrot.lane.b32.xlu0 %v1227, 8
        %v1297 = vpop.permute.xlu0 %1296
        %1298 = vrot.lane.b32.xlu0 %v1228, 8
        %v1299 = vpop.permute.xlu0 %1298
        %1300 = vrot.lane.b32.xlu0 %v1229, 8
        %v1301 = vpop.permute.xlu0 %1300
        %1302 = vrot.lane.b32.xlu0 %v1230, 8
        %v1303 = vpop.permute.xlu0 %1302
        %1304 = vrot.lane.b32.xlu0 %v1231, 8
        %v1305 = vpop.permute.xlu0 %1304
        %1306 = vrot.lane.b32.xlu0 %v1232, 8
        %v1307 = vpop.permute.xlu0 %1306
        %1308 = vrot.lane.b32.xlu0 %v1233, 8
        %v1309 = vpop.permute.xlu0 %1308
        %1310 = vrot.lane.b32.xlu0 %v1234, 8
        %v1311 = vpop.permute.xlu0 %1310
        %1312 = vrot.lane.b32.xlu0 %v1235, 8
        %v1313 = vpop.permute.xlu0 %1312
        %1314 = vrot.lane.b32.xlu0 %v1236, 8
        %v1315 = vpop.permute.xlu0 %1314
        %1316 = vrot.lane.b32.xlu0 %v1237, 8
        %v1317 = vpop.permute.xlu0 %1316
        %1318 = vrot.lane.b32.xlu0 %v1238, 8
        %v1319 = vpop.permute.xlu0 %1318
        %1320 = vrot.lane.b32.xlu0 %v1239, 8
        %v1321 = vpop.permute.xlu0 %1320
        %1322 = vrot.lane.b32.xlu0 %v1240, 8
        %v1323 = vpop.permute.xlu0 %1322
        %1324 = vrot.lane.b32.xlu0 %v1241, 8
        %v1325 = vpop.permute.xlu0 %1324
        %1326 = vrot.lane.b32.xlu0 %v1242, 8
        %v1327 = vpop.permute.xlu0 %1326
        %1328 = vrot.lane.b32.xlu0 %v1243, 8
        %v1329 = vpop.permute.xlu0 %1328
        %1330 = vrot.lane.b32.xlu0 %v1244, 8
        %v1331 = vpop.permute.xlu0 %1330
        %1332 = vrot.lane.b32.xlu0 %v1245, 8
        %v1333 = vpop.permute.xlu0 %1332
        %1334 = vrot.lane.b32.xlu0 %v1246, 8
        %v1335 = vpop.permute.xlu0 %1334
        %1336 = vrot.lane.b32.xlu0 %v1247, 8
        %v1337 = vpop.permute.xlu0 %1336
        %1338 = vrot.lane.b32.xlu0 %v1248, 8
        %v1339 = vpop.permute.xlu0 %1338
        %1340 = vrot.lane.b32.xlu0 %v1249, 8
        %v1341 = vpop.permute.xlu0 %1340
        %1342 = vrot.lane.b32.xlu0 %v1250, 8
        %v1343 = vpop.permute.xlu0 %1342
        %1344 = vrot.lane.b32.xlu0 %v1251, 8
        %v1345 = vpop.permute.xlu0 %1344
        %1346 = vrot.lane.b32.xlu0 %v1252, 8
        %v1347 = vpop.permute.xlu0 %1346
        %1348 = vrot.lane.b32.xlu0 %v1253, 8
        %v1349 = vpop.permute.xlu0 %1348
        %vm1382 = vcmask 126016
        %1383 = vst.msk [vmem:[#allocation3] sm:$0xf] %vm1382, %v1287
        %1384 = vst.msk [vmem:[#allocation3 + $0x4] sm:$0xf] %vm1382, %v1289
        %1385 = vst.msk [vmem:[#allocation3 + $0x8] sm:$0xf] %vm1382, %v1291
        %1386 = vst.msk [vmem:[#allocation3 + $0xc] sm:$0xf] %vm1382, %v1293
        %1387 = vst.msk [vmem:[#allocation3 + $0x10] sm:$0xf] %vm1382, %v1295
        %1388 = vst.msk [vmem:[#allocation3 + $0x14] sm:$0xf] %vm1382, %v1297
        %1389 = vst.msk [vmem:[#allocation3 + $0x18] sm:$0xf] %vm1382, %v1299
        %1390 = vst.msk [vmem:[#allocation3 + $0x1c] sm:$0xf] %vm1382, %v1301
        %1391 = vst.msk [vmem:[#allocation3 + $0x20] sm:$0xf] %vm1382, %v1303
        %1392 = vst.msk [vmem:[#allocation3 + $0x24] sm:$0xf] %vm1382, %v1305
        %1393 = vst.msk [vmem:[#allocation3 + $0x28] sm:$0xf] %vm1382, %v1307
        %1394 = vst.msk [vmem:[#allocation3 + $0x2c] sm:$0xf] %vm1382, %v1309
        %1395 = vst.msk [vmem:[#allocation3 + $0x30] sm:$0xf] %vm1382, %v1311
        %1396 = vst.msk [vmem:[#allocation3 + $0x34] sm:$0xf] %vm1382, %v1313
        %1397 = vst.msk [vmem:[#allocation3 + $0x38] sm:$0xf] %vm1382, %v1315
        %1398 = vst.msk [vmem:[#allocation3 + $0x3c] sm:$0xf] %vm1382, %v1317
        %1399 = vst.msk [vmem:[#allocation3 + $0x40] sm:$0xf] %vm1382, %v1319
        %1400 = vst.msk [vmem:[#allocation3 + $0x44] sm:$0xf] %vm1382, %v1321
        %1401 = vst.msk [vmem:[#allocation3 + $0x48] sm:$0xf] %vm1382, %v1323
        %1402 = vst.msk [vmem:[#allocation3 + $0x4c] sm:$0xf] %vm1382, %v1325
        %1403 = vst.msk [vmem:[#allocation3 + $0x50] sm:$0xf] %vm1382, %v1327
        %1404 = vst.msk [vmem:[#allocation3 + $0x54] sm:$0xf] %vm1382, %v1329
        %1405 = vst.msk [vmem:[#allocation3 + $0x58] sm:$0xf] %vm1382, %v1331
        %1406 = vst.msk [vmem:[#allocation3 + $0x5c] sm:$0xf] %vm1382, %v1333
        %1407 = vst.msk [vmem:[#allocation3 + $0x60] sm:$0xf] %vm1382, %v1335
        %1408 = vst.msk [vmem:[#allocation3 + $0x64] sm:$0xf] %vm1382, %v1337
        %1409 = vst.msk [vmem:[#allocation3 + $0x68] sm:$0xf] %vm1382, %v1339
        %1410 = vst.msk [vmem:[#allocation3 + $0x6c] sm:$0xf] %vm1382, %v1341
        %1411 = vst.msk [vmem:[#allocation3 + $0x70] sm:$0xf] %vm1382, %v1343
        %1412 = vst.msk [vmem:[#allocation3 + $0x74] sm:$0xf] %vm1382, %v1345
        %1413 = vst.msk [vmem:[#allocation3 + $0x78] sm:$0xf] %vm1382, %v1347
        %1414 = vst.msk [vmem:[#allocation3 + $0x7c] sm:$0xf] %vm1382, %v1349
        %v1415 = vld [vmem:[#allocation2 + $0x9] sm:$0xff]
        %v1416 = vld [vmem:[#allocation2 + $0x11] sm:$0xff]
        %v1417 = vld [vmem:[#allocation2 + $0x19] sm:$0xff]
        %v1418 = vld [vmem:[#allocation2 + $0x21] sm:$0xff]
        %v1419 = vld [vmem:[#allocation2 + $0x29] sm:$0xff]
        %v1420 = vld [vmem:[#allocation2 + $0x31] sm:$0xff]
        %v1421 = vld [vmem:[#allocation2 + $0x39] sm:$0xff]
        %v1422 = vld [vmem:[#allocation2 + $0x41] sm:$0xff]
        %v1423 = vld [vmem:[#allocation2 + $0x49] sm:$0xff]
        %v1424 = vld [vmem:[#allocation2 + $0x51] sm:$0xff]
        %v1425 = vld [vmem:[#allocation2 + $0x59] sm:$0xff]
        %v1426 = vld [vmem:[#allocation2 + $0x61] sm:$0xff]
        %v1427 = vld [vmem:[#allocation2 + $0x69] sm:$0xff]
        %v1428 = vld [vmem:[#allocation2 + $0x71] sm:$0xff]
        %v1429 = vld [vmem:[#allocation2 + $0x79] sm:$0xff]
        %v1430 = vld [vmem:[#allocation2 + $0x81] sm:$0xff]
        %v1431 = vld [vmem:[#allocation2 + $0x89] sm:$0xff]
        %v1432 = vld [vmem:[#allocation2 + $0x91] sm:$0xff]
        %v1433 = vld [vmem:[#allocation2 + $0x99] sm:$0xff]
        %v1434 = vld [vmem:[#allocation2 + $0xa1] sm:$0xff]
        %v1435 = vld [vmem:[#allocation2 + $0xa9] sm:$0xff]
        %v1436 = vld [vmem:[#allocation2 + $0xb1] sm:$0xff]
        %v1437 = vld [vmem:[#allocation2 + $0xb9] sm:$0xff]
        %v1438 = vld [vmem:[#allocation2 + $0xc1] sm:$0xff]
        %v1439 = vld [vmem:[#allocation2 + $0xc9] sm:$0xff]
        %v1440 = vld [vmem:[#allocation2 + $0xd1] sm:$0xff]
        %v1441 = vld [vmem:[#allocation2 + $0xd9] sm:$0xff]
        %v1442 = vld [vmem:[#allocation2 + $0xe1] sm:$0xff]
        %v1443 = vld [vmem:[#allocation2 + $0xe9] sm:$0xff]
        %v1444 = vld [vmem:[#allocation2 + $0xf1] sm:$0xff]
        %v1445 = vld [vmem:[#allocation2 + $0xf9] sm:$0xff]
        %v1446 = vld [vmem:[#allocation2 + $0x101] sm:$0xff]
        %v1447 = vpack.c.bf16 %v1415, %v1415
        %v1448 = vpack.c.bf16 %v1416, %v1416
        %v1449 = vpack.c.bf16 %v1417, %v1417
        %v1450 = vpack.c.bf16 %v1418, %v1418
        %v1451 = vpack.c.bf16 %v1419, %v1419
        %v1452 = vpack.c.bf16 %v1420, %v1420
        %v1453 = vpack.c.bf16 %v1421, %v1421
        %v1454 = vpack.c.bf16 %v1422, %v1422
        %v1455 = vpack.c.bf16 %v1423, %v1423
        %v1456 = vpack.c.bf16 %v1424, %v1424
        %v1457 = vpack.c.bf16 %v1425, %v1425
        %v1458 = vpack.c.bf16 %v1426, %v1426
        %v1459 = vpack.c.bf16 %v1427, %v1427
        %v1460 = vpack.c.bf16 %v1428, %v1428
        %v1461 = vpack.c.bf16 %v1429, %v1429
        %v1462 = vpack.c.bf16 %v1430, %v1430
        %v1463 = vpack.c.bf16 %v1431, %v1431
        %v1464 = vpack.c.bf16 %v1432, %v1432
        %v1465 = vpack.c.bf16 %v1433, %v1433
        %v1466 = vpack.c.bf16 %v1434, %v1434
        %v1467 = vpack.c.bf16 %v1435, %v1435
        %v1468 = vpack.c.bf16 %v1436, %v1436
        %v1469 = vpack.c.bf16 %v1437, %v1437
        %v1470 = vpack.c.bf16 %v1438, %v1438
        %v1471 = vpack.c.bf16 %v1439, %v1439
        %v1472 = vpack.c.bf16 %v1440, %v1440
        %v1473 = vpack.c.bf16 %v1441, %v1441
        %v1474 = vpack.c.bf16 %v1442, %v1442
        %v1475 = vpack.c.bf16 %v1443, %v1443
        %v1476 = vpack.c.bf16 %v1444, %v1444
        %v1477 = vpack.c.bf16 %v1445, %v1445
        %v1478 = vpack.c.bf16 %v1446, %v1446
        %v1479 = vsel %vm933, 1, 0
        %v1480 = vsel %vm934, 1, 0
        %v1481 = vsel %vm935, 1, 0
        %v1482 = vsel %vm936, 1, 0
        %v1483 = vsel %vm937, 1, 0
        %v1484 = vsel %vm938, 1, 0
        %v1485 = vsel %vm939, 1, 0
        %v1486 = vsel %vm940, 1, 0
        %v1487 = vsel %vm941, 1, 0
        %v1488 = vsel %vm942, 1, 0
        %v1489 = vsel %vm943, 1, 0
        %v1490 = vsel %vm944, 1, 0
        %v1491 = vsel %vm945, 1, 0
        %v1492 = vsel %vm946, 1, 0
        %v1493 = vsel %vm947, 1, 0
        %v1494 = vsel %vm948, 1, 0
        %v1495 = vsel %vm949, 1, 0
        %v1496 = vsel %vm950, 1, 0
        %v1497 = vsel %vm951, 1, 0
        %v1498 = vsel %vm952, 1, 0
        %v1499 = vsel %vm953, 1, 0
        %v1500 = vsel %vm954, 1, 0
        %v1501 = vsel %vm955, 1, 0
        %v1502 = vsel %vm956, 1, 0
        %v1503 = vsel %vm957, 1, 0
        %v1504 = vsel %vm958, 1, 0
        %v1505 = vsel %vm959, 1, 0
        %v1506 = vsel %vm960, 1, 0
        %v1507 = vsel %vm961, 1, 0
        %v1508 = vsel %vm962, 1, 0
        %v1509 = vsel %vm963, 1, 0
        %v1510 = vsel %vm964, 1, 0
        %vm1511 = vcmp.eq.s32.totalorder %v1479, 1
        %vm1512 = vcmp.eq.s32.totalorder %v1480, 1
        %vm1513 = vcmp.eq.s32.totalorder %v1481, 1
        %vm1514 = vcmp.eq.s32.totalorder %v1482, 1
        %vm1515 = vcmp.eq.s32.totalorder %v1483, 1
        %vm1516 = vcmp.eq.s32.totalorder %v1484, 1
        %vm1517 = vcmp.eq.s32.totalorder %v1485, 1
        %vm1518 = vcmp.eq.s32.totalorder %v1486, 1
        %vm1519 = vcmp.eq.s32.totalorder %v1487, 1
        %vm1520 = vcmp.eq.s32.totalorder %v1488, 1
        %vm1521 = vcmp.eq.s32.totalorder %v1489, 1
        %vm1522 = vcmp.eq.s32.totalorder %v1490, 1
        %vm1523 = vcmp.eq.s32.totalorder %v1491, 1
        %vm1524 = vcmp.eq.s32.totalorder %v1492, 1
        %vm1525 = vcmp.eq.s32.totalorder %v1493, 1
        %vm1526 = vcmp.eq.s32.totalorder %v1494, 1
        %vm1527 = vcmp.eq.s32.totalorder %v1495, 1
        %vm1528 = vcmp.eq.s32.totalorder %v1496, 1
        %vm1529 = vcmp.eq.s32.totalorder %v1497, 1
        %vm1530 = vcmp.eq.s32.totalorder %v1498, 1
        %vm1531 = vcmp.eq.s32.totalorder %v1499, 1
        %vm1532 = vcmp.eq.s32.totalorder %v1500, 1
        %vm1533 = vcmp.eq.s32.totalorder %v1501, 1
        %vm1534 = vcmp.eq.s32.totalorder %v1502, 1
        %vm1535 = vcmp.eq.s32.totalorder %v1503, 1
        %vm1536 = vcmp.eq.s32.totalorder %v1504, 1
        %vm1537 = vcmp.eq.s32.totalorder %v1505, 1
        %vm1538 = vcmp.eq.s32.totalorder %v1506, 1
        %vm1539 = vcmp.eq.s32.totalorder %v1507, 1
        %vm1540 = vcmp.eq.s32.totalorder %v1508, 1
        %vm1541 = vcmp.eq.s32.totalorder %v1509, 1
        %vm1542 = vcmp.eq.s32.totalorder %v1510, 1
        %vm1543 = vmpackc.low %vm1511, %vm1511
        %vm1544 = vmpackc.low %vm1512, %vm1512
        %vm1545 = vmpackc.low %vm1513, %vm1513
        %vm1546 = vmpackc.low %vm1514, %vm1514
        %vm1547 = vmpackc.low %vm1515, %vm1515
        %vm1548 = vmpackc.low %vm1516, %vm1516
        %vm1549 = vmpackc.low %vm1517, %vm1517
        %vm1550 = vmpackc.low %vm1518, %vm1518
        %vm1551 = vmpackc.low %vm1519, %vm1519
        %vm1552 = vmpackc.low %vm1520, %vm1520
        %vm1553 = vmpackc.low %vm1521, %vm1521
        %vm1554 = vmpackc.low %vm1522, %vm1522
        %vm1555 = vmpackc.low %vm1523, %vm1523
        %vm1556 = vmpackc.low %vm1524, %vm1524
        %vm1557 = vmpackc.low %vm1525, %vm1525
        %vm1558 = vmpackc.low %vm1526, %vm1526
        %vm1559 = vmpackc.low %vm1527, %vm1527
        %vm1560 = vmpackc.low %vm1528, %vm1528
        %vm1561 = vmpackc.low %vm1529, %vm1529
        %vm1562 = vmpackc.low %vm1530, %vm1530
        %vm1563 = vmpackc.low %vm1531, %vm1531
        %vm1564 = vmpackc.low %vm1532, %vm1532
        %vm1565 = vmpackc.low %vm1533, %vm1533
        %vm1566 = vmpackc.low %vm1534, %vm1534
        %vm1567 = vmpackc.low %vm1535, %vm1535
        %vm1568 = vmpackc.low %vm1536, %vm1536
        %vm1569 = vmpackc.low %vm1537, %vm1537
        %vm1570 = vmpackc.low %vm1538, %vm1538
        %vm1571 = vmpackc.low %vm1539, %vm1539
        %vm1572 = vmpackc.low %vm1540, %vm1540
        %vm1573 = vmpackc.low %vm1541, %vm1541
        %vm1574 = vmpackc.low %vm1542, %vm1542
        %v1575 = vsel %vm1543, %v1447, 0
        %v1576 = vsel %vm1544, %v1448, 0
        %v1577 = vsel %vm1545, %v1449, 0
        %v1578 = vsel %vm1546, %v1450, 0
        %v1579 = vsel %vm1547, %v1451, 0
        %v1580 = vsel %vm1548, %v1452, 0
        %v1581 = vsel %vm1549, %v1453, 0
        %v1582 = vsel %vm1550, %v1454, 0
        %v1583 = vsel %vm1551, %v1455, 0
        %v1584 = vsel %vm1552, %v1456, 0
        %v1585 = vsel %vm1553, %v1457, 0
        %v1586 = vsel %vm1554, %v1458, 0
        %v1587 = vsel %vm1555, %v1459, 0
        %v1588 = vsel %vm1556, %v1460, 0
        %v1589 = vsel %vm1557, %v1461, 0
        %v1590 = vsel %vm1558, %v1462, 0
        %v1591 = vsel %vm1559, %v1463, 0
        %v1592 = vsel %vm1560, %v1464, 0
        %v1593 = vsel %vm1561, %v1465, 0
        %v1594 = vsel %vm1562, %v1466, 0
        %v1595 = vsel %vm1563, %v1467, 0
        %v1596 = vsel %vm1564, %v1468, 0
        %v1597 = vsel %vm1565, %v1469, 0
        %v1598 = vsel %vm1566, %v1470, 0
        %v1599 = vsel %vm1567, %v1471, 0
        %v1600 = vsel %vm1568, %v1472, 0
        %v1601 = vsel %vm1569, %v1473, 0
        %v1602 = vsel %vm1570, %v1474, 0
        %v1603 = vsel %vm1571, %v1475, 0
        %v1604 = vsel %vm1572, %v1476, 0
        %v1605 = vsel %vm1573, %v1477, 0
        %v1606 = vsel %vm1574, %v1478, 0
        %1639 = vrot.lane.b32.xlu0 %v1575, 16
        %v1640 = vpop.permute.xlu0 %1639
        %1641 = vrot.lane.b32.xlu0 %v1576, 16
        %v1642 = vpop.permute.xlu0 %1641
        %1643 = vrot.lane.b32.xlu0 %v1577, 16
        %v1644 = vpop.permute.xlu0 %1643
        %1645 = vrot.lane.b32.xlu0 %v1578, 16
        %v1646 = vpop.permute.xlu0 %1645
        %1647 = vrot.lane.b32.xlu0 %v1579, 16
        %v1648 = vpop.permute.xlu0 %1647
        %1649 = vrot.lane.b32.xlu0 %v1580, 16
        %v1650 = vpop.permute.xlu0 %1649
        %1651 = vrot.lane.b32.xlu0 %v1581, 16
        %v1652 = vpop.permute.xlu0 %1651
        %1653 = vrot.lane.b32.xlu0 %v1582, 16
        %v1654 = vpop.permute.xlu0 %1653
        %1655 = vrot.lane.b32.xlu0 %v1583, 16
        %v1656 = vpop.permute.xlu0 %1655
        %1657 = vrot.lane.b32.xlu0 %v1584, 16
        %v1658 = vpop.permute.xlu0 %1657
        %1659 = vrot.lane.b32.xlu0 %v1585, 16
        %v1660 = vpop.permute.xlu0 %1659
        %1661 = vrot.lane.b32.xlu0 %v1586, 16
        %v1662 = vpop.permute.xlu0 %1661
        %1663 = vrot.lane.b32.xlu0 %v1587, 16
        %v1664 = vpop.permute.xlu0 %1663
        %1665 = vrot.lane.b32.xlu0 %v1588, 16
        %v1666 = vpop.permute.xlu0 %1665
        %1667 = vrot.lane.b32.xlu0 %v1589, 16
        %v1668 = vpop.permute.xlu0 %1667
        %1669 = vrot.lane.b32.xlu0 %v1590, 16
        %v1670 = vpop.permute.xlu0 %1669
        %1671 = vrot.lane.b32.xlu0 %v1591, 16
        %v1672 = vpop.permute.xlu0 %1671
        %1673 = vrot.lane.b32.xlu0 %v1592, 16
        %v1674 = vpop.permute.xlu0 %1673
        %1675 = vrot.lane.b32.xlu0 %v1593, 16
        %v1676 = vpop.permute.xlu0 %1675
        %1677 = vrot.lane.b32.xlu0 %v1594, 16
        %v1678 = vpop.permute.xlu0 %1677
        %1679 = vrot.lane.b32.xlu0 %v1595, 16
        %v1680 = vpop.permute.xlu0 %1679
        %1681 = vrot.lane.b32.xlu0 %v1596, 16
        %v1682 = vpop.permute.xlu0 %1681
        %1683 = vrot.lane.b32.xlu0 %v1597, 16
        %v1684 = vpop.permute.xlu0 %1683
        %1685 = vrot.lane.b32.xlu0 %v1598, 16
        %v1686 = vpop.permute.xlu0 %1685
        %1687 = vrot.lane.b32.xlu0 %v1599, 16
        %v1688 = vpop.permute.xlu0 %1687
        %1689 = vrot.lane.b32.xlu0 %v1600, 16
        %v1690 = vpop.permute.xlu0 %1689
        %1691 = vrot.lane.b32.xlu0 %v1601, 16
        %v1692 = vpop.permute.xlu0 %1691
        %1693 = vrot.lane.b32.xlu0 %v1602, 16
        %v1694 = vpop.permute.xlu0 %1693
        %1695 = vrot.lane.b32.xlu0 %v1603, 16
        %v1696 = vpop.permute.xlu0 %1695
        %1697 = vrot.lane.b32.xlu0 %v1604, 16
        %v1698 = vpop.permute.xlu0 %1697
        %1699 = vrot.lane.b32.xlu0 %v1605, 16
        %v1700 = vpop.permute.xlu0 %1699
        %1701 = vrot.lane.b32.xlu0 %v1606, 16
        %v1702 = vpop.permute.xlu0 %1701
        %vm1735 = vcmask 191616
        %1736 = vst.msk [vmem:[#allocation3] sm:$0xf] %vm1735, %v1640
        %1737 = vst.msk [vmem:[#allocation3 + $0x4] sm:$0xf] %vm1735, %v1642
        %1738 = vst.msk [vmem:[#allocation3 + $0x8] sm:$0xf] %vm1735, %v1644
        %1739 = vst.msk [vmem:[#allocation3 + $0xc] sm:$0xf] %vm1735, %v1646
        %1740 = vst.msk [vmem:[#allocation3 + $0x10] sm:$0xf] %vm1735, %v1648
        %1741 = vst.msk [vmem:[#allocation3 + $0x14] sm:$0xf] %vm1735, %v1650
        %1742 = vst.msk [vmem:[#allocation3 + $0x18] sm:$0xf] %vm1735, %v1652
        %1743 = vst.msk [vmem:[#allocation3 + $0x1c] sm:$0xf] %vm1735, %v1654
        %1744 = vst.msk [vmem:[#allocation3 + $0x20] sm:$0xf] %vm1735, %v1656
        %1745 = vst.msk [vmem:[#allocation3 + $0x24] sm:$0xf] %vm1735, %v1658
        %1746 = vst.msk [vmem:[#allocation3 + $0x28] sm:$0xf] %vm1735, %v1660
        %1747 = vst.msk [vmem:[#allocation3 + $0x2c] sm:$0xf] %vm1735, %v1662
        %1748 = vst.msk [vmem:[#allocation3 + $0x30] sm:$0xf] %vm1735, %v1664
        %1749 = vst.msk [vmem:[#allocation3 + $0x34] sm:$0xf] %vm1735, %v1666
        %1750 = vst.msk [vmem:[#allocation3 + $0x38] sm:$0xf] %vm1735, %v1668
        %1751 = vst.msk [vmem:[#allocation3 + $0x3c] sm:$0xf] %vm1735, %v1670
        %1752 = vst.msk [vmem:[#allocation3 + $0x40] sm:$0xf] %vm1735, %v1672
        %1753 = vst.msk [vmem:[#allocation3 + $0x44] sm:$0xf] %vm1735, %v1674
        %1754 = vst.msk [vmem:[#allocation3 + $0x48] sm:$0xf] %vm1735, %v1676
        %1755 = vst.msk [vmem:[#allocation3 + $0x4c] sm:$0xf] %vm1735, %v1678
        %1756 = vst.msk [vmem:[#allocation3 + $0x50] sm:$0xf] %vm1735, %v1680
        %1757 = vst.msk [vmem:[#allocation3 + $0x54] sm:$0xf] %vm1735, %v1682
        %1758 = vst.msk [vmem:[#allocation3 + $0x58] sm:$0xf] %vm1735, %v1684
        %1759 = vst.msk [vmem:[#allocation3 + $0x5c] sm:$0xf] %vm1735, %v1686
        %1760 = vst.msk [vmem:[#allocation3 + $0x60] sm:$0xf] %vm1735, %v1688
        %1761 = vst.msk [vmem:[#allocation3 + $0x64] sm:$0xf] %vm1735, %v1690
        %1762 = vst.msk [vmem:[#allocation3 + $0x68] sm:$0xf] %vm1735, %v1692
        %1763 = vst.msk [vmem:[#allocation3 + $0x6c] sm:$0xf] %vm1735, %v1694
        %1764 = vst.msk [vmem:[#allocation3 + $0x70] sm:$0xf] %vm1735, %v1696
        %1765 = vst.msk [vmem:[#allocation3 + $0x74] sm:$0xf] %vm1735, %v1698
        %1766 = vst.msk [vmem:[#allocation3 + $0x78] sm:$0xf] %vm1735, %v1700
        %1767 = vst.msk [vmem:[#allocation3 + $0x7c] sm:$0xf] %vm1735, %v1702
        %v1768 = vld [vmem:[#allocation2 + $0x17] sm:$0xff]
        %v1769 = vld [vmem:[#allocation2 + $0x1f] sm:$0xff]
        %v1770 = vld [vmem:[#allocation2 + $0x27] sm:$0xff]
        %v1771 = vld [vmem:[#allocation2 + $0x2f] sm:$0xff]
        %v1772 = vld [vmem:[#allocation2 + $0x37] sm:$0xff]
        %v1773 = vld [vmem:[#allocation2 + $0x3f] sm:$0xff]
        %v1774 = vld [vmem:[#allocation2 + $0x47] sm:$0xff]
        %v1775 = vld [vmem:[#allocation2 + $0x4f] sm:$0xff]
        %v1776 = vld [vmem:[#allocation2 + $0x57] sm:$0xff]
        %v1777 = vld [vmem:[#allocation2 + $0x5f] sm:$0xff]
        %v1778 = vld [vmem:[#allocation2 + $0x67] sm:$0xff]
        %v1779 = vld [vmem:[#allocation2 + $0x6f] sm:$0xff]
        %v1780 = vld [vmem:[#allocation2 + $0x77] sm:$0xff]
        %v1781 = vld [vmem:[#allocation2 + $0x7f] sm:$0xff]
        %v1782 = vld [vmem:[#allocation2 + $0x87] sm:$0xff]
        %v1783 = vld [vmem:[#allocation2 + $0x8f] sm:$0xff]
        %v1784 = vld [vmem:[#allocation2 + $0x97] sm:$0xff]
        %v1785 = vld [vmem:[#allocation2 + $0x9f] sm:$0xff]
        %v1786 = vld [vmem:[#allocation2 + $0xa7] sm:$0xff]
        %v1787 = vld [vmem:[#allocation2 + $0xaf] sm:$0xff]
        %v1788 = vld [vmem:[#allocation2 + $0xb7] sm:$0xff]
        %v1789 = vld [vmem:[#allocation2 + $0xbf] sm:$0xff]
        %v1790 = vld [vmem:[#allocation2 + $0xc7] sm:$0xff]
        %v1791 = vld [vmem:[#allocation2 + $0xcf] sm:$0xff]
        %v1792 = vld [vmem:[#allocation2 + $0xd7] sm:$0xff]
        %v1793 = vld [vmem:[#allocation2 + $0xdf] sm:$0xff]
        %v1794 = vld [vmem:[#allocation2 + $0xe7] sm:$0xff]
        %v1795 = vld [vmem:[#allocation2 + $0xef] sm:$0xff]
        %v1796 = vld [vmem:[#allocation2 + $0xf7] sm:$0xff]
        %v1797 = vld [vmem:[#allocation2 + $0xff] sm:$0xff]
        %v1798 = vld [vmem:[#allocation2 + $0x107] sm:$0xff]
        %v1799 = vld [vmem:[#allocation2 + $0x10f] sm:$0xff]
        %v1800 = vpack.c.bf16 %v1768, %v1768
        %v1801 = vpack.c.bf16 %v1769, %v1769
        %v1802 = vpack.c.bf16 %v1770, %v1770
        %v1803 = vpack.c.bf16 %v1771, %v1771
        %v1804 = vpack.c.bf16 %v1772, %v1772
        %v1805 = vpack.c.bf16 %v1773, %v1773
        %v1806 = vpack.c.bf16 %v1774, %v1774
        %v1807 = vpack.c.bf16 %v1775, %v1775
        %v1808 = vpack.c.bf16 %v1776, %v1776
        %v1809 = vpack.c.bf16 %v1777, %v1777
        %v1810 = vpack.c.bf16 %v1778, %v1778
        %v1811 = vpack.c.bf16 %v1779, %v1779
        %v1812 = vpack.c.bf16 %v1780, %v1780
        %v1813 = vpack.c.bf16 %v1781, %v1781
        %v1814 = vpack.c.bf16 %v1782, %v1782
        %v1815 = vpack.c.bf16 %v1783, %v1783
        %v1816 = vpack.c.bf16 %v1784, %v1784
        %v1817 = vpack.c.bf16 %v1785, %v1785
        %v1818 = vpack.c.bf16 %v1786, %v1786
        %v1819 = vpack.c.bf16 %v1787, %v1787
        %v1820 = vpack.c.bf16 %v1788, %v1788
        %v1821 = vpack.c.bf16 %v1789, %v1789
        %v1822 = vpack.c.bf16 %v1790, %v1790
        %v1823 = vpack.c.bf16 %v1791, %v1791
        %v1824 = vpack.c.bf16 %v1792, %v1792
        %v1825 = vpack.c.bf16 %v1793, %v1793
        %v1826 = vpack.c.bf16 %v1794, %v1794
        %v1827 = vpack.c.bf16 %v1795, %v1795
        %v1828 = vpack.c.bf16 %v1796, %v1796
        %v1829 = vpack.c.bf16 %v1797, %v1797
        %v1830 = vpack.c.bf16 %v1798, %v1798
        %v1831 = vpack.c.bf16 %v1799, %v1799
        %v1832 = vsel %vm1093, %v1800, 0
        %v1833 = vsel %vm1094, %v1801, 0
        %v1834 = vsel %vm1095, %v1802, 0
        %v1835 = vsel %vm1096, %v1803, 0
        %v1836 = vsel %vm1097, %v1804, 0
        %v1837 = vsel %vm1098, %v1805, 0
        %v1838 = vsel %vm1099, %v1806, 0
        %v1839 = vsel %vm1100, %v1807, 0
        %v1840 = vsel %vm1101, %v1808, 0
        %v1841 = vsel %vm1102, %v1809, 0
        %v1842 = vsel %vm1103, %v1810, 0
        %v1843 = vsel %vm1104, %v1811, 0
        %v1844 = vsel %vm1105, %v1812, 0
        %v1845 = vsel %vm1106, %v1813, 0
        %v1846 = vsel %vm1107, %v1814, 0
        %v1847 = vsel %vm1108, %v1815, 0
        %v1848 = vsel %vm1109, %v1816, 0
        %v1849 = vsel %vm1110, %v1817, 0
        %v1850 = vsel %vm1111, %v1818, 0
        %v1851 = vsel %vm1112, %v1819, 0
        %v1852 = vsel %vm1113, %v1820, 0
        %v1853 = vsel %vm1114, %v1821, 0
        %v1854 = vsel %vm1115, %v1822, 0
        %v1855 = vsel %vm1116, %v1823, 0
        %v1856 = vsel %vm1117, %v1824, 0
        %v1857 = vsel %vm1118, %v1825, 0
        %v1858 = vsel %vm1119, %v1826, 0
        %v1859 = vsel %vm1120, %v1827, 0
        %v1860 = vsel %vm1121, %v1828, 0
        %v1861 = vsel %vm1122, %v1829, 0
        %v1862 = vsel %vm1123, %v1830, 0
        %v1863 = vsel %vm1124, %v1831, 0
        %1896 = vrot.lane.b32.xlu0 %v1832, 24
        %v1897 = vpop.permute.xlu0 %1896
        %1898 = vrot.lane.b32.xlu0 %v1833, 24
        %v1899 = vpop.permute.xlu0 %1898
        %1900 = vrot.lane.b32.xlu0 %v1834, 24
        %v1901 = vpop.permute.xlu0 %1900
        %1902 = vrot.lane.b32.xlu0 %v1835, 24
        %v1903 = vpop.permute.xlu0 %1902
        %1904 = vrot.lane.b32.xlu0 %v1836, 24
        %v1905 = vpop.permute.xlu0 %1904
        %1906 = vrot.lane.b32.xlu0 %v1837, 24
        %v1907 = vpop.permute.xlu0 %1906
        %1908 = vrot.lane.b32.xlu0 %v1838, 24
        %v1909 = vpop.permute.xlu0 %1908
        %1910 = vrot.lane.b32.xlu0 %v1839, 24
        %v1911 = vpop.permute.xlu0 %1910
        %1912 = vrot.lane.b32.xlu0 %v1840, 24
        %v1913 = vpop.permute.xlu0 %1912
        %1914 = vrot.lane.b32.xlu0 %v1841, 24
        %v1915 = vpop.permute.xlu0 %1914
        %1916 = vrot.lane.b32.xlu0 %v1842, 24
        %v1917 = vpop.permute.xlu0 %1916
        %1918 = vrot.lane.b32.xlu0 %v1843, 24
        %v1919 = vpop.permute.xlu0 %1918
        %1920 = vrot.lane.b32.xlu0 %v1844, 24
        %v1921 = vpop.permute.xlu0 %1920
        %1922 = vrot.lane.b32.xlu0 %v1845, 24
        %v1923 = vpop.permute.xlu0 %1922
        %1924 = vrot.lane.b32.xlu0 %v1846, 24
        %v1925 = vpop.permute.xlu0 %1924
        %1926 = vrot.lane.b32.xlu0 %v1847, 24
        %v1927 = vpop.permute.xlu0 %1926
        %1928 = vrot.lane.b32.xlu0 %v1848, 24
        %v1929 = vpop.permute.xlu0 %1928
        %1930 = vrot.lane.b32.xlu0 %v1849, 24
        %v1931 = vpop.permute.xlu0 %1930
        %1932 = vrot.lane.b32.xlu0 %v1850, 24
        %v1933 = vpop.permute.xlu0 %1932
        %1934 = vrot.lane.b32.xlu0 %v1851, 24
        %v1935 = vpop.permute.xlu0 %1934
        %1936 = vrot.lane.b32.xlu0 %v1852, 24
        %v1937 = vpop.permute.xlu0 %1936
        %1938 = vrot.lane.b32.xlu0 %v1853, 24
        %v1939 = vpop.permute.xlu0 %1938
        %1940 = vrot.lane.b32.xlu0 %v1854, 24
        %v1941 = vpop.permute.xlu0 %1940
        %1942 = vrot.lane.b32.xlu0 %v1855, 24
        %v1943 = vpop.permute.xlu0 %1942
        %1944 = vrot.lane.b32.xlu0 %v1856, 24
        %v1945 = vpop.permute.xlu0 %1944
        %1946 = vrot.lane.b32.xlu0 %v1857, 24
        %v1947 = vpop.permute.xlu0 %1946
        %1948 = vrot.lane.b32.xlu0 %v1858, 24
        %v1949 = vpop.permute.xlu0 %1948
        %1950 = vrot.lane.b32.xlu0 %v1859, 24
        %v1951 = vpop.permute.xlu0 %1950
        %1952 = vrot.lane.b32.xlu0 %v1860, 24
        %v1953 = vpop.permute.xlu0 %1952
        %1954 = vrot.lane.b32.xlu0 %v1861, 24
        %v1955 = vpop.permute.xlu0 %1954
        %1956 = vrot.lane.b32.xlu0 %v1862, 24
        %v1957 = vpop.permute.xlu0 %1956
        %1958 = vrot.lane.b32.xlu0 %v1863, 24
        %v1959 = vpop.permute.xlu0 %1958
        %vm1992 = vcmask 257216
        %1993 = vst.msk [vmem:[#allocation3] sm:$0xf] %vm1992, %v1897
        %1994 = vst.msk [vmem:[#allocation3 + $0x4] sm:$0xf] %vm1992, %v1899
        %1995 = vst.msk [vmem:[#allocation3 + $0x8] sm:$0xf] %vm1992, %v1901
        %1996 = vst.msk [vmem:[#allocation3 + $0xc] sm:$0xf] %vm1992, %v1903
        %1997 = vst.msk [vmem:[#allocation3 + $0x10] sm:$0xf] %vm1992, %v1905
        %1998 = vst.msk [vmem:[#allocation3 + $0x14] sm:$0xf] %vm1992, %v1907
        %1999 = vst.msk [vmem:[#allocation3 + $0x18] sm:$0xf] %vm1992, %v1909
        %2000 = vst.msk [vmem:[#allocation3 + $0x1c] sm:$0xf] %vm1992, %v1911
        %2001 = vst.msk [vmem:[#allocation3 + $0x20] sm:$0xf] %vm1992, %v1913
        %2002 = vst.msk [vmem:[#allocation3 + $0x24] sm:$0xf] %vm1992, %v1915
        %2003 = vst.msk [vmem:[#allocation3 + $0x28] sm:$0xf] %vm1992, %v1917
        %2004 = vst.msk [vmem:[#allocation3 + $0x2c] sm:$0xf] %vm1992, %v1919
        %2005 = vst.msk [vmem:[#allocation3 + $0x30] sm:$0xf] %vm1992, %v1921
        %2006 = vst.msk [vmem:[#allocation3 + $0x34] sm:$0xf] %vm1992, %v1923
        %2007 = vst.msk [vmem:[#allocation3 + $0x38] sm:$0xf] %vm1992, %v1925
        %2008 = vst.msk [vmem:[#allocation3 + $0x3c] sm:$0xf] %vm1992, %v1927
        %2009 = vst.msk [vmem:[#allocation3 + $0x40] sm:$0xf] %vm1992, %v1929
        %2010 = vst.msk [vmem:[#allocation3 + $0x44] sm:$0xf] %vm1992, %v1931
        %2011 = vst.msk [vmem:[#allocation3 + $0x48] sm:$0xf] %vm1992, %v1933
        %2012 = vst.msk [vmem:[#allocation3 + $0x4c] sm:$0xf] %vm1992, %v1935
        %2013 = vst.msk [vmem:[#allocation3 + $0x50] sm:$0xf] %vm1992, %v1937
        %2014 = vst.msk [vmem:[#allocation3 + $0x54] sm:$0xf] %vm1992, %v1939
        %2015 = vst.msk [vmem:[#allocation3 + $0x58] sm:$0xf] %vm1992, %v1941
        %2016 = vst.msk [vmem:[#allocation3 + $0x5c] sm:$0xf] %vm1992, %v1943
        %2017 = vst.msk [vmem:[#allocation3 + $0x60] sm:$0xf] %vm1992, %v1945
        %2018 = vst.msk [vmem:[#allocation3 + $0x64] sm:$0xf] %vm1992, %v1947
        %2019 = vst.msk [vmem:[#allocation3 + $0x68] sm:$0xf] %vm1992, %v1949
        %2020 = vst.msk [vmem:[#allocation3 + $0x6c] sm:$0xf] %vm1992, %v1951
        %2021 = vst.msk [vmem:[#allocation3 + $0x70] sm:$0xf] %vm1992, %v1953
        %2022 = vst.msk [vmem:[#allocation3 + $0x74] sm:$0xf] %vm1992, %v1955
        %2023 = vst.msk [vmem:[#allocation3 + $0x78] sm:$0xf] %vm1992, %v1957
        %2024 = vst.msk [vmem:[#allocation3 + $0x7c] sm:$0xf] %vm1992, %v1959
        %v2025 = vld [vmem:[#allocation2 + $0x18] sm:$0xff]
        %v2026 = vld [vmem:[#allocation2 + $0x20] sm:$0xff]
        %v2027 = vld [vmem:[#allocation2 + $0x28] sm:$0xff]
        %v2028 = vld [vmem:[#allocation2 + $0x30] sm:$0xff]
        %v2029 = vld [vmem:[#allocation2 + $0x38] sm:$0xff]
        %v2030 = vld [vmem:[#allocation2 + $0x40] sm:$0xff]
        %v2031 = vld [vmem:[#allocation2 + $0x48] sm:$0xff]
        %v2032 = vld [vmem:[#allocation2 + $0x50] sm:$0xff]
        %v2033 = vld [vmem:[#allocation2 + $0x58] sm:$0xff]
        %v2034 = vld [vmem:[#allocation2 + $0x60] sm:$0xff]
        %v2035 = vld [vmem:[#allocation2 + $0x68] sm:$0xff]
        %v2036 = vld [vmem:[#allocation2 + $0x70] sm:$0xff]
        %v2037 = vld [vmem:[#allocation2 + $0x78] sm:$0xff]
        %v2038 = vld [vmem:[#allocation2 + $0x80] sm:$0xff]
        %v2039 = vld [vmem:[#allocation2 + $0x88] sm:$0xff]
        %v2040 = vld [vmem:[#allocation2 + $0x90] sm:$0xff]
        %v2041 = vld [vmem:[#allocation2 + $0x98] sm:$0xff]
        %v2042 = vld [vmem:[#allocation2 + $0xa0] sm:$0xff]
        %v2043 = vld [vmem:[#allocation2 + $0xa8] sm:$0xff]
        %v2044 = vld [vmem:[#allocation2 + $0xb0] sm:$0xff]
        %v2045 = vld [vmem:[#allocation2 + $0xb8] sm:$0xff]
        %v2046 = vld [vmem:[#allocation2 + $0xc0] sm:$0xff]
        %v2047 = vld [vmem:[#allocation2 + $0xc8] sm:$0xff]
        %v2048 = vld [vmem:[#allocation2 + $0xd0] sm:$0xff]
        %v2049 = vld [vmem:[#allocation2 + $0xd8] sm:$0xff]
        %v2050 = vld [vmem:[#allocation2 + $0xe0] sm:$0xff]
        %v2051 = vld [vmem:[#allocation2 + $0xe8] sm:$0xff]
        %v2052 = vld [vmem:[#allocation2 + $0xf0] sm:$0xff]
        %v2053 = vld [vmem:[#allocation2 + $0xf8] sm:$0xff]
        %v2054 = vld [vmem:[#allocation2 + $0x100] sm:$0xff]
        %v2055 = vld [vmem:[#allocation2 + $0x108] sm:$0xff]
        %v2056 = vld [vmem:[#allocation2 + $0x110] sm:$0xff]
        %v2057 = vpack.c.bf16 %v2025, %v2025
        %v2058 = vpack.c.bf16 %v2026, %v2026
        %v2059 = vpack.c.bf16 %v2027, %v2027
        %v2060 = vpack.c.bf16 %v2028, %v2028
        %v2061 = vpack.c.bf16 %v2029, %v2029
        %v2062 = vpack.c.bf16 %v2030, %v2030
        %v2063 = vpack.c.bf16 %v2031, %v2031
        %v2064 = vpack.c.bf16 %v2032, %v2032
        %v2065 = vpack.c.bf16 %v2033, %v2033
        %v2066 = vpack.c.bf16 %v2034, %v2034
        %v2067 = vpack.c.bf16 %v2035, %v2035
        %v2068 = vpack.c.bf16 %v2036, %v2036
        %v2069 = vpack.c.bf16 %v2037, %v2037
        %v2070 = vpack.c.bf16 %v2038, %v2038
        %v2071 = vpack.c.bf16 %v2039, %v2039
        %v2072 = vpack.c.bf16 %v2040, %v2040
        %v2073 = vpack.c.bf16 %v2041, %v2041
        %v2074 = vpack.c.bf16 %v2042, %v2042
        %v2075 = vpack.c.bf16 %v2043, %v2043
        %v2076 = vpack.c.bf16 %v2044, %v2044
        %v2077 = vpack.c.bf16 %v2045, %v2045
        %v2078 = vpack.c.bf16 %v2046, %v2046
        %v2079 = vpack.c.bf16 %v2047, %v2047
        %v2080 = vpack.c.bf16 %v2048, %v2048
        %v2081 = vpack.c.bf16 %v2049, %v2049
        %v2082 = vpack.c.bf16 %v2050, %v2050
        %v2083 = vpack.c.bf16 %v2051, %v2051
        %v2084 = vpack.c.bf16 %v2052, %v2052
        %v2085 = vpack.c.bf16 %v2053, %v2053
        %v2086 = vpack.c.bf16 %v2054, %v2054
        %v2087 = vpack.c.bf16 %v2055, %v2055
        %v2088 = vpack.c.bf16 %v2056, %v2056
        %2121 = vrot.lane.b32.xlu0 %v2057, 32
        %v2122 = vpop.permute.xlu0 %2121
        %2123 = vrot.lane.b32.xlu0 %v2058, 32
        %v2124 = vpop.permute.xlu0 %2123
        %2125 = vrot.lane.b32.xlu0 %v2059, 32
        %v2126 = vpop.permute.xlu0 %2125
        %2127 = vrot.lane.b32.xlu0 %v2060, 32
        %v2128 = vpop.permute.xlu0 %2127
        %2129 = vrot.lane.b32.xlu0 %v2061, 32
        %v2130 = vpop.permute.xlu0 %2129
        %2131 = vrot.lane.b32.xlu0 %v2062, 32
        %v2132 = vpop.permute.xlu0 %2131
        %2133 = vrot.lane.b32.xlu0 %v2063, 32
        %v2134 = vpop.permute.xlu0 %2133
        %2135 = vrot.lane.b32.xlu0 %v2064, 32
        %v2136 = vpop.permute.xlu0 %2135
        %2137 = vrot.lane.b32.xlu0 %v2065, 32
        %v2138 = vpop.permute.xlu0 %2137
        %2139 = vrot.lane.b32.xlu0 %v2066, 32
        %v2140 = vpop.permute.xlu0 %2139
        %2141 = vrot.lane.b32.xlu0 %v2067, 32
        %v2142 = vpop.permute.xlu0 %2141
        %2143 = vrot.lane.b32.xlu0 %v2068, 32
        %v2144 = vpop.permute.xlu0 %2143
        %2145 = vrot.lane.b32.xlu0 %v2069, 32
        %v2146 = vpop.permute.xlu0 %2145
        %2147 = vrot.lane.b32.xlu0 %v2070, 32
        %v2148 = vpop.permute.xlu0 %2147
        %2149 = vrot.lane.b32.xlu0 %v2071, 32
        %v2150 = vpop.permute.xlu0 %2149
        %2151 = vrot.lane.b32.xlu0 %v2072, 32
        %v2152 = vpop.permute.xlu0 %2151
        %2153 = vrot.lane.b32.xlu0 %v2073, 32
        %v2154 = vpop.permute.xlu0 %2153
        %2155 = vrot.lane.b32.xlu0 %v2074, 32
        %v2156 = vpop.permute.xlu0 %2155
        %2157 = vrot.lane.b32.xlu0 %v2075, 32
        %v2158 = vpop.permute.xlu0 %2157
        %2159 = vrot.lane.b32.xlu0 %v2076, 32
        %v2160 = vpop.permute.xlu0 %2159
        %2161 = vrot.lane.b32.xlu0 %v2077, 32
        %v2162 = vpop.permute.xlu0 %2161
        %2163 = vrot.lane.b32.xlu0 %v2078, 32
        %v2164 = vpop.permute.xlu0 %2163
        %2165 = vrot.lane.b32.xlu0 %v2079, 32
        %v2166 = vpop.permute.xlu0 %2165
        %2167 = vrot.lane.b32.xlu0 %v2080, 32
        %v2168 = vpop.permute.xlu0 %2167
        %2169 = vrot.lane.b32.xlu0 %v2081, 32
        %v2170 = vpop.permute.xlu0 %2169
        %2171 = vrot.lane.b32.xlu0 %v2082, 32
        %v2172 = vpop.permute.xlu0 %2171
        %2173 = vrot.lane.b32.xlu0 %v2083, 32
        %v2174 = vpop.permute.xlu0 %2173
        %2175 = vrot.lane.b32.xlu0 %v2084, 32
        %v2176 = vpop.permute.xlu0 %2175
        %2177 = vrot.lane.b32.xlu0 %v2085, 32
        %v2178 = vpop.permute.xlu0 %2177
        %2179 = vrot.lane.b32.xlu0 %v2086, 32
        %v2180 = vpop.permute.xlu0 %2179
        %2181 = vrot.lane.b32.xlu0 %v2087, 32
        %v2182 = vpop.permute.xlu0 %2181
        %2183 = vrot.lane.b32.xlu0 %v2088, 32
        %v2184 = vpop.permute.xlu0 %2183
        %vm2217 = vcmask 322816
        %2218 = vst.msk [vmem:[#allocation3] sm:$0xf] %vm2217, %v2122
        %2219 = vst.msk [vmem:[#allocation3 + $0x4] sm:$0xf] %vm2217, %v2124
        %2220 = vst.msk [vmem:[#allocation3 + $0x8] sm:$0xf] %vm2217, %v2126
        %2221 = vst.msk [vmem:[#allocation3 + $0xc] sm:$0xf] %vm2217, %v2128
        %2222 = vst.msk [vmem:[#allocation3 + $0x10] sm:$0xf] %vm2217, %v2130
        %2223 = vst.msk [vmem:[#allocation3 + $0x14] sm:$0xf] %vm2217, %v2132
        %2224 = vst.msk [vmem:[#allocation3 + $0x18] sm:$0xf] %vm2217, %v2134
        %2225 = vst.msk [vmem:[#allocation3 + $0x1c] sm:$0xf] %vm2217, %v2136
        %2226 = vst.msk [vmem:[#allocation3 + $0x20] sm:$0xf] %vm2217, %v2138
        %2227 = vst.msk [vmem:[#allocation3 + $0x24] sm:$0xf] %vm2217, %v2140
        %2228 = vst.msk [vmem:[#allocation3 + $0x28] sm:$0xf] %vm2217, %v2142
        %2229 = vst.msk [vmem:[#allocation3 + $0x2c] sm:$0xf] %vm2217, %v2144
        %2230 = vst.msk [vmem:[#allocation3 + $0x30] sm:$0xf] %vm2217, %v2146
        %2231 = vst.msk [vmem:[#allocation3 + $0x34] sm:$0xf] %vm2217, %v2148
        %2232 = vst.msk [vmem:[#allocation3 + $0x38] sm:$0xf] %vm2217, %v2150
        %2233 = vst.msk [vmem:[#allocation3 + $0x3c] sm:$0xf] %vm2217, %v2152
        %2234 = vst.msk [vmem:[#allocation3 + $0x40] sm:$0xf] %vm2217, %v2154
        %2235 = vst.msk [vmem:[#allocation3 + $0x44] sm:$0xf] %vm2217, %v2156
        %2236 = vst.msk [vmem:[#allocation3 + $0x48] sm:$0xf] %vm2217, %v2158
        %2237 = vst.msk [vmem:[#allocation3 + $0x4c] sm:$0xf] %vm2217, %v2160
        %2238 = vst.msk [vmem:[#allocation3 + $0x50] sm:$0xf] %vm2217, %v2162
        %2239 = vst.msk [vmem:[#allocation3 + $0x54] sm:$0xf] %vm2217, %v2164
        %2240 = vst.msk [vmem:[#allocation3 + $0x58] sm:$0xf] %vm2217, %v2166
        %2241 = vst.msk [vmem:[#allocation3 + $0x5c] sm:$0xf] %vm2217, %v2168
        %2242 = vst.msk [vmem:[#allocation3 + $0x60] sm:$0xf] %vm2217, %v2170
        %2243 = vst.msk [vmem:[#allocation3 + $0x64] sm:$0xf] %vm2217, %v2172
        %2244 = vst.msk [vmem:[#allocation3 + $0x68] sm:$0xf] %vm2217, %v2174
        %2245 = vst.msk [vmem:[#allocation3 + $0x6c] sm:$0xf] %vm2217, %v2176
        %2246 = vst.msk [vmem:[#allocation3 + $0x70] sm:$0xf] %vm2217, %v2178
        %2247 = vst.msk [vmem:[#allocation3 + $0x74] sm:$0xf] %vm2217, %v2180
        %2248 = vst.msk [vmem:[#allocation3 + $0x78] sm:$0xf] %vm2217, %v2182
        %2249 = vst.msk [vmem:[#allocation3 + $0x7c] sm:$0xf] %vm2217, %v2184
        %v2250 = vld [vmem:[#allocation2 + $0x19] sm:$0xff]
        %v2251 = vld [vmem:[#allocation2 + $0x21] sm:$0xff]
        %v2252 = vld [vmem:[#allocation2 + $0x29] sm:$0xff]
        %v2253 = vld [vmem:[#allocation2 + $0x31] sm:$0xff]
        %v2254 = vld [vmem:[#allocation2 + $0x39] sm:$0xff]
        %v2255 = vld [vmem:[#allocation2 + $0x41] sm:$0xff]
        %v2256 = vld [vmem:[#allocation2 + $0x49] sm:$0xff]
        %v2257 = vld [vmem:[#allocation2 + $0x51] sm:$0xff]
        %v2258 = vld [vmem:[#allocation2 + $0x59] sm:$0xff]
        %v2259 = vld [vmem:[#allocation2 + $0x61] sm:$0xff]
        %v2260 = vld [vmem:[#allocation2 + $0x69] sm:$0xff]
        %v2261 = vld [vmem:[#allocation2 + $0x71] sm:$0xff]
        %v2262 = vld [vmem:[#allocation2 + $0x79] sm:$0xff]
        %v2263 = vld [vmem:[#allocation2 + $0x81] sm:$0xff]
        %v2264 = vld [vmem:[#allocation2 + $0x89] sm:$0xff]
        %v2265 = vld [vmem:[#allocation2 + $0x91] sm:$0xff]
        %v2266 = vld [vmem:[#allocation2 + $0x99] sm:$0xff]
        %v2267 = vld [vmem:[#allocation2 + $0xa1] sm:$0xff]
        %v2268 = vld [vmem:[#allocation2 + $0xa9] sm:$0xff]
        %v2269 = vld [vmem:[#allocation2 + $0xb1] sm:$0xff]
        %v2270 = vld [vmem:[#allocation2 + $0xb9] sm:$0xff]
        %v2271 = vld [vmem:[#allocation2 + $0xc1] sm:$0xff]
        %v2272 = vld [vmem:[#allocation2 + $0xc9] sm:$0xff]
        %v2273 = vld [vmem:[#allocation2 + $0xd1] sm:$0xff]
        %v2274 = vld [vmem:[#allocation2 + $0xd9] sm:$0xff]
        %v2275 = vld [vmem:[#allocation2 + $0xe1] sm:$0xff]
        %v2276 = vld [vmem:[#allocation2 + $0xe9] sm:$0xff]
        %v2277 = vld [vmem:[#allocation2 + $0xf1] sm:$0xff]
        %v2278 = vld [vmem:[#allocation2 + $0xf9] sm:$0xff]
        %v2279 = vld [vmem:[#allocation2 + $0x101] sm:$0xff]
        %v2280 = vld [vmem:[#allocation2 + $0x109] sm:$0xff]
        %v2281 = vld [vmem:[#allocation2 + $0x111] sm:$0xff]
        %v2282 = vpack.c.bf16 %v2250, %v2250
        %v2283 = vpack.c.bf16 %v2251, %v2251
        %v2284 = vpack.c.bf16 %v2252, %v2252
        %v2285 = vpack.c.bf16 %v2253, %v2253
        %v2286 = vpack.c.bf16 %v2254, %v2254
        %v2287 = vpack.c.bf16 %v2255, %v2255
        %v2288 = vpack.c.bf16 %v2256, %v2256
        %v2289 = vpack.c.bf16 %v2257, %v2257
        %v2290 = vpack.c.bf16 %v2258, %v2258
        %v2291 = vpack.c.bf16 %v2259, %v2259
        %v2292 = vpack.c.bf16 %v2260, %v2260
        %v2293 = vpack.c.bf16 %v2261, %v2261
        %v2294 = vpack.c.bf16 %v2262, %v2262
        %v2295 = vpack.c.bf16 %v2263, %v2263
        %v2296 = vpack.c.bf16 %v2264, %v2264
        %v2297 = vpack.c.bf16 %v2265, %v2265
        %v2298 = vpack.c.bf16 %v2266, %v2266
        %v2299 = vpack.c.bf16 %v2267, %v2267
        %v2300 = vpack.c.bf16 %v2268, %v2268
        %v2301 = vpack.c.bf16 %v2269, %v2269
        %v2302 = vpack.c.bf16 %v2270, %v2270
        %v2303 = vpack.c.bf16 %v2271, %v2271
        %v2304 = vpack.c.bf16 %v2272, %v2272
        %v2305 = vpack.c.bf16 %v2273, %v2273
        %v2306 = vpack.c.bf16 %v2274, %v2274
        %v2307 = vpack.c.bf16 %v2275, %v2275
        %v2308 = vpack.c.bf16 %v2276, %v2276
        %v2309 = vpack.c.bf16 %v2277, %v2277
        %v2310 = vpack.c.bf16 %v2278, %v2278
        %v2311 = vpack.c.bf16 %v2279, %v2279
        %v2312 = vpack.c.bf16 %v2280, %v2280
        %v2313 = vpack.c.bf16 %v2281, %v2281
        %v2314 = vsel %vm1543, %v2282, 0
        %v2315 = vsel %vm1544, %v2283, 0
        %v2316 = vsel %vm1545, %v2284, 0
        %v2317 = vsel %vm1546, %v2285, 0
        %v2318 = vsel %vm1547, %v2286, 0
        %v2319 = vsel %vm1548, %v2287, 0
        %v2320 = vsel %vm1549, %v2288, 0
        %v2321 = vsel %vm1550, %v2289, 0
        %v2322 = vsel %vm1551, %v2290, 0
        %v2323 = vsel %vm1552, %v2291, 0
        %v2324 = vsel %vm1553, %v2292, 0
        %v2325 = vsel %vm1554, %v2293, 0
        %v2326 = vsel %vm1555, %v2294, 0
        %v2327 = vsel %vm1556, %v2295, 0
        %v2328 = vsel %vm1557, %v2296, 0
        %v2329 = vsel %vm1558, %v2297, 0
        %v2330 = vsel %vm1559, %v2298, 0
        %v2331 = vsel %vm1560, %v2299, 0
        %v2332 = vsel %vm1561, %v2300, 0
        %v2333 = vsel %vm1562, %v2301, 0
        %v2334 = vsel %vm1563, %v2302, 0
        %v2335 = vsel %vm1564, %v2303, 0
        %v2336 = vsel %vm1565, %v2304, 0
        %v2337 = vsel %vm1566, %v2305, 0
        %v2338 = vsel %vm1567, %v2306, 0
        %v2339 = vsel %vm1568, %v2307, 0
        %v2340 = vsel %vm1569, %v2308, 0
        %v2341 = vsel %vm1570, %v2309, 0
        %v2342 = vsel %vm1571, %v2310, 0
        %v2343 = vsel %vm1572, %v2311, 0
        %v2344 = vsel %vm1573, %v2312, 0
        %v2345 = vsel %vm1574, %v2313, 0
        %2378 = vrot.lane.b32.xlu0 %v2314, 40
        %v2379 = vpop.permute.xlu0 %2378
        %2380 = vrot.lane.b32.xlu0 %v2315, 40
        %v2381 = vpop.permute.xlu0 %2380
        %2382 = vrot.lane.b32.xlu0 %v2316, 40
        %v2383 = vpop.permute.xlu0 %2382
        %2384 = vrot.lane.b32.xlu0 %v2317, 40
        %v2385 = vpop.permute.xlu0 %2384
        %2386 = vrot.lane.b32.xlu0 %v2318, 40
        %v2387 = vpop.permute.xlu0 %2386
        %2388 = vrot.lane.b32.xlu0 %v2319, 40
        %v2389 = vpop.permute.xlu0 %2388
        %2390 = vrot.lane.b32.xlu0 %v2320, 40
        %v2391 = vpop.permute.xlu0 %2390
        %2392 = vrot.lane.b32.xlu0 %v2321, 40
        %v2393 = vpop.permute.xlu0 %2392
        %2394 = vrot.lane.b32.xlu0 %v2322, 40
        %v2395 = vpop.permute.xlu0 %2394
        %2396 = vrot.lane.b32.xlu0 %v2323, 40
        %v2397 = vpop.permute.xlu0 %2396
        %2398 = vrot.lane.b32.xlu0 %v2324, 40
        %v2399 = vpop.permute.xlu0 %2398
        %2400 = vrot.lane.b32.xlu0 %v2325, 40
        %v2401 = vpop.permute.xlu0 %2400
        %2402 = vrot.lane.b32.xlu0 %v2326, 40
        %v2403 = vpop.permute.xlu0 %2402
        %2404 = vrot.lane.b32.xlu0 %v2327, 40
        %v2405 = vpop.permute.xlu0 %2404
        %2406 = vrot.lane.b32.xlu0 %v2328, 40
        %v2407 = vpop.permute.xlu0 %2406
        %2408 = vrot.lane.b32.xlu0 %v2329, 40
        %v2409 = vpop.permute.xlu0 %2408
        %2410 = vrot.lane.b32.xlu0 %v2330, 40
        %v2411 = vpop.permute.xlu0 %2410
        %2412 = vrot.lane.b32.xlu0 %v2331, 40
        %v2413 = vpop.permute.xlu0 %2412
        %2414 = vrot.lane.b32.xlu0 %v2332, 40
        %v2415 = vpop.permute.xlu0 %2414
        %2416 = vrot.lane.b32.xlu0 %v2333, 40
        %v2417 = vpop.permute.xlu0 %2416
        %2418 = vrot.lane.b32.xlu0 %v2334, 40
        %v2419 = vpop.permute.xlu0 %2418
        %2420 = vrot.lane.b32.xlu0 %v2335, 40
        %v2421 = vpop.permute.xlu0 %2420
        %2422 = vrot.lane.b32.xlu0 %v2336, 40
        %v2423 = vpop.permute.xlu0 %2422
        %2424 = vrot.lane.b32.xlu0 %v2337, 40
        %v2425 = vpop.permute.xlu0 %2424
        %2426 = vrot.lane.b32.xlu0 %v2338, 40
        %v2427 = vpop.permute.xlu0 %2426
        %2428 = vrot.lane.b32.xlu0 %v2339, 40
        %v2429 = vpop.permute.xlu0 %2428
        %2430 = vrot.lane.b32.xlu0 %v2340, 40
        %v2431 = vpop.permute.xlu0 %2430
        %2432 = vrot.lane.b32.xlu0 %v2341, 40
        %v2433 = vpop.permute.xlu0 %2432
        %2434 = vrot.lane.b32.xlu0 %v2342, 40
        %v2435 = vpop.permute.xlu0 %2434
        %2436 = vrot.lane.b32.xlu0 %v2343, 40
        %v2437 = vpop.permute.xlu0 %2436
        %2438 = vrot.lane.b32.xlu0 %v2344, 40
        %v2439 = vpop.permute.xlu0 %2438
        %2440 = vrot.lane.b32.xlu0 %v2345, 40
        %v2441 = vpop.permute.xlu0 %2440
        %vm2474 = vcmask 388416
        %2475 = vst.msk [vmem:[#allocation3] sm:$0xf] %vm2474, %v2379
        %2476 = vst.msk [vmem:[#allocation3 + $0x4] sm:$0xf] %vm2474, %v2381
        %2477 = vst.msk [vmem:[#allocation3 + $0x8] sm:$0xf] %vm2474, %v2383
        %2478 = vst.msk [vmem:[#allocation3 + $0xc] sm:$0xf] %vm2474, %v2385
        %2479 = vst.msk [vmem:[#allocation3 + $0x10] sm:$0xf] %vm2474, %v2387
        %2480 = vst.msk [vmem:[#allocation3 + $0x14] sm:$0xf] %vm2474, %v2389
        %2481 = vst.msk [vmem:[#allocation3 + $0x18] sm:$0xf] %vm2474, %v2391
        %2482 = vst.msk [vmem:[#allocation3 + $0x1c] sm:$0xf] %vm2474, %v2393
        %2483 = vst.msk [vmem:[#allocation3 + $0x20] sm:$0xf] %vm2474, %v2395
        %2484 = vst.msk [vmem:[#allocation3 + $0x24] sm:$0xf] %vm2474, %v2397
        %2485 = vst.msk [vmem:[#allocation3 + $0x28] sm:$0xf] %vm2474, %v2399
        %2486 = vst.msk [vmem:[#allocation3 + $0x2c] sm:$0xf] %vm2474, %v2401
        %2487 = vst.msk [vmem:[#allocation3 + $0x30] sm:$0xf] %vm2474, %v2403
        %2488 = vst.msk [vmem:[#allocation3 + $0x34] sm:$0xf] %vm2474, %v2405
        %2489 = vst.msk [vmem:[#allocation3 + $0x38] sm:$0xf] %vm2474, %v2407
        %2490 = vst.msk [vmem:[#allocation3 + $0x3c] sm:$0xf] %vm2474, %v2409
        %2491 = vst.msk [vmem:[#allocation3 + $0x40] sm:$0xf] %vm2474, %v2411
        %2492 = vst.msk [vmem:[#allocation3 + $0x44] sm:$0xf] %vm2474, %v2413
        %2493 = vst.msk [vmem:[#allocation3 + $0x48] sm:$0xf] %vm2474, %v2415
        %2494 = vst.msk [vmem:[#allocation3 + $0x4c] sm:$0xf] %vm2474, %v2417
        %2495 = vst.msk [vmem:[#allocation3 + $0x50] sm:$0xf] %vm2474, %v2419
        %2496 = vst.msk [vmem:[#allocation3 + $0x54] sm:$0xf] %vm2474, %v2421
        %2497 = vst.msk [vmem:[#allocation3 + $0x58] sm:$0xf] %vm2474, %v2423
        %2498 = vst.msk [vmem:[#allocation3 + $0x5c] sm:$0xf] %vm2474, %v2425
        %2499 = vst.msk [vmem:[#allocation3 + $0x60] sm:$0xf] %vm2474, %v2427
        %2500 = vst.msk [vmem:[#allocation3 + $0x64] sm:$0xf] %vm2474, %v2429
        %2501 = vst.msk [vmem:[#allocation3 + $0x68] sm:$0xf] %vm2474, %v2431
        %2502 = vst.msk [vmem:[#allocation3 + $0x6c] sm:$0xf] %vm2474, %v2433
        %2503 = vst.msk [vmem:[#allocation3 + $0x70] sm:$0xf] %vm2474, %v2435
        %2504 = vst.msk [vmem:[#allocation3 + $0x74] sm:$0xf] %vm2474, %v2437
        %2505 = vst.msk [vmem:[#allocation3 + $0x78] sm:$0xf] %vm2474, %v2439
        %2506 = vst.msk [vmem:[#allocation3 + $0x7c] sm:$0xf] %vm2474, %v2441
        %v2507 = vld [vmem:[#allocation2 + $0x27] sm:$0xff]
        %v2508 = vld [vmem:[#allocation2 + $0x2f] sm:$0xff]
        %v2509 = vld [vmem:[#allocation2 + $0x37] sm:$0xff]
        %v2510 = vld [vmem:[#allocation2 + $0x3f] sm:$0xff]
        %v2511 = vld [vmem:[#allocation2 + $0x47] sm:$0xff]
        %v2512 = vld [vmem:[#allocation2 + $0x4f] sm:$0xff]
        %v2513 = vld [vmem:[#allocation2 + $0x57] sm:$0xff]
        %v2514 = vld [vmem:[#allocation2 + $0x5f] sm:$0xff]
        %v2515 = vld [vmem:[#allocation2 + $0x67] sm:$0xff]
        %v2516 = vld [vmem:[#allocation2 + $0x6f] sm:$0xff]
        %v2517 = vld [vmem:[#allocation2 + $0x77] sm:$0xff]
        %v2518 = vld [vmem:[#allocation2 + $0x7f] sm:$0xff]
        %v2519 = vld [vmem:[#allocation2 + $0x87] sm:$0xff]
        %v2520 = vld [vmem:[#allocation2 + $0x8f] sm:$0xff]
        %v2521 = vld [vmem:[#allocation2 + $0x97] sm:$0xff]
        %v2522 = vld [vmem:[#allocation2 + $0x9f] sm:$0xff]
        %v2523 = vld [vmem:[#allocation2 + $0xa7] sm:$0xff]
        %v2524 = vld [vmem:[#allocation2 + $0xaf] sm:$0xff]
        %v2525 = vld [vmem:[#allocation2 + $0xb7] sm:$0xff]
        %v2526 = vld [vmem:[#allocation2 + $0xbf] sm:$0xff]
        %v2527 = vld [vmem:[#allocation2 + $0xc7] sm:$0xff]
        %v2528 = vld [vmem:[#allocation2 + $0xcf] sm:$0xff]
        %v2529 = vld [vmem:[#allocation2 + $0xd7] sm:$0xff]
        %v2530 = vld [vmem:[#allocation2 + $0xdf] sm:$0xff]
        %v2531 = vld [vmem:[#allocation2 + $0xe7] sm:$0xff]
        %v2532 = vld [vmem:[#allocation2 + $0xef] sm:$0xff]
        %v2533 = vld [vmem:[#allocation2 + $0xf7] sm:$0xff]
        %v2534 = vld [vmem:[#allocation2 + $0xff] sm:$0xff]
        %v2535 = vld [vmem:[#allocation2 + $0x107] sm:$0xff]
        %v2536 = vld [vmem:[#allocation2 + $0x10f] sm:$0xff]
        %v2537 = vld [vmem:[#allocation2 + $0x117] sm:$0xff]
        %v2538 = vld [vmem:[#allocation2 + $0x11f] sm:$0xff]
        %v2539 = vpack.c.bf16 %v2507, %v2507
        %v2540 = vpack.c.bf16 %v2508, %v2508
        %v2541 = vpack.c.bf16 %v2509, %v2509
        %v2542 = vpack.c.bf16 %v2510, %v2510
        %v2543 = vpack.c.bf16 %v2511, %v2511
        %v2544 = vpack.c.bf16 %v2512, %v2512
        %v2545 = vpack.c.bf16 %v2513, %v2513
        %v2546 = vpack.c.bf16 %v2514, %v2514
        %v2547 = vpack.c.bf16 %v2515, %v2515
        %v2548 = vpack.c.bf16 %v2516, %v2516
        %v2549 = vpack.c.bf16 %v2517, %v2517
        %v2550 = vpack.c.bf16 %v2518, %v2518
        %v2551 = vpack.c.bf16 %v2519, %v2519
        %v2552 = vpack.c.bf16 %v2520, %v2520
        %v2553 = vpack.c.bf16 %v2521, %v2521
        %v2554 = vpack.c.bf16 %v2522, %v2522
        %v2555 = vpack.c.bf16 %v2523, %v2523
        %v2556 = vpack.c.bf16 %v2524, %v2524
        %v2557 = vpack.c.bf16 %v2525, %v2525
        %v2558 = vpack.c.bf16 %v2526, %v2526
        %v2559 = vpack.c.bf16 %v2527, %v2527
        %v2560 = vpack.c.bf16 %v2528, %v2528
        %v2561 = vpack.c.bf16 %v2529, %v2529
        %v2562 = vpack.c.bf16 %v2530, %v2530
        %v2563 = vpack.c.bf16 %v2531, %v2531
        %v2564 = vpack.c.bf16 %v2532, %v2532
        %v2565 = vpack.c.bf16 %v2533, %v2533
        %v2566 = vpack.c.bf16 %v2534, %v2534
        %v2567 = vpack.c.bf16 %v2535, %v2535
        %v2568 = vpack.c.bf16 %v2536, %v2536
        %v2569 = vpack.c.bf16 %v2537, %v2537
        %v2570 = vpack.c.bf16 %v2538, %v2538
        %v2571 = vsel %vm1093, %v2539, 0
        %v2572 = vsel %vm1094, %v2540, 0
        %v2573 = vsel %vm1095, %v2541, 0
        %v2574 = vsel %vm1096, %v2542, 0
        %v2575 = vsel %vm1097, %v2543, 0
        %v2576 = vsel %vm1098, %v2544, 0
        %v2577 = vsel %vm1099, %v2545, 0
        %v2578 = vsel %vm1100, %v2546, 0
        %v2579 = vsel %vm1101, %v2547, 0
        %v2580 = vsel %vm1102, %v2548, 0
        %v2581 = vsel %vm1103, %v2549, 0
        %v2582 = vsel %vm1104, %v2550, 0
        %v2583 = vsel %vm1105, %v2551, 0
        %v2584 = vsel %vm1106, %v2552, 0
        %v2585 = vsel %vm1107, %v2553, 0
        %v2586 = vsel %vm1108, %v2554, 0
        %v2587 = vsel %vm1109, %v2555, 0
        %v2588 = vsel %vm1110, %v2556, 0
        %v2589 = vsel %vm1111, %v2557, 0
        %v2590 = vsel %vm1112, %v2558, 0
        %v2591 = vsel %vm1113, %v2559, 0
        %v2592 = vsel %vm1114, %v2560, 0
        %v2593 = vsel %vm1115, %v2561, 0
        %v2594 = vsel %vm1116, %v2562, 0
        %v2595 = vsel %vm1117, %v2563, 0
        %v2596 = vsel %vm1118, %v2564, 0
        %v2597 = vsel %vm1119, %v2565, 0
        %v2598 = vsel %vm1120, %v2566, 0
        %v2599 = vsel %vm1121, %v2567, 0
        %v2600 = vsel %vm1122, %v2568, 0
        %v2601 = vsel %vm1123, %v2569, 0
        %v2602 = vsel %vm1124, %v2570, 0
        %2635 = vrot.lane.b32.xlu0 %v2571, 48
        %v2636 = vpop.permute.xlu0 %2635
        %2637 = vrot.lane.b32.xlu0 %v2572, 48
        %v2638 = vpop.permute.xlu0 %2637
        %2639 = vrot.lane.b32.xlu0 %v2573, 48
        %v2640 = vpop.permute.xlu0 %2639
        %2641 = vrot.lane.b32.xlu0 %v2574, 48
        %v2642 = vpop.permute.xlu0 %2641
        %2643 = vrot.lane.b32.xlu0 %v2575, 48
        %v2644 = vpop.permute.xlu0 %2643
        %2645 = vrot.lane.b32.xlu0 %v2576, 48
        %v2646 = vpop.permute.xlu0 %2645
        %2647 = vrot.lane.b32.xlu0 %v2577, 48
        %v2648 = vpop.permute.xlu0 %2647
        %2649 = vrot.lane.b32.xlu0 %v2578, 48
        %v2650 = vpop.permute.xlu0 %2649
        %2651 = vrot.lane.b32.xlu0 %v2579, 48
        %v2652 = vpop.permute.xlu0 %2651
        %2653 = vrot.lane.b32.xlu0 %v2580, 48
        %v2654 = vpop.permute.xlu0 %2653
        %2655 = vrot.lane.b32.xlu0 %v2581, 48
        %v2656 = vpop.permute.xlu0 %2655
        %2657 = vrot.lane.b32.xlu0 %v2582, 48
        %v2658 = vpop.permute.xlu0 %2657
        %2659 = vrot.lane.b32.xlu0 %v2583, 48
        %v2660 = vpop.permute.xlu0 %2659
        %2661 = vrot.lane.b32.xlu0 %v2584, 48
        %v2662 = vpop.permute.xlu0 %2661
        %2663 = vrot.lane.b32.xlu0 %v2585, 48
        %v2664 = vpop.permute.xlu0 %2663
        %2665 = vrot.lane.b32.xlu0 %v2586, 48
        %v2666 = vpop.permute.xlu0 %2665
        %2667 = vrot.lane.b32.xlu0 %v2587, 48
        %v2668 = vpop.permute.xlu0 %2667
        %2669 = vrot.lane.b32.xlu0 %v2588, 48
        %v2670 = vpop.permute.xlu0 %2669
        %2671 = vrot.lane.b32.xlu0 %v2589, 48
        %v2672 = vpop.permute.xlu0 %2671
        %2673 = vrot.lane.b32.xlu0 %v2590, 48
        %v2674 = vpop.permute.xlu0 %2673
        %2675 = vrot.lane.b32.xlu0 %v2591, 48
        %v2676 = vpop.permute.xlu0 %2675
        %2677 = vrot.lane.b32.xlu0 %v2592, 48
        %v2678 = vpop.permute.xlu0 %2677
        %2679 = vrot.lane.b32.xlu0 %v2593, 48
        %v2680 = vpop.permute.xlu0 %2679
        %2681 = vrot.lane.b32.xlu0 %v2594, 48
        %v2682 = vpop.permute.xlu0 %2681
        %2683 = vrot.lane.b32.xlu0 %v2595, 48
        %v2684 = vpop.permute.xlu0 %2683
        %2685 = vrot.lane.b32.xlu0 %v2596, 48
        %v2686 = vpop.permute.xlu0 %2685
        %2687 = vrot.lane.b32.xlu0 %v2597, 48
        %v2688 = vpop.permute.xlu0 %2687
        %2689 = vrot.lane.b32.xlu0 %v2598, 48
        %v2690 = vpop.permute.xlu0 %2689
        %2691 = vrot.lane.b32.xlu0 %v2599, 48
        %v2692 = vpop.permute.xlu0 %2691
        %2693 = vrot.lane.b32.xlu0 %v2600, 48
        %v2694 = vpop.permute.xlu0 %2693
        %2695 = vrot.lane.b32.xlu0 %v2601, 48
        %v2696 = vpop.permute.xlu0 %2695
        %2697 = vrot.lane.b32.xlu0 %v2602, 48
        %v2698 = vpop.permute.xlu0 %2697
        %vm2731 = vcmask 454016
        %2732 = vst.msk [vmem:[#allocation3] sm:$0xf] %vm2731, %v2636
        %2733 = vst.msk [vmem:[#allocation3 + $0x4] sm:$0xf] %vm2731, %v2638
        %2734 = vst.msk [vmem:[#allocation3 + $0x8] sm:$0xf] %vm2731, %v2640
        %2735 = vst.msk [vmem:[#allocation3 + $0xc] sm:$0xf] %vm2731, %v2642
        %2736 = vst.msk [vmem:[#allocation3 + $0x10] sm:$0xf] %vm2731, %v2644
        %2737 = vst.msk [vmem:[#allocation3 + $0x14] sm:$0xf] %vm2731, %v2646
        %2738 = vst.msk [vmem:[#allocation3 + $0x18] sm:$0xf] %vm2731, %v2648
        %2739 = vst.msk [vmem:[#allocation3 + $0x1c] sm:$0xf] %vm2731, %v2650
        %2740 = vst.msk [vmem:[#allocation3 + $0x20] sm:$0xf] %vm2731, %v2652
        %2741 = vst.msk [vmem:[#allocation3 + $0x24] sm:$0xf] %vm2731, %v2654
        %2742 = vst.msk [vmem:[#allocation3 + $0x28] sm:$0xf] %vm2731, %v2656
        %2743 = vst.msk [vmem:[#allocation3 + $0x2c] sm:$0xf] %vm2731, %v2658
        %2744 = vst.msk [vmem:[#allocation3 + $0x30] sm:$0xf] %vm2731, %v2660
        %2745 = vst.msk [vmem:[#allocation3 + $0x34] sm:$0xf] %vm2731, %v2662
        %2746 = vst.msk [vmem:[#allocation3 + $0x38] sm:$0xf] %vm2731, %v2664
        %2747 = vst.msk [vmem:[#allocation3 + $0x3c] sm:$0xf] %vm2731, %v2666
        %2748 = vst.msk [vmem:[#allocation3 + $0x40] sm:$0xf] %vm2731, %v2668
        %2749 = vst.msk [vmem:[#allocation3 + $0x44] sm:$0xf] %vm2731, %v2670
        %2750 = vst.msk [vmem:[#allocation3 + $0x48] sm:$0xf] %vm2731, %v2672
        %2751 = vst.msk [vmem:[#allocation3 + $0x4c] sm:$0xf] %vm2731, %v2674
        %2752 = vst.msk [vmem:[#allocation3 + $0x50] sm:$0xf] %vm2731, %v2676
        %2753 = vst.msk [vmem:[#allocation3 + $0x54] sm:$0xf] %vm2731, %v2678
        %2754 = vst.msk [vmem:[#allocation3 + $0x58] sm:$0xf] %vm2731, %v2680
        %2755 = vst.msk [vmem:[#allocation3 + $0x5c] sm:$0xf] %vm2731, %v2682
        %2756 = vst.msk [vmem:[#allocation3 + $0x60] sm:$0xf] %vm2731, %v2684
        %2757 = vst.msk [vmem:[#allocation3 + $0x64] sm:$0xf] %vm2731, %v2686
        %2758 = vst.msk [vmem:[#allocation3 + $0x68] sm:$0xf] %vm2731, %v2688
        %2759 = vst.msk [vmem:[#allocation3 + $0x6c] sm:$0xf] %vm2731, %v2690
        %2760 = vst.msk [vmem:[#allocation3 + $0x70] sm:$0xf] %vm2731, %v2692
        %2761 = vst.msk [vmem:[#allocation3 + $0x74] sm:$0xf] %vm2731, %v2694
        %2762 = vst.msk [vmem:[#allocation3 + $0x78] sm:$0xf] %vm2731, %v2696
        %2763 = vst.msk [vmem:[#allocation3 + $0x7c] sm:$0xf] %vm2731, %v2698
        %v2764 = vld [vmem:[#allocation2 + $0x28] sm:$0xff]
        %v2765 = vld [vmem:[#allocation2 + $0x30] sm:$0xff]
        %v2766 = vld [vmem:[#allocation2 + $0x38] sm:$0xff]
        %v2767 = vld [vmem:[#allocation2 + $0x40] sm:$0xff]
        %v2768 = vld [vmem:[#allocation2 + $0x48] sm:$0xff]
        %v2769 = vld [vmem:[#allocation2 + $0x50] sm:$0xff]
        %v2770 = vld [vmem:[#allocation2 + $0x58] sm:$0xff]
        %v2771 = vld [vmem:[#allocation2 + $0x60] sm:$0xff]
        %v2772 = vld [vmem:[#allocation2 + $0x68] sm:$0xff]
        %v2773 = vld [vmem:[#allocation2 + $0x70] sm:$0xff]
        %v2774 = vld [vmem:[#allocation2 + $0x78] sm:$0xff]
        %v2775 = vld [vmem:[#allocation2 + $0x80] sm:$0xff]
        %v2776 = vld [vmem:[#allocation2 + $0x88] sm:$0xff]
        %v2777 = vld [vmem:[#allocation2 + $0x90] sm:$0xff]
        %v2778 = vld [vmem:[#allocation2 + $0x98] sm:$0xff]
        %v2779 = vld [vmem:[#allocation2 + $0xa0] sm:$0xff]
        %v2780 = vld [vmem:[#allocation2 + $0xa8] sm:$0xff]
        %v2781 = vld [vmem:[#allocation2 + $0xb0] sm:$0xff]
        %v2782 = vld [vmem:[#allocation2 + $0xb8] sm:$0xff]
        %v2783 = vld [vmem:[#allocation2 + $0xc0] sm:$0xff]
        %v2784 = vld [vmem:[#allocation2 + $0xc8] sm:$0xff]
        %v2785 = vld [vmem:[#allocation2 + $0xd0] sm:$0xff]
        %v2786 = vld [vmem:[#allocation2 + $0xd8] sm:$0xff]
        %v2787 = vld [vmem:[#allocation2 + $0xe0] sm:$0xff]
        %v2788 = vld [vmem:[#allocation2 + $0xe8] sm:$0xff]
        %v2789 = vld [vmem:[#allocation2 + $0xf0] sm:$0xff]
        %v2790 = vld [vmem:[#allocation2 + $0xf8] sm:$0xff]
        %v2791 = vld [vmem:[#allocation2 + $0x100] sm:$0xff]
        %v2792 = vld [vmem:[#allocation2 + $0x108] sm:$0xff]
        %v2793 = vld [vmem:[#allocation2 + $0x110] sm:$0xff]
        %v2794 = vld [vmem:[#allocation2 + $0x118] sm:$0xff]
        %v2795 = vld [vmem:[#allocation2 + $0x120] sm:$0xff]
        %v2796 = vpack.c.bf16 %v2764, %v2764
        %v2797 = vpack.c.bf16 %v2765, %v2765
        %v2798 = vpack.c.bf16 %v2766, %v2766
        %v2799 = vpack.c.bf16 %v2767, %v2767
        %v2800 = vpack.c.bf16 %v2768, %v2768
        %v2801 = vpack.c.bf16 %v2769, %v2769
        %v2802 = vpack.c.bf16 %v2770, %v2770
        %v2803 = vpack.c.bf16 %v2771, %v2771
        %v2804 = vpack.c.bf16 %v2772, %v2772
        %v2805 = vpack.c.bf16 %v2773, %v2773
        %v2806 = vpack.c.bf16 %v2774, %v2774
        %v2807 = vpack.c.bf16 %v2775, %v2775
        %v2808 = vpack.c.bf16 %v2776, %v2776
        %v2809 = vpack.c.bf16 %v2777, %v2777
        %v2810 = vpack.c.bf16 %v2778, %v2778
        %v2811 = vpack.c.bf16 %v2779, %v2779
        %v2812 = vpack.c.bf16 %v2780, %v2780
        %v2813 = vpack.c.bf16 %v2781, %v2781
        %v2814 = vpack.c.bf16 %v2782, %v2782
        %v2815 = vpack.c.bf16 %v2783, %v2783
        %v2816 = vpack.c.bf16 %v2784, %v2784
        %v2817 = vpack.c.bf16 %v2785, %v2785
        %v2818 = vpack.c.bf16 %v2786, %v2786
        %v2819 = vpack.c.bf16 %v2787, %v2787
        %v2820 = vpack.c.bf16 %v2788, %v2788
        %v2821 = vpack.c.bf16 %v2789, %v2789
        %v2822 = vpack.c.bf16 %v2790, %v2790
        %v2823 = vpack.c.bf16 %v2791, %v2791
        %v2824 = vpack.c.bf16 %v2792, %v2792
        %v2825 = vpack.c.bf16 %v2793, %v2793
        %v2826 = vpack.c.bf16 %v2794, %v2794
        %v2827 = vpack.c.bf16 %v2795, %v2795
        %2860 = vrot.lane.b32.xlu0 %v2796, 56
        %v2861 = vpop.permute.xlu0 %2860
        %2862 = vrot.lane.b32.xlu0 %v2797, 56
        %v2863 = vpop.permute.xlu0 %2862
        %2864 = vrot.lane.b32.xlu0 %v2798, 56
        %v2865 = vpop.permute.xlu0 %2864
        %2866 = vrot.lane.b32.xlu0 %v2799, 56
        %v2867 = vpop.permute.xlu0 %2866
        %2868 = vrot.lane.b32.xlu0 %v2800, 56
        %v2869 = vpop.permute.xlu0 %2868
        %2870 = vrot.lane.b32.xlu0 %v2801, 56
        %v2871 = vpop.permute.xlu0 %2870
        %2872 = vrot.lane.b32.xlu0 %v2802, 56
        %v2873 = vpop.permute.xlu0 %2872
        %2874 = vrot.lane.b32.xlu0 %v2803, 56
        %v2875 = vpop.permute.xlu0 %2874
        %2876 = vrot.lane.b32.xlu0 %v2804, 56
        %v2877 = vpop.permute.xlu0 %2876
        %2878 = vrot.lane.b32.xlu0 %v2805, 56
        %v2879 = vpop.permute.xlu0 %2878
        %2880 = vrot.lane.b32.xlu0 %v2806, 56
        %v2881 = vpop.permute.xlu0 %2880
        %2882 = vrot.lane.b32.xlu0 %v2807, 56
        %v2883 = vpop.permute.xlu0 %2882
        %2884 = vrot.lane.b32.xlu0 %v2808, 56
        %v2885 = vpop.permute.xlu0 %2884
        %2886 = vrot.lane.b32.xlu0 %v2809, 56
        %v2887 = vpop.permute.xlu0 %2886
        %2888 = vrot.lane.b32.xlu0 %v2810, 56
        %v2889 = vpop.permute.xlu0 %2888
        %2890 = vrot.lane.b32.xlu0 %v2811, 56
        %v2891 = vpop.permute.xlu0 %2890
        %2892 = vrot.lane.b32.xlu0 %v2812, 56
        %v2893 = vpop.permute.xlu0 %2892
        %2894 = vrot.lane.b32.xlu0 %v2813, 56
        %v2895 = vpop.permute.xlu0 %2894
        %2896 = vrot.lane.b32.xlu0 %v2814, 56
        %v2897 = vpop.permute.xlu0 %2896
        %2898 = vrot.lane.b32.xlu0 %v2815, 56
        %v2899 = vpop.permute.xlu0 %2898
        %2900 = vrot.lane.b32.xlu0 %v2816, 56
        %v2901 = vpop.permute.xlu0 %2900
        %2902 = vrot.lane.b32.xlu0 %v2817, 56
        %v2903 = vpop.permute.xlu0 %2902
        %2904 = vrot.lane.b32.xlu0 %v2818, 56
        %v2905 = vpop.permute.xlu0 %2904
        %2906 = vrot.lane.b32.xlu0 %v2819, 56
        %v2907 = vpop.permute.xlu0 %2906
        %2908 = vrot.lane.b32.xlu0 %v2820, 56
        %v2909 = vpop.permute.xlu0 %2908
        %2910 = vrot.lane.b32.xlu0 %v2821, 56
        %v2911 = vpop.permute.xlu0 %2910
        %2912 = vrot.lane.b32.xlu0 %v2822, 56
        %v2913 = vpop.permute.xlu0 %2912
        %2914 = vrot.lane.b32.xlu0 %v2823, 56
        %v2915 = vpop.permute.xlu0 %2914
        %2916 = vrot.lane.b32.xlu0 %v2824, 56
        %v2917 = vpop.permute.xlu0 %2916
        %2918 = vrot.lane.b32.xlu0 %v2825, 56
        %v2919 = vpop.permute.xlu0 %2918
        %2920 = vrot.lane.b32.xlu0 %v2826, 56
        %v2921 = vpop.permute.xlu0 %2920
        %2922 = vrot.lane.b32.xlu0 %v2827, 56
        %v2923 = vpop.permute.xlu0 %2922
        %vm2956 = vcmask 519616
        %2957 = vst.msk [vmem:[#allocation3] sm:$0xf] %vm2956, %v2861
        %2958 = vst.msk [vmem:[#allocation3 + $0x4] sm:$0xf] %vm2956, %v2863
        %2959 = vst.msk [vmem:[#allocation3 + $0x8] sm:$0xf] %vm2956, %v2865
        %2960 = vst.msk [vmem:[#allocation3 + $0xc] sm:$0xf] %vm2956, %v2867
        %2961 = vst.msk [vmem:[#allocation3 + $0x10] sm:$0xf] %vm2956, %v2869
        %2962 = vst.msk [vmem:[#allocation3 + $0x14] sm:$0xf] %vm2956, %v2871
        %2963 = vst.msk [vmem:[#allocation3 + $0x18] sm:$0xf] %vm2956, %v2873
        %2964 = vst.msk [vmem:[#allocation3 + $0x1c] sm:$0xf] %vm2956, %v2875
        %2965 = vst.msk [vmem:[#allocation3 + $0x20] sm:$0xf] %vm2956, %v2877
        %2966 = vst.msk [vmem:[#allocation3 + $0x24] sm:$0xf] %vm2956, %v2879
        %2967 = vst.msk [vmem:[#allocation3 + $0x28] sm:$0xf] %vm2956, %v2881
        %2968 = vst.msk [vmem:[#allocation3 + $0x2c] sm:$0xf] %vm2956, %v2883
        %2969 = vst.msk [vmem:[#allocation3 + $0x30] sm:$0xf] %vm2956, %v2885
        %2970 = vst.msk [vmem:[#allocation3 + $0x34] sm:$0xf] %vm2956, %v2887
        %2971 = vst.msk [vmem:[#allocation3 + $0x38] sm:$0xf] %vm2956, %v2889
        %2972 = vst.msk [vmem:[#allocation3 + $0x3c] sm:$0xf] %vm2956, %v2891
        %2973 = vst.msk [vmem:[#allocation3 + $0x40] sm:$0xf] %vm2956, %v2893
        %2974 = vst.msk [vmem:[#allocation3 + $0x44] sm:$0xf] %vm2956, %v2895
        %2975 = vst.msk [vmem:[#allocation3 + $0x48] sm:$0xf] %vm2956, %v2897
        %2976 = vst.msk [vmem:[#allocation3 + $0x4c] sm:$0xf] %vm2956, %v2899
        %2977 = vst.msk [vmem:[#allocation3 + $0x50] sm:$0xf] %vm2956, %v2901
        %2978 = vst.msk [vmem:[#allocation3 + $0x54] sm:$0xf] %vm2956, %v2903
        %2979 = vst.msk [vmem:[#allocation3 + $0x58] sm:$0xf] %vm2956, %v2905
        %2980 = vst.msk [vmem:[#allocation3 + $0x5c] sm:$0xf] %vm2956, %v2907
        %2981 = vst.msk [vmem:[#allocation3 + $0x60] sm:$0xf] %vm2956, %v2909
        %2982 = vst.msk [vmem:[#allocation3 + $0x64] sm:$0xf] %vm2956, %v2911
        %2983 = vst.msk [vmem:[#allocation3 + $0x68] sm:$0xf] %vm2956, %v2913
        %2984 = vst.msk [vmem:[#allocation3 + $0x6c] sm:$0xf] %vm2956, %v2915
        %2985 = vst.msk [vmem:[#allocation3 + $0x70] sm:$0xf] %vm2956, %v2917
        %2986 = vst.msk [vmem:[#allocation3 + $0x74] sm:$0xf] %vm2956, %v2919
        %2987 = vst.msk [vmem:[#allocation3 + $0x78] sm:$0xf] %vm2956, %v2921
        %2988 = vst.msk [vmem:[#allocation3 + $0x7c] sm:$0xf] %vm2956, %v2923
        %v2989 = vld [vmem:[#allocation2 + $0x29] sm:$0xff]
        %v2990 = vld [vmem:[#allocation2 + $0x31] sm:$0xff]
        %v2991 = vld [vmem:[#allocation2 + $0x39] sm:$0xff]
        %v2992 = vld [vmem:[#allocation2 + $0x41] sm:$0xff]
        %v2993 = vld [vmem:[#allocation2 + $0x49] sm:$0xff]
        %v2994 = vld [vmem:[#allocation2 + $0x51] sm:$0xff]
        %v2995 = vld [vmem:[#allocation2 + $0x59] sm:$0xff]
        %v2996 = vld [vmem:[#allocation2 + $0x61] sm:$0xff]
        %v2997 = vld [vmem:[#allocation2 + $0x69] sm:$0xff]
        %v2998 = vld [vmem:[#allocation2 + $0x71] sm:$0xff]
        %v2999 = vld [vmem:[#allocation2 + $0x79] sm:$0xff]
        %v3000 = vld [vmem:[#allocation2 + $0x81] sm:$0xff]
        %v3001 = vld [vmem:[#allocation2 + $0x89] sm:$0xff]
        %v3002 = vld [vmem:[#allocation2 + $0x91] sm:$0xff]
        %v3003 = vld [vmem:[#allocation2 + $0x99] sm:$0xff]
        %v3004 = vld [vmem:[#allocation2 + $0xa1] sm:$0xff]
        %v3005 = vld [vmem:[#allocation2 + $0xa9] sm:$0xff]
        %v3006 = vld [vmem:[#allocation2 + $0xb1] sm:$0xff]
        %v3007 = vld [vmem:[#allocation2 + $0xb9] sm:$0xff]
        %v3008 = vld [vmem:[#allocation2 + $0xc1] sm:$0xff]
        %v3009 = vld [vmem:[#allocation2 + $0xc9] sm:$0xff]
        %v3010 = vld [vmem:[#allocation2 + $0xd1] sm:$0xff]
        %v3011 = vld [vmem:[#allocation2 + $0xd9] sm:$0xff]
        %v3012 = vld [vmem:[#allocation2 + $0xe1] sm:$0xff]
        %v3013 = vld [vmem:[#allocation2 + $0xe9] sm:$0xff]
        %v3014 = vld [vmem:[#allocation2 + $0xf1] sm:$0xff]
        %v3015 = vld [vmem:[#allocation2 + $0xf9] sm:$0xff]
        %v3016 = vld [vmem:[#allocation2 + $0x101] sm:$0xff]
        %v3017 = vld [vmem:[#allocation2 + $0x109] sm:$0xff]
        %v3018 = vld [vmem:[#allocation2 + $0x111] sm:$0xff]
        %v3019 = vld [vmem:[#allocation2 + $0x119] sm:$0xff]
        %v3020 = vld [vmem:[#allocation2 + $0x121] sm:$0xff]
        %v3021 = vpack.c.bf16 %v2989, %v2989
        %v3022 = vpack.c.bf16 %v2990, %v2990
        %v3023 = vpack.c.bf16 %v2991, %v2991
        %v3024 = vpack.c.bf16 %v2992, %v2992
        %v3025 = vpack.c.bf16 %v2993, %v2993
        %v3026 = vpack.c.bf16 %v2994, %v2994
        %v3027 = vpack.c.bf16 %v2995, %v2995
        %v3028 = vpack.c.bf16 %v2996, %v2996
        %v3029 = vpack.c.bf16 %v2997, %v2997
        %v3030 = vpack.c.bf16 %v2998, %v2998
        %v3031 = vpack.c.bf16 %v2999, %v2999
        %v3032 = vpack.c.bf16 %v3000, %v3000
        %v3033 = vpack.c.bf16 %v3001, %v3001
        %v3034 = vpack.c.bf16 %v3002, %v3002
        %v3035 = vpack.c.bf16 %v3003, %v3003
        %v3036 = vpack.c.bf16 %v3004, %v3004
        %v3037 = vpack.c.bf16 %v3005, %v3005
        %v3038 = vpack.c.bf16 %v3006, %v3006
        %v3039 = vpack.c.bf16 %v3007, %v3007
        %v3040 = vpack.c.bf16 %v3008, %v3008
        %v3041 = vpack.c.bf16 %v3009, %v3009
        %v3042 = vpack.c.bf16 %v3010, %v3010
        %v3043 = vpack.c.bf16 %v3011, %v3011
        %v3044 = vpack.c.bf16 %v3012, %v3012
        %v3045 = vpack.c.bf16 %v3013, %v3013
        %v3046 = vpack.c.bf16 %v3014, %v3014
        %v3047 = vpack.c.bf16 %v3015, %v3015
        %v3048 = vpack.c.bf16 %v3016, %v3016
        %v3049 = vpack.c.bf16 %v3017, %v3017
        %v3050 = vpack.c.bf16 %v3018, %v3018
        %v3051 = vpack.c.bf16 %v3019, %v3019
        %v3052 = vpack.c.bf16 %v3020, %v3020
        %v3053 = vsel %vm1543, %v3021, 0
        %v3054 = vsel %vm1544, %v3022, 0
        %v3055 = vsel %vm1545, %v3023, 0
        %v3056 = vsel %vm1546, %v3024, 0
        %v3057 = vsel %vm1547, %v3025, 0
        %v3058 = vsel %vm1548, %v3026, 0
        %v3059 = vsel %vm1549, %v3027, 0
        %v3060 = vsel %vm1550, %v3028, 0
        %v3061 = vsel %vm1551, %v3029, 0
        %v3062 = vsel %vm1552, %v3030, 0
        %v3063 = vsel %vm1553, %v3031, 0
        %v3064 = vsel %vm1554, %v3032, 0
        %v3065 = vsel %vm1555, %v3033, 0
        %v3066 = vsel %vm1556, %v3034, 0
        %v3067 = vsel %vm1557, %v3035, 0
        %v3068 = vsel %vm1558, %v3036, 0
        %v3069 = vsel %vm1559, %v3037, 0
        %v3070 = vsel %vm1560, %v3038, 0
        %v3071 = vsel %vm1561, %v3039, 0
        %v3072 = vsel %vm1562, %v3040, 0
        %v3073 = vsel %vm1563, %v3041, 0
        %v3074 = vsel %vm1564, %v3042, 0
        %v3075 = vsel %vm1565, %v3043, 0
        %v3076 = vsel %vm1566, %v3044, 0
        %v3077 = vsel %vm1567, %v3045, 0
        %v3078 = vsel %vm1568, %v3046, 0
        %v3079 = vsel %vm1569, %v3047, 0
        %v3080 = vsel %vm1570, %v3048, 0
        %v3081 = vsel %vm1571, %v3049, 0
        %v3082 = vsel %vm1572, %v3050, 0
        %v3083 = vsel %vm1573, %v3051, 0
        %v3084 = vsel %vm1574, %v3052, 0
        %3117 = vrot.lane.b32.xlu0 %v3053, 64
        %v3118 = vpop.permute.xlu0 %3117
        %3119 = vrot.lane.b32.xlu0 %v3054, 64
        %v3120 = vpop.permute.xlu0 %3119
        %3121 = vrot.lane.b32.xlu0 %v3055, 64
        %v3122 = vpop.permute.xlu0 %3121
        %3123 = vrot.lane.b32.xlu0 %v3056, 64
        %v3124 = vpop.permute.xlu0 %3123
        %3125 = vrot.lane.b32.xlu0 %v3057, 64
        %v3126 = vpop.permute.xlu0 %3125
        %3127 = vrot.lane.b32.xlu0 %v3058, 64
        %v3128 = vpop.permute.xlu0 %3127
        %3129 = vrot.lane.b32.xlu0 %v3059, 64
        %v3130 = vpop.permute.xlu0 %3129
        %3131 = vrot.lane.b32.xlu0 %v3060, 64
        %v3132 = vpop.permute.xlu0 %3131
        %3133 = vrot.lane.b32.xlu0 %v3061, 64
        %v3134 = vpop.permute.xlu0 %3133
        %3135 = vrot.lane.b32.xlu0 %v3062, 64
        %v3136 = vpop.permute.xlu0 %3135
        %3137 = vrot.lane.b32.xlu0 %v3063, 64
        %v3138 = vpop.permute.xlu0 %3137
        %3139 = vrot.lane.b32.xlu0 %v3064, 64
        %v3140 = vpop.permute.xlu0 %3139
        %3141 = vrot.lane.b32.xlu0 %v3065, 64
        %v3142 = vpop.permute.xlu0 %3141
        %3143 = vrot.lane.b32.xlu0 %v3066, 64
        %v3144 = vpop.permute.xlu0 %3143
        %3145 = vrot.lane.b32.xlu0 %v3067, 64
        %v3146 = vpop.permute.xlu0 %3145
        %3147 = vrot.lane.b32.xlu0 %v3068, 64
        %v3148 = vpop.permute.xlu0 %3147
        %3149 = vrot.lane.b32.xlu0 %v3069, 64
        %v3150 = vpop.permute.xlu0 %3149
        %3151 = vrot.lane.b32.xlu0 %v3070, 64
        %v3152 = vpop.permute.xlu0 %3151
        %3153 = vrot.lane.b32.xlu0 %v3071, 64
        %v3154 = vpop.permute.xlu0 %3153
        %3155 = vrot.lane.b32.xlu0 %v3072, 64
        %v3156 = vpop.permute.xlu0 %3155
        %3157 = vrot.lane.b32.xlu0 %v3073, 64
        %v3158 = vpop.permute.xlu0 %3157
        %3159 = vrot.lane.b32.xlu0 %v3074, 64
        %v3160 = vpop.permute.xlu0 %3159
        %3161 = vrot.lane.b32.xlu0 %v3075, 64
        %v3162 = vpop.permute.xlu0 %3161
        %3163 = vrot.lane.b32.xlu0 %v3076, 64
        %v3164 = vpop.permute.xlu0 %3163
        %3165 = vrot.lane.b32.xlu0 %v3077, 64
        %v3166 = vpop.permute.xlu0 %3165
        %3167 = vrot.lane.b32.xlu0 %v3078, 64
        %v3168 = vpop.permute.xlu0 %3167
        %3169 = vrot.lane.b32.xlu0 %v3079, 64
        %v3170 = vpop.permute.xlu0 %3169
        %3171 = vrot.lane.b32.xlu0 %v3080, 64
        %v3172 = vpop.permute.xlu0 %3171
        %3173 = vrot.lane.b32.xlu0 %v3081, 64
        %v3174 = vpop.permute.xlu0 %3173
        %3175 = vrot.lane.b32.xlu0 %v3082, 64
        %v3176 = vpop.permute.xlu0 %3175
        %3177 = vrot.lane.b32.xlu0 %v3083, 64
        %v3178 = vpop.permute.xlu0 %3177
        %3179 = vrot.lane.b32.xlu0 %v3084, 64
        %v3180 = vpop.permute.xlu0 %3179
        %vm3213 = vcmask 585216
        %3214 = vst.msk [vmem:[#allocation3] sm:$0xf] %vm3213, %v3118
        %3215 = vst.msk [vmem:[#allocation3 + $0x4] sm:$0xf] %vm3213, %v3120
        %3216 = vst.msk [vmem:[#allocation3 + $0x8] sm:$0xf] %vm3213, %v3122
        %3217 = vst.msk [vmem:[#allocation3 + $0xc] sm:$0xf] %vm3213, %v3124
        %3218 = vst.msk [vmem:[#allocation3 + $0x10] sm:$0xf] %vm3213, %v3126
        %3219 = vst.msk [vmem:[#allocation3 + $0x14] sm:$0xf] %vm3213, %v3128
        %3220 = vst.msk [vmem:[#allocation3 + $0x18] sm:$0xf] %vm3213, %v3130
        %3221 = vst.msk [vmem:[#allocation3 + $0x1c] sm:$0xf] %vm3213, %v3132
        %3222 = vst.msk [vmem:[#allocation3 + $0x20] sm:$0xf] %vm3213, %v3134
        %3223 = vst.msk [vmem:[#allocation3 + $0x24] sm:$0xf] %vm3213, %v3136
        %3224 = vst.msk [vmem:[#allocation3 + $0x28] sm:$0xf] %vm3213, %v3138
        %3225 = vst.msk [vmem:[#allocation3 + $0x2c] sm:$0xf] %vm3213, %v3140
        %3226 = vst.msk [vmem:[#allocation3 + $0x30] sm:$0xf] %vm3213, %v3142
        %3227 = vst.msk [vmem:[#allocation3 + $0x34] sm:$0xf] %vm3213, %v3144
        %3228 = vst.msk [vmem:[#allocation3 + $0x38] sm:$0xf] %vm3213, %v3146
        %3229 = vst.msk [vmem:[#allocation3 + $0x3c] sm:$0xf] %vm3213, %v3148
        %3230 = vst.msk [vmem:[#allocation3 + $0x40] sm:$0xf] %vm3213, %v3150
        %3231 = vst.msk [vmem:[#allocation3 + $0x44] sm:$0xf] %vm3213, %v3152
        %3232 = vst.msk [vmem:[#allocation3 + $0x48] sm:$0xf] %vm3213, %v3154
        %3233 = vst.msk [vmem:[#allocation3 + $0x4c] sm:$0xf] %vm3213, %v3156
        %3234 = vst.msk [vmem:[#allocation3 + $0x50] sm:$0xf] %vm3213, %v3158
        %3235 = vst.msk [vmem:[#allocation3 + $0x54] sm:$0xf] %vm3213, %v3160
        %3236 = vst.msk [vmem:[#allocation3 + $0x58] sm:$0xf] %vm3213, %v3162
        %3237 = vst.msk [vmem:[#allocation3 + $0x5c] sm:$0xf] %vm3213, %v3164
        %3238 = vst.msk [vmem:[#allocation3 + $0x60] sm:$0xf] %vm3213, %v3166
        %3239 = vst.msk [vmem:[#allocation3 + $0x64] sm:$0xf] %vm3213, %v3168
        %3240 = vst.msk [vmem:[#allocation3 + $0x68] sm:$0xf] %vm3213, %v3170
        %3241 = vst.msk [vmem:[#allocation3 + $0x6c] sm:$0xf] %vm3213, %v3172
        %3242 = vst.msk [vmem:[#allocation3 + $0x70] sm:$0xf] %vm3213, %v3174
        %3243 = vst.msk [vmem:[#allocation3 + $0x74] sm:$0xf] %vm3213, %v3176
        %3244 = vst.msk [vmem:[#allocation3 + $0x78] sm:$0xf] %vm3213, %v3178
        %3245 = vst.msk [vmem:[#allocation3 + $0x7c] sm:$0xf] %vm3213, %v3180
        %v3246 = vld [vmem:[#allocation3] sm:$0xf]
        %v3247 = vld [vmem:[#allocation3 + $0x4] sm:$0xf]
        %v3248 = vld [vmem:[#allocation3 + $0x8] sm:$0xf]
        %v3249 = vld [vmem:[#allocation3 + $0xc] sm:$0xf]
        %v3250 = vld [vmem:[#allocation3 + $0x10] sm:$0xf]
        %v3251 = vld [vmem:[#allocation3 + $0x14] sm:$0xf]
        %v3252 = vld [vmem:[#allocation3 + $0x18] sm:$0xf]
        %v3253 = vld [vmem:[#allocation3 + $0x1c] sm:$0xf]
        %v3254 = vld [vmem:[#allocation3 + $0x20] sm:$0xf]
        %v3255 = vld [vmem:[#allocation3 + $0x24] sm:$0xf]
        %v3256 = vld [vmem:[#allocation3 + $0x28] sm:$0xf]
        %v3257 = vld [vmem:[#allocation3 + $0x2c] sm:$0xf]
        %v3258 = vld [vmem:[#allocation3 + $0x30] sm:$0xf]
        %v3259 = vld [vmem:[#allocation3 + $0x34] sm:$0xf]
        %v3260 = vld [vmem:[#allocation3 + $0x38] sm:$0xf]
        %v3261 = vld [vmem:[#allocation3 + $0x3c] sm:$0xf]
        %v3262 = vld [vmem:[#allocation3 + $0x40] sm:$0xf]
        %v3263 = vld [vmem:[#allocation3 + $0x44] sm:$0xf]
        %v3264 = vld [vmem:[#allocation3 + $0x48] sm:$0xf]
        %v3265 = vld [vmem:[#allocation3 + $0x4c] sm:$0xf]
        %v3266 = vld [vmem:[#allocation3 + $0x50] sm:$0xf]
        %v3267 = vld [vmem:[#allocation3 + $0x54] sm:$0xf]
        %v3268 = vld [vmem:[#allocation3 + $0x58] sm:$0xf]
        %v3269 = vld [vmem:[#allocation3 + $0x5c] sm:$0xf]
        %v3270 = vld [vmem:[#allocation3 + $0x60] sm:$0xf]
        %v3271 = vld [vmem:[#allocation3 + $0x64] sm:$0xf]
        %v3272 = vld [vmem:[#allocation3 + $0x68] sm:$0xf]
        %v3273 = vld [vmem:[#allocation3 + $0x6c] sm:$0xf]
        %v3274 = vld [vmem:[#allocation3 + $0x70] sm:$0xf]
        %v3275 = vld [vmem:[#allocation3 + $0x74] sm:$0xf]
        %v3276 = vld [vmem:[#allocation3 + $0x78] sm:$0xf]
        %v3277 = vld [vmem:[#allocation3 + $0x7c] sm:$0xf]
        %v3278 = vld [vmem:[%s3] sm:$0xf]
        %v3279 = vld [vmem:[%s3 + $0x4] sm:$0xf]
        %v3280 = vld [vmem:[%s3 + $0x8] sm:$0xf]
        %v3281 = vld [vmem:[%s3 + $0xc] sm:$0xf]
        %v3282 = vld [vmem:[%s3 + $0x10] sm:$0xf]
        %v3283 = vld [vmem:[%s3 + $0x14] sm:$0xf]
        %v3284 = vld [vmem:[%s3 + $0x18] sm:$0xf]
        %v3285 = vld [vmem:[%s3 + $0x1c] sm:$0xf]
        %v3286 = vld [vmem:[%s3 + $0x20] sm:$0xf]
        %v3287 = vld [vmem:[%s4] sm:$0x1]
        %v3289 = vperm.slane %v3287, 0
        %v3323 = vunpack.c.l.b16 %v3246
        %v3324 = vunpack.c.l.b16 %v3247
        %v3325 = vunpack.c.l.b16 %v3248
        %v3326 = vunpack.c.l.b16 %v3249
        %v3327 = vunpack.c.l.b16 %v3250
        %v3328 = vunpack.c.l.b16 %v3251
        %v3329 = vunpack.c.l.b16 %v3252
        %v3330 = vunpack.c.l.b16 %v3253
        %v3331 = vunpack.c.l.b16 %v3254
        %v3332 = vunpack.c.l.b16 %v3255
        %v3333 = vunpack.c.l.b16 %v3256
        %v3334 = vunpack.c.l.b16 %v3257
        %v3335 = vunpack.c.l.b16 %v3258
        %v3336 = vunpack.c.l.b16 %v3259
        %v3337 = vunpack.c.l.b16 %v3260
        %v3338 = vunpack.c.l.b16 %v3261
        %v3339 = vunpack.c.l.b16 %v3262
        %v3340 = vunpack.c.l.b16 %v3263
        %v3341 = vunpack.c.l.b16 %v3264
        %v3342 = vunpack.c.l.b16 %v3265
        %v3343 = vunpack.c.l.b16 %v3266
        %v3344 = vunpack.c.l.b16 %v3267
        %v3345 = vunpack.c.l.b16 %v3268
        %v3346 = vunpack.c.l.b16 %v3269
        %v3347 = vunpack.c.l.b16 %v3270
        %v3348 = vunpack.c.l.b16 %v3271
        %v3349 = vunpack.c.l.b16 %v3272
        %v3350 = vunpack.c.l.b16 %v3273
        %v3351 = vunpack.c.l.b16 %v3274
        %v3352 = vunpack.c.l.b16 %v3275
        %v3353 = vunpack.c.l.b16 %v3276
        %v3354 = vunpack.c.l.b16 %v3277
        %v3355 = vpack.c.b16 %v3324, %v3323
        %v3356 = vpack.c.b16 %v3326, %v3325
        %v3357 = vpack.c.b16 %v3328, %v3327
        %v3358 = vpack.c.b16 %v3330, %v3329
        %v3359 = vpack.c.b16 %v3332, %v3331
        %v3360 = vpack.c.b16 %v3334, %v3333
        %v3361 = vpack.c.b16 %v3336, %v3335
        %v3362 = vpack.c.b16 %v3338, %v3337
        %v3363 = vpack.c.b16 %v3340, %v3339
        %v3364 = vpack.c.b16 %v3342, %v3341
        %v3365 = vpack.c.b16 %v3344, %v3343
        %v3366 = vpack.c.b16 %v3346, %v3345
        %v3367 = vpack.c.b16 %v3348, %v3347
        %v3368 = vpack.c.b16 %v3350, %v3349
        %v3369 = vpack.c.b16 %v3352, %v3351
        %v3370 = vpack.c.b16 %v3354, %v3353
        %v3380 = vunpack.c.l.b16 %v3278
        %v3381 = vunpack.c.l.b16 %v3279
        %v3382 = vunpack.c.l.b16 %v3280
        %v3383 = vunpack.c.l.b16 %v3281
        %v3384 = vunpack.c.l.b16 %v3282
        %v3385 = vunpack.c.l.b16 %v3283
        %v3386 = vunpack.c.l.b16 %v3284
        %v3387 = vunpack.c.l.b16 %v3285
        %v3388 = vunpack.c.l.b16 %v3286
        %v3389 = vpack.c.b16 %v3381, %v3380
        %v3390 = vpack.c.b16 %v3383, %v3382
        %v3391 = vpack.c.b16 %v3385, %v3384
        %v3392 = vpack.c.b16 %v3387, %v3386
        %v3393 = vpack.c.b16 %v3388, %v3388
        %vm3398 = vcmask 588800
        %v3400 = vsel %vm3398, %v3355, 0
        %v3403 = vsel %vm3398, %v3356, 0
        %v3406 = vsel %vm3398, %v3357, 0
        %v3409 = vsel %vm3398, %v3358, 0
        %v3412 = vsel %vm3398, %v3359, 0
        %v3415 = vsel %vm3398, %v3360, 0
        %v3418 = vsel %vm3398, %v3361, 0
        %v3421 = vsel %vm3398, %v3362, 0
        %v3424 = vsel %vm3398, %v3363, 0
        %v3427 = vsel %vm3398, %v3364, 0
        %v3430 = vsel %vm3398, %v3365, 0
        %v3433 = vsel %vm3398, %v3366, 0
        %v3436 = vsel %vm3398, %v3367, 0
        %v3439 = vsel %vm3398, %v3368, 0
        %v3442 = vsel %vm3398, %v3369, 0
        %v3445 = vsel %vm3398, %v3370, 0
        %v3448 = vsel %vm347, %v3393, 0
        %3450 = vmatpush.bf16.msra.mxu0 0
        %3451 = vmatpush.bf16.msra.mxu0 0
        %3452 = vmatpush.bf16.msra.mxu0 0
        %3453 = vmatpush.bf16.msra.mxu0 %v3448
        %3454 = vmatpush.bf16.msra.mxu0 %v3392
        %3455 = vmatpush.bf16.msra.mxu0 %v3391
        %3456 = vmatpush.bf16.msra.mxu0 %v3390
        %3457 = vmatpush.bf16.msra.mxu0 %v3389
        %3458 = vmatmul.bf16.gmra.mxu0 %v3400
        %v3459 = vpop.f32.mrf.mxu0
        %v3460 = vadd.f32 %v3289, %v3459
        %v3461 = vpop.f32.mrf.mxu0
        %v3462 = vadd.f32 %v3289, %v3461
        %3463 = vmatmul.bf16.gmra.mxu0 %v3403
        %v3464 = vpop.f32.mrf.mxu0
        %v3465 = vadd.f32 %v3289, %v3464
        %v3466 = vpop.f32.mrf.mxu0
        %v3467 = vadd.f32 %v3289, %v3466
        %3468 = vmatmul.bf16.gmra.mxu0 %v3406
        %v3469 = vpop.f32.mrf.mxu0
        %v3470 = vadd.f32 %v3289, %v3469
        %v3471 = vpop.f32.mrf.mxu0
        %v3472 = vadd.f32 %v3289, %v3471
        %3473 = vmatmul.bf16.gmra.mxu0 %v3409
        %v3474 = vpop.f32.mrf.mxu0
        %v3475 = vadd.f32 %v3289, %v3474
        %v3476 = vpop.f32.mrf.mxu0
        %v3477 = vadd.f32 %v3289, %v3476
        %3478 = vmatmul.bf16.gmra.mxu0 %v3412
        %v3479 = vpop.f32.mrf.mxu0
        %v3480 = vadd.f32 %v3289, %v3479
        %v3481 = vpop.f32.mrf.mxu0
        %v3482 = vadd.f32 %v3289, %v3481
        %3483 = vmatmul.bf16.gmra.mxu0 %v3415
        %v3484 = vpop.f32.mrf.mxu0
        %v3485 = vadd.f32 %v3289, %v3484
        %v3486 = vpop.f32.mrf.mxu0
        %v3487 = vadd.f32 %v3289, %v3486
        %3488 = vmatmul.bf16.gmra.mxu0 %v3418
        %v3489 = vpop.f32.mrf.mxu0
        %v3490 = vadd.f32 %v3289, %v3489
        %v3491 = vpop.f32.mrf.mxu0
        %v3492 = vadd.f32 %v3289, %v3491
        %3493 = vmatmul.bf16.gmra.mxu0 %v3421
        %v3494 = vpop.f32.mrf.mxu0
        %v3495 = vadd.f32 %v3289, %v3494
        %v3496 = vpop.f32.mrf.mxu0
        %v3497 = vadd.f32 %v3289, %v3496
        %3498 = vmatmul.bf16.gmra.mxu0 %v3424
        %v3499 = vpop.f32.mrf.mxu0
        %v3500 = vadd.f32 %v3289, %v3499
        %v3501 = vpop.f32.mrf.mxu0
        %v3502 = vadd.f32 %v3289, %v3501
        %3503 = vmatmul.bf16.gmra.mxu0 %v3427
        %v3504 = vpop.f32.mrf.mxu0
        %v3505 = vadd.f32 %v3289, %v3504
        %v3506 = vpop.f32.mrf.mxu0
        %v3507 = vadd.f32 %v3289, %v3506
        %3508 = vmatmul.bf16.gmra.mxu0 %v3430
        %v3509 = vpop.f32.mrf.mxu0
        %v3510 = vadd.f32 %v3289, %v3509
        %v3511 = vpop.f32.mrf.mxu0
        %v3512 = vadd.f32 %v3289, %v3511
        %3513 = vmatmul.bf16.gmra.mxu0 %v3433
        %v3514 = vpop.f32.mrf.mxu0
        %v3515 = vadd.f32 %v3289, %v3514
        %v3516 = vpop.f32.mrf.mxu0
        %v3517 = vadd.f32 %v3289, %v3516
        %3518 = vmatmul.bf16.gmra.mxu0 %v3436
        %v3519 = vpop.f32.mrf.mxu0
        %v3520 = vadd.f32 %v3289, %v3519
        %v3521 = vpop.f32.mrf.mxu0
        %v3522 = vadd.f32 %v3289, %v3521
        %3523 = vmatmul.bf16.gmra.mxu0 %v3439
        %v3524 = vpop.f32.mrf.mxu0
        %v3525 = vadd.f32 %v3289, %v3524
        %v3526 = vpop.f32.mrf.mxu0
        %v3527 = vadd.f32 %v3289, %v3526
        %3528 = vmatmul.bf16.gmra.mxu0 %v3442
        %v3529 = vpop.f32.mrf.mxu0
        %v3530 = vadd.f32 %v3289, %v3529
        %v3531 = vpop.f32.mrf.mxu0
        %v3532 = vadd.f32 %v3289, %v3531
        %3533 = vmatmul.bf16.gmra.mxu0 %v3445
        %v3534 = vpop.f32.mrf.mxu0
        %v3535 = vadd.f32 %v3289, %v3534
        %v3536 = vpop.f32.mrf.mxu0
        %v3537 = vadd.f32 %v3289, %v3536
        %3538 = vdwg.mxu0
        %v3539 = vmax.f32 %v3460, 0.0
        %v3540 = vmax.f32 %v3462, 0.0
        %v3541 = vmax.f32 %v3465, 0.0
        %v3542 = vmax.f32 %v3467, 0.0
        %v3543 = vmax.f32 %v3470, 0.0
        %v3544 = vmax.f32 %v3472, 0.0
        %v3545 = vmax.f32 %v3475, 0.0
        %v3546 = vmax.f32 %v3477, 0.0
        %v3547 = vmax.f32 %v3480, 0.0
        %v3548 = vmax.f32 %v3482, 0.0
        %v3549 = vmax.f32 %v3485, 0.0
        %v3550 = vmax.f32 %v3487, 0.0
        %v3551 = vmax.f32 %v3490, 0.0
        %v3552 = vmax.f32 %v3492, 0.0
        %v3553 = vmax.f32 %v3495, 0.0
        %v3554 = vmax.f32 %v3497, 0.0
        %v3555 = vmax.f32 %v3500, 0.0
        %v3556 = vmax.f32 %v3502, 0.0
        %v3557 = vmax.f32 %v3505, 0.0
        %v3558 = vmax.f32 %v3507, 0.0
        %v3559 = vmax.f32 %v3510, 0.0
        %v3560 = vmax.f32 %v3512, 0.0
        %v3561 = vmax.f32 %v3515, 0.0
        %v3562 = vmax.f32 %v3517, 0.0
        %v3563 = vmax.f32 %v3520, 0.0
        %v3564 = vmax.f32 %v3522, 0.0
        %v3565 = vmax.f32 %v3525, 0.0
        %v3566 = vmax.f32 %v3527, 0.0
        %v3567 = vmax.f32 %v3530, 0.0
        %v3568 = vmax.f32 %v3532, 0.0
        %v3569 = vmax.f32 %v3535, 0.0
        %v3570 = vmax.f32 %v3537, 0.0
        %v3571 = vpack.c.bf16 %v3540, %v3539
        %v3572 = vpack.c.bf16 %v3542, %v3541
        %v3573 = vpack.c.bf16 %v3544, %v3543
        %v3574 = vpack.c.bf16 %v3546, %v3545
        %v3575 = vpack.c.bf16 %v3548, %v3547
        %v3576 = vpack.c.bf16 %v3550, %v3549
        %v3577 = vpack.c.bf16 %v3552, %v3551
        %v3578 = vpack.c.bf16 %v3554, %v3553
        %v3579 = vpack.c.bf16 %v3556, %v3555
        %v3580 = vpack.c.bf16 %v3558, %v3557
        %v3581 = vpack.c.bf16 %v3560, %v3559
        %v3582 = vpack.c.bf16 %v3562, %v3561
        %v3583 = vpack.c.bf16 %v3564, %v3563
        %v3584 = vpack.c.bf16 %v3566, %v3565
        %v3585 = vpack.c.bf16 %v3568, %v3567
        %v3586 = vpack.c.bf16 %v3570, %v3569
        %v3587 = vld [vmem:[%s5] sm:$0xf]
        %v3588 = vld [vmem:[%s5 + $0x4] sm:$0xf]
        %v3589 = vld [vmem:[%s6] sm:$0xff]
        %v3590 = vld [vmem:[%s6 + $0x8] sm:$0xff]
        %3592 = vset.pattern.permute.xlu0 0
        %3593 = vperm.xlu0 %3592, %v3589
        %v3594 = vpop.permute.xlu0 %3593
        %3597 = vset.pattern.permute.xlu0 0
        %3598 = vperm.xlu0 %3597, %v3590
        %v3599 = vpop.permute.xlu0 %3598
        %v3603 = vunpack.c.l.b16 %v3587
        %v3604 = vunpack.c.l.b16 %v3588
        %v3605 = vpack.c.b16 %v3604, %v3603
        %v3607 = vsel %vm343, %v3605, 0
        %v3610 = vsel %vm343, %v3571, 0
        %v3613 = vsel %vm343, %v3572, 0
        %v3616 = vsel %vm343, %v3573, 0
        %v3619 = vsel %vm343, %v3574, 0
        %v3622 = vsel %vm343, %v3575, 0
        %v3625 = vsel %vm343, %v3576, 0
        %v3628 = vsel %vm343, %v3577, 0
        %v3631 = vsel %vm343, %v3578, 0
        %v3634 = vsel %vm343, %v3579, 0
        %v3637 = vsel %vm343, %v3580, 0
        %v3640 = vsel %vm343, %v3581, 0
        %v3643 = vsel %vm343, %v3582, 0
        %v3646 = vsel %vm343, %v3583, 0
        %v3649 = vsel %vm343, %v3584, 0
        %v3652 = vsel %vm343, %v3585, 0
        %v3655 = vsel %vm343, %v3586, 0
        %3657 = vmatpush.bf16.xpose.msra.mxu0 %v3631
        %3658 = vmatpush.bf16.xpose.msra.mxu0 %v3628
        %3659 = vmatpush.bf16.xpose.msra.mxu0 %v3625
        %3660 = vmatpush.bf16.xpose.msra.mxu0 %v3622
        %3661 = vmatpush.bf16.xpose.msra.mxu0 %v3619
        %3662 = vmatpush.bf16.xpose.msra.mxu0 %v3616
        %3663 = vmatpush.bf16.xpose.msra.mxu0 %v3613
        %3664 = vmatpush.bf16.xpose.msra.mxu0 %v3610
        %3665 = vmatmul.bf16.gmra.mxu0 %v3607
        %v3666 = vpop.f32.mrf.mxu0
        %v3667 = vadd.f32 %v3594, %v3666
        %v3668 = vpop.f32.mrf.mxu0
        %v3669 = vadd.f32 %v3599, %v3668
        %3670 = vdwg.mxu0
        %3671 = vmatpush.bf16.xpose.msra.mxu0 %v3655
        %3672 = vmatpush.bf16.xpose.msra.mxu0 %v3652
        %3673 = vmatpush.bf16.xpose.msra.mxu0 %v3649
        %3674 = vmatpush.bf16.xpose.msra.mxu0 %v3646
        %3675 = vmatpush.bf16.xpose.msra.mxu0 %v3643
        %3676 = vmatpush.bf16.xpose.msra.mxu0 %v3640
        %3677 = vmatpush.bf16.xpose.msra.mxu0 %v3637
        %3678 = vmatpush.bf16.xpose.msra.mxu0 %v3634
        %3679 = vmatmul.bf16.gmra.mxu0 %v3607
        %v3680 = vpop.f32.mrf.mxu0
        %v3681 = vadd.f32 %v3594, %v3680
        %v3682 = vpop.f32.mrf.mxu0
        %v3683 = vadd.f32 %v3599, %v3682
        %3684 = vdwg.mxu0
        %v3685 = vld [vmem:[%s7] sm:$0xf]
        %v3686 = vld [vmem:[%s7 + $0x4] sm:$0xf]
        %v3687 = vld [vmem:[%s8] sm:$0xff]
        %v3688 = vld [vmem:[%s8 + $0x8] sm:$0xff]
        %3690 = vset.pattern.permute.xlu0 0
        %3691 = vperm.xlu0 %3690, %v3687
        %v3692 = vpop.permute.xlu0 %3691
        %3695 = vset.pattern.permute.xlu0 0
        %3696 = vperm.xlu0 %3695, %v3688
        %v3697 = vpop.permute.xlu0 %3696
        %v3701 = vunpack.c.l.b16 %v3685
        %v3702 = vunpack.c.l.b16 %v3686
        %v3703 = vpack.c.b16 %v3702, %v3701
        %v3705 = vsel %vm343, %v3703, 0
        %3707 = vmatpush.bf16.msra.mxu0 0
        %3708 = vmatpush.bf16.msra.mxu0 0
        %3709 = vmatpush.bf16.msra.mxu0 0
        %3710 = vmatpush.bf16.msra.mxu0 0
        %3711 = vmatpush.bf16.msra.mxu0 0
        %3712 = vmatpush.bf16.msra.mxu0 0
        %3713 = vmatpush.bf16.msra.mxu0 0
        %3714 = vmatpush.bf16.msra.mxu0 %v349
        %3715 = vmatmul.bf16.gmra.mxu0 %v3705
        %v3716 = vpop.f32.mrf.mxu0
        %v3717 = vadd.f32 %v3692, %v3716
        %v3718 = vpop.f32.mrf.mxu0
        %v3719 = vadd.f32 %v3697, %v3718
        %3720 = vdwg.mxu0
        %3721 = vmatpush.bf16.msra.mxu0 0
        %3722 = vmatpush.bf16.msra.mxu0 0
        %3723 = vmatpush.bf16.msra.mxu0 0
        %3724 = vmatpush.bf16.msra.mxu0 0
        %3725 = vmatpush.bf16.msra.mxu0 0
        %3726 = vmatpush.bf16.msra.mxu0 0
        %3727 = vmatpush.bf16.msra.mxu0 0
        %3728 = vmatpush.bf16.msra.mxu0 %v352
        %3729 = vmatmul.bf16.gmra.mxu0 %v3705
        %v3730 = vpop.f32.mrf.mxu0
        %v3731 = vadd.f32 %v3692, %v3730
        %v3732 = vpop.f32.mrf.mxu0
        %v3733 = vadd.f32 %v3697, %v3732
        %3734 = vdwg.mxu0
        %v3735 = vadd.f32 %v3667, %v3717
        %v3736 = vadd.f32 %v3681, %v3731
        %v3737 = vadd.f32 %v3669, %v3719
        %v3738 = vadd.f32 %v3683, %v3733
        %v3739 = vmax.f32 %v3735, 0.0
        %v3740 = vmax.f32 %v3736, 0.0
        %v3741 = vmax.f32 %v3737, 0.0
        %v3742 = vmax.f32 %v3738, 0.0
        %3743 = vst [vmem:[%s325] sm:$0xff] %v3739
        %3744 = vst [vmem:[%s325 + $0x8] sm:$0xff] %v3740
        %3745 = vst [vmem:[%s325 + $0x10] sm:$0xff] %v3741
        %3746 = vst [vmem:[%s325 + $0x18] sm:$0xff] %v3742
        %s3747 = sand.u32 %s225, 1
        %s3748 = scalar_lea.sflag [#allocation5], %s3747
        %s3749 = sand.u32 %s225, 1
        %s3750 = smul.addr %s3749, 32
        %s3751 = scalar_lea.vmem [#allocation4], %s3750
        // Predicated region
        $region57: #{tpu_custom_call.1} parent=55 // pred_check
          %p3752 = pneg %p235
        $region58: #{tpu_custom_call.1} parent=55 // pred_check_branch
          %3754 = sbr.rel (%p3752) target = $region60
        $region59: #{tpu_custom_call.1} parent=55 // pred_region
          %3756 = vsyncadd %s3748, 0
          %s3757 = smul.addr %s23, 4
          %s3758 = smul.addr %s3757, 8
          %s3759 = scalar_lea.hbm %s9, %s3758
          %s3760 = sshll.u32 %s3751, 4
          %s3761 = int_to_ptr.vmem [resolvable:$true] %s3760
          %s3762 = sshll.u32 %s3759, 4
          %s3763 = int_to_ptr.hbm [resolvable:$true] %s3762
          %3768 = dma.vmem_to_hbm [thread:$0]  %s3761, 512, %s3763, %s3748, 256, 256, 16
        $region60: #{tpu_custom_call.1} parent=55 // pred_fallthru
          _
      $region56: #{tpu_custom_call.1} parent=5 // pred_fallthru
        _
      %p3769 = scmp.le.s32.totalorder 2, %s18
      // Predicated region
      $region61: #{tpu_custom_call.1} parent=5 // pred_check
        %p3770 = pneg %p3769
      $region62: #{tpu_custom_call.1} parent=5 // pred_check_branch
        %3772 = sbr.rel (%p3770) target = $region64
      $region63: #{tpu_custom_call.1} parent=5 // pred_region
        %s3773 = ssub.s32 %s18, 2
        // Predicated region
        $region65: #{tpu_custom_call.1} parent=63 // pred_check
          %p3774 = pneg %p241
        $region66: #{tpu_custom_call.1} parent=63 // pred_check_branch
          %3776 = sbr.rel (%p3774) target = $region68
        $region67: #{tpu_custom_call.1} parent=63 // pred_region
          %s3777 = sand.u32 %s226, 1
          %s3778 = scalar_lea.sflag [#allocation5], %s3777
          %s3779 = sand.u32 %s226, 1
          %s3780 = smul.addr %s3779, 32
          %s3781 = scalar_lea.vmem [#allocation4], %s3780
          %3783 = dma.done %s3778, 512
        $region68: #{tpu_custom_call.1} parent=63 // pred_fallthru
          _
      $region64: #{tpu_custom_call.1} parent=5 // pred_fallthru
        _
    $region6: #{tpu_custom_call.1} parent=1 // loop_footer
      %s22 = sadd.s32 1, %s18
    $region7: #{tpu_custom_call.1} parent=1 // loop_footer_branch
      %17 = sbr.rel target = $region3
    $region8: #{tpu_custom_call.1} parent=1 // loop_exit
      _
    %3784 = vsyncpa [#allocation5], 1
    %s3785 = scalar_lea.sflag [#allocation5], 1
    %3786 = vsyncpa %s3785, 1

</llo_original>
